<compile_context>
chip_gen: v7x
topology: tpu7x:2x2x1
jax: 0.10.0
libtpu: 0.0.40
codegen_flags: <defaults>
</compile_context>

<pallas_src>
import jax
import jax.numpy as jnp
from jax.experimental import pallas as pl
from jax.experimental.pallas import tpu as pltpu

# ---------------- config (small, TPU-tile-friendly stand-ins for ALBERT-base) ----------
BATCH = 2
SEQ = 8
HIDDEN = 128          # stands in for 768
NUM_HEADS = 4
HEAD_DIM = HIDDEN // NUM_HEADS
FFN = 512             # stands in for 3072
NUM_LAYERS = 2        # ALBERT: layers share parameters
NUM_CLASS = 8
CPAD = 128            # classifier output padded to a full lane width (lane-dense store)
VOCAB = 64
LN_EPS = 1e-12


# ---------------- in-kernel helpers -----------------------------------------------------
def _layernorm(x, g, b):
    mu = jnp.mean(x, axis=-1, keepdims=True)
    var = jnp.mean((x - mu) ** 2, axis=-1, keepdims=True)
    return (x - mu) * jax.lax.rsqrt(var + LN_EPS) * g + b


# ---------------- fused forward kernel (one batch element per grid step) ----------------
def fused_forward_kernel(x_ref, mask_ref, embg_ref, embb_ref,
                         wqkv_ref, bqkv_ref, wo_ref, bo_ref,
                         ln1g_ref, ln1b_ref,
                         w1_ref, b1_ref, w2_ref, b2_ref,
                         ln2g_ref, ln2b_ref,
                         wc_ref, bc_ref, o_ref):
    bf = jnp.bfloat16
    scale = 1.0 / (HEAD_DIM ** 0.5)

    # Additive key bias computed ONCE; pre-broadcast to the full (S, S) scores shape so it is
    # not re-materialized per head / per layer (JAX does not CSE broadcast_in_dim).
    bias_row = (1.0 - mask_ref[0]) * -1e9                        # (1, S)
    bias_full = jnp.broadcast_to(bias_row, (SEQ, SEQ))           # (S, S)

    # Embedding LayerNorm over this batch element's (S, H) slab.
    h = _layernorm(x_ref[0], embg_ref[...], embb_ref[...])       # (S, H) f32

    def encoder_layer(h_in, last_only):
        """One shared-weight (ALBERT) encoder layer.

        last_only=False: full (S, H) output.
        last_only=True : queries / residual / FFN restricted to the last token -> (1, H)
                         (the classifier only consumes last_hidden_state[:, -1, :];
                         numerics are identical to computing all rows and slicing).
        """
        hb = h_in.astype(bf)

        # Fused lane-dense QKV projection: one (S,H)@(H,3H) matmul (N = 3H output lanes).
        qkv = jnp.dot(hb, wqkv_ref[...],
                      preferred_element_type=jnp.float32) + bqkv_ref[...]     # (S, 3H) f32

        if last_only:
            q_all = qkv[SEQ - 1:SEQ, :HIDDEN]       # (1, H): queries only for the pooled token
            bias = bias_row                          # (1, S)
            res = h_in[SEQ - 1:SEQ, :]               # residual restricted to the pooled row
        else:
            q_all = qkv[:, :HIDDEN]                  # (S, H)
            bias = bias_full                         # (S, S) pre-broadcast
            res = h_in
        k_all = qkv[:, HIDDEN:2 * HIDDEN]            # (S, H)
        v_all = qkv[:, 2 * HIDDEN:]                  # (S, H)

        # Per-head attention core.  Heads are contiguous 32-lane groups of the fused projection,
        # so the "split" is a static lane slice and the merge is one lane concat; all heavy
        # matmuls are the fused full-width ones above/below — only the tiny (.,S) scores /
        # softmax / context dots remain per head.
        # TODO(synk): at real SEQ (512) collapse this loop into a batched 'hqd,hkd->hqk' einsum
        # over a head-major (NH, S, HD) relayout; not worth the relayout at S=8.
        ctx_parts = []
        for hd in range(NUM_HEADS):
            sl = slice(hd * HEAD_DIM, (hd + 1) * HEAD_DIM)
            qh = q_all[:, sl].astype(bf)             # (M, HD)
            kh = k_all[:, sl].astype(bf)             # (S, HD)
            vh = v_all[:, sl].astype(bf)             # (S, HD)
            s = jnp.einsum('qd,kd->qk', qh, kh,
                           preferred_element_type=jnp.float32) * scale + bias  # (M, S)
            s = s - jnp.max(s, axis=-1, keepdims=True)
            p = jnp.exp(s)
            p = p * pl.reciprocal(jnp.sum(p, axis=-1, keepdims=True), approx=True)
            ctx_parts.append(jnp.dot(p.astype(bf), vh,
                                     preferred_element_type=jnp.float32))      # (M, HD)
        ctx = jnp.concatenate(ctx_parts, axis=-1).astype(bf)                    # (M, H)

        # Single full-width output projection (K = H) instead of NH accumulating K=32 matmuls.
        attn = jnp.dot(ctx, wo_ref[...],
                       preferred_element_type=jnp.float32) + bo_ref[...]        # (M, H)
        h1 = _layernorm(res + attn, ln1g_ref[...], ln1b_ref[...])

        ff = jnp.dot(h1.astype(bf), w1_ref[...],
                     preferred_element_type=jnp.float32) + b1_ref[...]
        ff = jax.nn.gelu(ff, approximate=True)       # ALBERT gelu_new; f32 elementwise (v5e has
        #                                             # no bf16 VPU/EUP; bf16 is an option on v6e/v7x)
        ff = jnp.dot(ff.astype(bf), w2_ref[...],
                     preferred_element_type=jnp.float32) + b2_ref[...]
        return _layernorm(h1 + ff, ln2g_ref[...], ln2b_ref[...])

    # ALBERT shares one parameter set across layers; weights stay VMEM-resident, so a short
    # static unroll is fine.  All but the last layer produce the full sequence ...
    for _ in range(NUM_LAYERS - 1):
        h = encoder_layer(h, last_only=False)
    # ... the final layer only computes the last-token row (what the classifier reads),
    # which is also the last-token pool: last_hidden_state[:, -1, :].
    pooled = encoder_layer(h, last_only=True)                                    # (1, H)

    # dropout(p=0.1) is identity in eval/inference mode.
    logits = jnp.dot(pooled.astype(bf), wc_ref[...],
                     preferred_element_type=jnp.float32) + bc_ref[...]           # (1, CPAD)
    o_ref[...] = logits.reshape(1, 1, CPAD)                                      # lane-dense store


# ---------------- Pallas wrapper ---------------------------------------------------------
def _wspec(shape):
    """Weight BlockSpec: full-shape block, constant index map -> single fetch, VMEM-resident."""
    zeros = (0,) * len(shape)
    return pl.BlockSpec(shape, lambda b, zeros=zeros: zeros)


def _vmem_limit_bytes():
    # Generation-aware cap: v7x has 64 MiB VMEM per TensorCore (leave double-buffer headroom),
    # v5e/v6e have 128 MiB where bigger activation tiles are free performance at real sizes.
    try:
        cap = int(pltpu.get_tpu_info().vmem_capacity_bytes)
    except Exception:
        cap = 0
    if cap <= 0:
        cap = 64 * 1024 * 1024
    return min(100 * 1024 * 1024, (cap * 3) // 4)


def fused_forward(x, mask, p):
    weights = [p["emb_ln_g"], p["emb_ln_b"],
               p["w_qkv"], p["b_qkv"], p["wo"], p["bo"],
               p["ln1g"], p["ln1b"],
               p["w1"], p["b1"], p["w2"], p["b2"],
               p["ln2g"], p["ln2b"],
               p["cls_w"], p["cls_b"]]
    in_specs = ([pl.BlockSpec((1, SEQ, HIDDEN), lambda b: (b, 0, 0)),   # activations: per-batch tile
                 pl.BlockSpec((1, 1, SEQ), lambda b: (b, 0, 0))]        # mask: per-batch tile
                + [_wspec(w.shape) for w in weights])
    # Grid over the batch: on v7x the "parallel" axis is sharded across both TensorCores; on
    # v5e/v6e it is a cheap sequential loop and the constant-index weight blocks are not re-DMA'd.
    # TODO(synk): at real ALBERT sizes (H=768, FFN=3072, S=512) add a token(M)-tile grid axis so
    # the f32 FFN intermediate is tiled instead of fully resident (v7x: 64 MiB VMEM).
    return pl.pallas_call(
        fused_forward_kernel,
        out_shape=jax.ShapeDtypeStruct((BATCH, 1, CPAD), jnp.float32),
        grid=(BATCH,),
        in_specs=in_specs,
        out_specs=pl.BlockSpec((1, 1, CPAD), lambda b: (b, 0, 0)),
        compiler_params=pltpu.CompilerParams(
            dimension_semantics=("parallel",),
            vmem_limit_bytes=_vmem_limit_bytes()),
    )(x, mask, *weights)


# ---------------- parameter init (deterministic, synthetic) -----------------------------
def init_params(key):
    def nrm(k, shape, scale=0.02):
        return (scale * jax.random.normal(k, shape)).astype(jnp.float32)

    keys = jax.random.split(key, 16)
    layer = dict(
        wq=nrm(keys[0], (HIDDEN, HIDDEN)), bq=jnp.zeros((1, HIDDEN), jnp.float32),
        wk=nrm(keys[1], (HIDDEN, HIDDEN)), bk=jnp.zeros((1, HIDDEN), jnp.float32),
        wv=nrm(keys[2], (HIDDEN, HIDDEN)), bv=jnp.zeros((1, HIDDEN), jnp.float32),
        wo=nrm(keys[3], (HIDDEN, HIDDEN)), bo=jnp.zeros((1, HIDDEN), jnp.float32),
        ln1g=jnp.ones((1, HIDDEN), jnp.float32), ln1b=jnp.zeros((1, HIDDEN), jnp.float32),
        w1=nrm(keys[4], (HIDDEN, FFN)), b1=jnp.zeros((1, FFN), jnp.float32),
        w2=nrm(keys[5], (FFN, HIDDEN)), b2=jnp.zeros((1, HIDDEN), jnp.float32),
        ln2g=jnp.ones((1, HIDDEN), jnp.float32), ln2b=jnp.zeros((1, HIDDEN), jnp.float32),
    )
    return dict(
        word_emb=nrm(keys[6], (VOCAB, HIDDEN)),
        pos_emb=nrm(keys[7], (SEQ, HIDDEN)),
        tok_type_emb=nrm(keys[8], (1, HIDDEN)),
        emb_ln_g=jnp.ones((1, HIDDEN), jnp.float32),
        emb_ln_b=jnp.zeros((1, HIDDEN), jnp.float32),
        layer=layer,                                  # shared across NUM_LAYERS (ALBERT)
        cls_w=nrm(keys[9], (HIDDEN, NUM_CLASS)),
        cls_b=jnp.zeros((1, NUM_CLASS), jnp.float32),
    )


def prepare_inference_params(params):
    """Kernel-layout params: fused lane-dense QKV weight, bf16 matmul weights, padded classifier."""
    L = params["layer"]
    bf = jnp.bfloat16
    w_qkv = jnp.concatenate([L["wq"], L["wk"], L["wv"]], axis=1)        # (H, 3H), heads = 32-lane groups
    b_qkv = jnp.concatenate([L["bq"], L["bk"], L["bv"]], axis=1)        # (1, 3H)
    wc = jnp.zeros((HIDDEN, CPAD), jnp.float32).at[:, :NUM_CLASS].set(params["cls_w"])
    bc = jnp.zeros((1, CPAD), jnp.float32).at[:, :NUM_CLASS].set(params["cls_b"])
    return dict(
        word_emb=params["word_emb"], pos_emb=params["pos_emb"],
        tok_type_emb=params["tok_type_emb"],
        emb_ln_g=params["emb_ln_g"], emb_ln_b=params["emb_ln_b"],
        w_qkv=w_qkv.astype(bf), b_qkv=b_qkv,
        wo=L["wo"].astype(bf), bo=L["bo"],
        ln1g=L["ln1g"], ln1b=L["ln1b"],
        w1=L["w1"].astype(bf), b1=L["b1"],
        w2=L["w2"].astype(bf), b2=L["b2"],
        ln2g=L["ln2g"], ln2b=L["ln2b"],
        cls_w=wc.astype(bf), cls_b=bc,
    )


# ---------------- full forward -----------------------------------------------------------
@jax.jit
def custom_bert_forward(iparams, input_ids, attention_mask):
    # Embedding gather stays in plain JAX.
    # TODO(synk): at real sizes, fold the token-id gather into the kernel via scalar-prefetched
    # ids (pl.Element row indexing) to avoid the HBM round trip of the f32 (B, S, H) slab; the
    # factorized ALBERT embedding (128 -> 768) is folded into one table in this stand-in.
    emb = (jnp.take(iparams["word_emb"], input_ids, axis=0)
           + iparams["pos_emb"][None, :, :]
           + iparams["tok_type_emb"][None, :, :]).astype(jnp.float32)     # (B, S, H)
    mask = attention_mask.astype(jnp.float32)[:, None, :]                 # (B, 1, S)
    logits_pad = fused_forward(emb, mask, iparams)                        # (B, 1, CPAD) lane-dense
    return logits_pad[:, 0, :NUM_CLASS]


# ---------------- main ---------------------------------------------------------------------
if __name__ == "__main__":
    key = jax.random.PRNGKey(0)
    pkey, ikey = jax.random.split(key)

    params = init_params(pkey)
    iparams = prepare_inference_params(params)

    input_ids = jax.random.randint(ikey, (BATCH, SEQ), 0, VOCAB, dtype=jnp.int32)
    attention_mask = jnp.ones((BATCH, SEQ), dtype=jnp.int32)
    attention_mask = attention_mask.at[1, -2:].set(0)   # exercise the additive mask path

    logits = custom_bert_forward(iparams, input_ids, attention_mask)
    jax.block_until_ready(logits)

    assert logits.shape == (BATCH, NUM_CLASS)
    assert logits.dtype == jnp.float32
    assert bool(jnp.all(jnp.isfinite(logits)))
    print("KERNEL_OK")
</pallas_src>

<mosaic_0001>
module attributes {stable_mosaic.version = 11 : i64} {
  func.func @fused_forward_kernel(%arg0: i32, %arg1: memref<1x8x128xf32, #tpu.memory_space<vmem>>, %arg2: memref<1x1x8xf32, #tpu.memory_space<vmem>>, %arg3: memref<1x128xf32, #tpu.memory_space<vmem>>, %arg4: memref<1x128xf32, #tpu.memory_space<vmem>>, %arg5: memref<128x384xbf16, #tpu.memory_space<vmem>>, %arg6: memref<1x384xf32, #tpu.memory_space<vmem>>, %arg7: memref<128x128xbf16, #tpu.memory_space<vmem>>, %arg8: memref<1x128xf32, #tpu.memory_space<vmem>>, %arg9: memref<1x128xf32, #tpu.memory_space<vmem>>, %arg10: memref<1x128xf32, #tpu.memory_space<vmem>>, %arg11: memref<128x512xbf16, #tpu.memory_space<vmem>>, %arg12: memref<1x512xf32, #tpu.memory_space<vmem>>, %arg13: memref<512x128xbf16, #tpu.memory_space<vmem>>, %arg14: memref<1x128xf32, #tpu.memory_space<vmem>>, %arg15: memref<1x128xf32, #tpu.memory_space<vmem>>, %arg16: memref<1x128xf32, #tpu.memory_space<vmem>>, %arg17: memref<128x128xbf16, #tpu.memory_space<vmem>>, %arg18: memref<1x128xf32, #tpu.memory_space<vmem>>, %arg19: memref<1x1x128xf32, #tpu.memory_space<vmem>>) attributes {dimension_semantics = [#tpu.dimension_semantics<parallel>], iteration_bounds = array<i64: 2>, scalar_prefetch = 0 : i64, scratch_operands = 0 : i64, tpu.core_type = #tpu.core_type<tc>, window_params = [{transform_indices = @transform_0, window_bounds = array<i64: 1, 8, 128>}, {transform_indices = @transform_1, window_bounds = array<i64: 1, 1, 8>}, {pipeline_mode = #tpu.pipeline_mode<synchronous>, transform_indices = @transform_2, window_bounds = array<i64: 1, 128>}, {pipeline_mode = #tpu.pipeline_mode<synchronous>, transform_indices = @transform_3, window_bounds = array<i64: 1, 128>}, {pipeline_mode = #tpu.pipeline_mode<synchronous>, transform_indices = @transform_4, window_bounds = array<i64: 128, 384>}, {pipeline_mode = #tpu.pipeline_mode<synchronous>, transform_indices = @transform_5, window_bounds = array<i64: 1, 384>}, {pipeline_mode = #tpu.pipeline_mode<synchronous>, transform_indices = @transform_6, window_bounds = array<i64: 128, 128>}, {pipeline_mode = #tpu.pipeline_mode<synchronous>, transform_indices = @transform_7, window_bounds = array<i64: 1, 128>}, {pipeline_mode = #tpu.pipeline_mode<synchronous>, transform_indices = @transform_8, window_bounds = array<i64: 1, 128>}, {pipeline_mode = #tpu.pipeline_mode<synchronous>, transform_indices = @transform_9, window_bounds = array<i64: 1, 128>}, {pipeline_mode = #tpu.pipeline_mode<synchronous>, transform_indices = @transform_10, window_bounds = array<i64: 128, 512>}, {pipeline_mode = #tpu.pipeline_mode<synchronous>, transform_indices = @transform_11, window_bounds = array<i64: 1, 512>}, {pipeline_mode = #tpu.pipeline_mode<synchronous>, transform_indices = @transform_12, window_bounds = array<i64: 512, 128>}, {pipeline_mode = #tpu.pipeline_mode<synchronous>, transform_indices = @transform_13, window_bounds = array<i64: 1, 128>}, {pipeline_mode = #tpu.pipeline_mode<synchronous>, transform_indices = @transform_14, window_bounds = array<i64: 1, 128>}, {pipeline_mode = #tpu.pipeline_mode<synchronous>, transform_indices = @transform_15, window_bounds = array<i64: 1, 128>}, {pipeline_mode = #tpu.pipeline_mode<synchronous>, transform_indices = @transform_16, window_bounds = array<i64: 128, 128>}, {pipeline_mode = #tpu.pipeline_mode<synchronous>, transform_indices = @transform_17, window_bounds = array<i64: 1, 128>}, {transform_indices = @transform_18, window_bounds = array<i64: 1, 1, 128>}]} {
    %c0 = arith.constant 0 : index
    %c0_0 = arith.constant 0 : index
    %c0_1 = arith.constant 0 : index
    %0 = vector.load %arg2[%c0, %c0_0, %c0_1] : memref<1x1x8xf32, #tpu.memory_space<vmem>>, vector<1x1x8xf32>
    %1 = vector.shape_cast %0 : vector<1x1x8xf32> to vector<1x8xf32>
    %cst = arith.constant 1.000000e+00 : f32
    %2 = vector.broadcast %cst : f32 to vector<1x8xf32>
    %3 = arith.subf %2, %1 : vector<1x8xf32>
    %cst_2 = arith.constant -1.000000e+09 : f32
    %4 = vector.broadcast %cst_2 : f32 to vector<1x8xf32>
    %5 = arith.mulf %3, %4 : vector<1x8xf32>
    %6 = vector.shape_cast %5 : vector<1x8xf32> to vector<1x8xf32>
    %7 = vector.broadcast %6 : vector<1x8xf32> to vector<8x8xf32>
    %c0_3 = arith.constant 0 : index
    %c0_4 = arith.constant 0 : index
    %c0_5 = arith.constant 0 : index
    %8 = vector.load %arg1[%c0_3, %c0_4, %c0_5] : memref<1x8x128xf32, #tpu.memory_space<vmem>>, vector<1x8x128xf32>
    %9 = vector.shape_cast %8 : vector<1x8x128xf32> to vector<8x128xf32>
    %c0_6 = arith.constant 0 : index
    %c0_7 = arith.constant 0 : index
    %10 = vector.load %arg3[%c0_6, %c0_7] : memref<1x128xf32, #tpu.memory_space<vmem>>, vector<1x128xf32>
    %c0_8 = arith.constant 0 : index
    %c0_9 = arith.constant 0 : index
    %11 = vector.load %arg4[%c0_8, %c0_9] : memref<1x128xf32, #tpu.memory_space<vmem>>, vector<1x128xf32>
    %cst_10 = arith.constant dense<0.000000e+00> : vector<8xf32>
    %12 = vector.multi_reduction <add>, %9, %cst_10 [1] : vector<8x128xf32> to vector<8xf32>
    %13 = vector.shape_cast %12 : vector<8xf32> to vector<8x1xf32>
    %cst_11 = arith.constant 1.280000e+02 : f32
    %14 = vector.broadcast %cst_11 : f32 to vector<8x1xf32>
    %15 = arith.divf %13, %14 : vector<8x1xf32>
    %16 = vector.broadcast %15 : vector<8x1xf32> to vector<8x128xf32>
    %17 = arith.subf %9, %16 : vector<8x128xf32>
    %18 = arith.mulf %17, %17 : vector<8x128xf32>
    %cst_12 = arith.constant dense<0.000000e+00> : vector<8xf32>
    %19 = vector.multi_reduction <add>, %18, %cst_12 [1] : vector<8x128xf32> to vector<8xf32>
    %20 = vector.shape_cast %19 : vector<8xf32> to vector<8x1xf32>
    %cst_13 = arith.constant 1.280000e+02 : f32
    %21 = vector.broadcast %cst_13 : f32 to vector<8x1xf32>
    %22 = arith.divf %20, %21 : vector<8x1xf32>
    %23 = vector.broadcast %15 : vector<8x1xf32> to vector<8x128xf32>
    %24 = arith.subf %9, %23 : vector<8x128xf32>
    %cst_14 = arith.constant 9.99999996E-13 : f32
    %25 = vector.broadcast %cst_14 : f32 to vector<8x1xf32>
    %26 = arith.addf %22, %25 : vector<8x1xf32>
    %27 = math.rsqrt %26 : vector<8x1xf32>
    %28 = vector.broadcast %27 : vector<8x1xf32> to vector<8x128xf32>
    %29 = arith.mulf %24, %28 : vector<8x128xf32>
    %30 = vector.broadcast %10 : vector<1x128xf32> to vector<8x128xf32>
    %31 = arith.mulf %29, %30 : vector<8x128xf32>
    %32 = vector.broadcast %11 : vector<1x128xf32> to vector<8x128xf32>
    %33 = arith.addf %31, %32 : vector<8x128xf32>
    %34 = arith.truncf %33 : vector<8x128xf32> to vector<8x128xbf16>
    %c0_15 = arith.constant 0 : index
    %c0_16 = arith.constant 0 : index
    %35 = vector.load %arg5[%c0_15, %c0_16] : memref<128x384xbf16, #tpu.memory_space<vmem>>, vector<128x384xbf16>
    %cst_17 = arith.constant dense<0.000000e+00> : vector<8x384xf32>
    %36 = tpu.matmul %34, %35, %cst_17 {dimension_numbers = #tpu.dot_dimension_numbers<[1], [0], [0], [1], [0, 0, 1, 1], [], []>} : vector<8x128xbf16>, vector<128x384xbf16>, vector<8x384xf32> -> vector<8x384xf32>
    %c0_18 = arith.constant 0 : index
    %c0_19 = arith.constant 0 : index
    %37 = vector.load %arg6[%c0_18, %c0_19] : memref<1x384xf32, #tpu.memory_space<vmem>>, vector<1x384xf32>
    %38 = vector.broadcast %37 : vector<1x384xf32> to vector<8x384xf32>
    %39 = arith.addf %36, %38 : vector<8x384xf32>
    %40 = vector.extract_strided_slice %39 {offsets = [0, 0], sizes = [8, 128], strides = [1, 1]} : vector<8x384xf32> to vector<8x128xf32>
    %41 = vector.extract_strided_slice %39 {offsets = [0, 128], sizes = [8, 128], strides = [1, 1]} : vector<8x384xf32> to vector<8x128xf32>
    %42 = vector.extract_strided_slice %39 {offsets = [0, 256], sizes = [8, 128], strides = [1, 1]} : vector<8x384xf32> to vector<8x128xf32>
    %43 = vector.extract_strided_slice %40 {offsets = [0, 0], sizes = [8, 32], strides = [1, 1]} : vector<8x128xf32> to vector<8x32xf32>
    %44 = arith.truncf %43 : vector<8x32xf32> to vector<8x32xbf16>
    %45 = vector.extract_strided_slice %41 {offsets = [0, 0], sizes = [8, 32], strides = [1, 1]} : vector<8x128xf32> to vector<8x32xf32>
    %46 = arith.truncf %45 : vector<8x32xf32> to vector<8x32xbf16>
    %47 = vector.extract_strided_slice %42 {offsets = [0, 0], sizes = [8, 32], strides = [1, 1]} : vector<8x128xf32> to vector<8x32xf32>
    %48 = arith.truncf %47 : vector<8x32xf32> to vector<8x32xbf16>
    "tpu.trace_start"() <{level = 10 : i32, message = "qd,kd->qk"}> : () -> ()
    %cst_20 = arith.constant dense<0.000000e+00> : vector<8x8xf32>
    %49 = tpu.matmul %44, %46, %cst_20 {dimension_numbers = #tpu.dot_dimension_numbers<[1], [1], [0], [0], [0, 0, 1, 0], [], []>} : vector<8x32xbf16>, vector<8x32xbf16>, vector<8x8xf32> -> vector<8x8xf32>
    "tpu.trace_stop"() : () -> ()
    %cst_21 = arith.constant 0.176776692 : f32
    %50 = vector.broadcast %cst_21 : f32 to vector<8x8xf32>
    %51 = arith.mulf %49, %50 : vector<8x8xf32>
    %52 = arith.addf %51, %7 : vector<8x8xf32>
    %cst_22 = arith.constant dense<0xFF800000> : vector<8xf32>
    %53 = vector.multi_reduction <maximumf>, %52, %cst_22 [1] : vector<8x8xf32> to vector<8xf32>
    %54 = vector.shape_cast %53 : vector<8xf32> to vector<8x1xf32>
    %55 = vector.broadcast %54 : vector<8x1xf32> to vector<8x8xf32>
    %56 = arith.subf %52, %55 : vector<8x8xf32>
    %57 = math.exp %56 : vector<8x8xf32>
    %cst_23 = arith.constant dense<0.000000e+00> : vector<8xf32>
    %58 = vector.multi_reduction <add>, %57, %cst_23 [1] : vector<8x8xf32> to vector<8xf32>
    %59 = vector.shape_cast %58 : vector<8xf32> to vector<8x1xf32>
    %60 = tpu.reciprocal %59 {approx = true} : vector<8x1xf32> -> vector<8x1xf32>
    %61 = vector.broadcast %60 : vector<8x1xf32> to vector<8x8xf32>
    %62 = arith.mulf %57, %61 : vector<8x8xf32>
    %63 = arith.truncf %62 : vector<8x8xf32> to vector<8x8xbf16>
    %cst_24 = arith.constant dense<0.000000e+00> : vector<8x32xf32>
    %64 = tpu.matmul %63, %48, %cst_24 {dimension_numbers = #tpu.dot_dimension_numbers<[1], [0], [0], [1], [0, 0, 1, 1], [], []>} : vector<8x8xbf16>, vector<8x32xbf16>, vector<8x32xf32> -> vector<8x32xf32>
    %65 = vector.extract_strided_slice %40 {offsets = [0, 32], sizes = [8, 32], strides = [1, 1]} : vector<8x128xf32> to vector<8x32xf32>
    %66 = arith.truncf %65 : vector<8x32xf32> to vector<8x32xbf16>
    %67 = vector.extract_strided_slice %41 {offsets = [0, 32], sizes = [8, 32], strides = [1, 1]} : vector<8x128xf32> to vector<8x32xf32>
    %68 = arith.truncf %67 : vector<8x32xf32> to vector<8x32xbf16>
    %69 = vector.extract_strided_slice %42 {offsets = [0, 32], sizes = [8, 32], strides = [1, 1]} : vector<8x128xf32> to vector<8x32xf32>
    %70 = arith.truncf %69 : vector<8x32xf32> to vector<8x32xbf16>
    "tpu.trace_start"() <{level = 10 : i32, message = "qd,kd->qk"}> : () -> ()
    %cst_25 = arith.constant dense<0.000000e+00> : vector<8x8xf32>
    %71 = tpu.matmul %66, %68, %cst_25 {dimension_numbers = #tpu.dot_dimension_numbers<[1], [1], [0], [0], [0, 0, 1, 0], [], []>} : vector<8x32xbf16>, vector<8x32xbf16>, vector<8x8xf32> -> vector<8x8xf32>
    "tpu.trace_stop"() : () -> ()
    %cst_26 = arith.constant 0.176776692 : f32
    %72 = vector.broadcast %cst_26 : f32 to vector<8x8xf32>
    %73 = arith.mulf %71, %72 : vector<8x8xf32>
    %74 = arith.addf %73, %7 : vector<8x8xf32>
    %cst_27 = arith.constant dense<0xFF800000> : vector<8xf32>
    %75 = vector.multi_reduction <maximumf>, %74, %cst_27 [1] : vector<8x8xf32> to vector<8xf32>
    %76 = vector.shape_cast %75 : vector<8xf32> to vector<8x1xf32>
    %77 = vector.broadcast %76 : vector<8x1xf32> to vector<8x8xf32>
    %78 = arith.subf %74, %77 : vector<8x8xf32>
    %79 = math.exp %78 : vector<8x8xf32>
    %cst_28 = arith.constant dense<0.000000e+00> : vector<8xf32>
    %80 = vector.multi_reduction <add>, %79, %cst_28 [1] : vector<8x8xf32> to vector<8xf32>
    %81 = vector.shape_cast %80 : vector<8xf32> to vector<8x1xf32>
    %82 = tpu.reciprocal %81 {approx = true} : vector<8x1xf32> -> vector<8x1xf32>
    %83 = vector.broadcast %82 : vector<8x1xf32> to vector<8x8xf32>
    %84 = arith.mulf %79, %83 : vector<8x8xf32>
    %85 = arith.truncf %84 : vector<8x8xf32> to vector<8x8xbf16>
    %cst_29 = arith.constant dense<0.000000e+00> : vector<8x32xf32>
    %86 = tpu.matmul %85, %70, %cst_29 {dimension_numbers = #tpu.dot_dimension_numbers<[1], [0], [0], [1], [0, 0, 1, 1], [], []>} : vector<8x8xbf16>, vector<8x32xbf16>, vector<8x32xf32> -> vector<8x32xf32>
    %87 = vector.extract_strided_slice %40 {offsets = [0, 64], sizes = [8, 32], strides = [1, 1]} : vector<8x128xf32> to vector<8x32xf32>
    %88 = arith.truncf %87 : vector<8x32xf32> to vector<8x32xbf16>
    %89 = vector.extract_strided_slice %41 {offsets = [0, 64], sizes = [8, 32], strides = [1, 1]} : vector<8x128xf32> to vector<8x32xf32>
    %90 = arith.truncf %89 : vector<8x32xf32> to vector<8x32xbf16>
    %91 = vector.extract_strided_slice %42 {offsets = [0, 64], sizes = [8, 32], strides = [1, 1]} : vector<8x128xf32> to vector<8x32xf32>
    %92 = arith.truncf %91 : vector<8x32xf32> to vector<8x32xbf16>
    "tpu.trace_start"() <{level = 10 : i32, message = "qd,kd->qk"}> : () -> ()
    %cst_30 = arith.constant dense<0.000000e+00> : vector<8x8xf32>
    %93 = tpu.matmul %88, %90, %cst_30 {dimension_numbers = #tpu.dot_dimension_numbers<[1], [1], [0], [0], [0, 0, 1, 0], [], []>} : vector<8x32xbf16>, vector<8x32xbf16>, vector<8x8xf32> -> vector<8x8xf32>
    "tpu.trace_stop"() : () -> ()
    %cst_31 = arith.constant 0.176776692 : f32
    %94 = vector.broadcast %cst_31 : f32 to vector<8x8xf32>
    %95 = arith.mulf %93, %94 : vector<8x8xf32>
    %96 = arith.addf %95, %7 : vector<8x8xf32>
    %cst_32 = arith.constant dense<0xFF800000> : vector<8xf32>
    %97 = vector.multi_reduction <maximumf>, %96, %cst_32 [1] : vector<8x8xf32> to vector<8xf32>
    %98 = vector.shape_cast %97 : vector<8xf32> to vector<8x1xf32>
    %99 = vector.broadcast %98 : vector<8x1xf32> to vector<8x8xf32>
    %100 = arith.subf %96, %99 : vector<8x8xf32>
    %101 = math.exp %100 : vector<8x8xf32>
    %cst_33 = arith.constant dense<0.000000e+00> : vector<8xf32>
    %102 = vector.multi_reduction <add>, %101, %cst_33 [1] : vector<8x8xf32> to vector<8xf32>
    %103 = vector.shape_cast %102 : vector<8xf32> to vector<8x1xf32>
    %104 = tpu.reciprocal %103 {approx = true} : vector<8x1xf32> -> vector<8x1xf32>
    %105 = vector.broadcast %104 : vector<8x1xf32> to vector<8x8xf32>
    %106 = arith.mulf %101, %105 : vector<8x8xf32>
    %107 = arith.truncf %106 : vector<8x8xf32> to vector<8x8xbf16>
    %cst_34 = arith.constant dense<0.000000e+00> : vector<8x32xf32>
    %108 = tpu.matmul %107, %92, %cst_34 {dimension_numbers = #tpu.dot_dimension_numbers<[1], [0], [0], [1], [0, 0, 1, 1], [], []>} : vector<8x8xbf16>, vector<8x32xbf16>, vector<8x32xf32> -> vector<8x32xf32>
    %109 = vector.extract_strided_slice %40 {offsets = [0, 96], sizes = [8, 32], strides = [1, 1]} : vector<8x128xf32> to vector<8x32xf32>
    %110 = arith.truncf %109 : vector<8x32xf32> to vector<8x32xbf16>
    %111 = vector.extract_strided_slice %41 {offsets = [0, 96], sizes = [8, 32], strides = [1, 1]} : vector<8x128xf32> to vector<8x32xf32>
    %112 = arith.truncf %111 : vector<8x32xf32> to vector<8x32xbf16>
    %113 = vector.extract_strided_slice %42 {offsets = [0, 96], sizes = [8, 32], strides = [1, 1]} : vector<8x128xf32> to vector<8x32xf32>
    %114 = arith.truncf %113 : vector<8x32xf32> to vector<8x32xbf16>
    "tpu.trace_start"() <{level = 10 : i32, message = "qd,kd->qk"}> : () -> ()
    %cst_35 = arith.constant dense<0.000000e+00> : vector<8x8xf32>
    %115 = tpu.matmul %110, %112, %cst_35 {dimension_numbers = #tpu.dot_dimension_numbers<[1], [1], [0], [0], [0, 0, 1, 0], [], []>} : vector<8x32xbf16>, vector<8x32xbf16>, vector<8x8xf32> -> vector<8x8xf32>
    "tpu.trace_stop"() : () -> ()
    %cst_36 = arith.constant 0.176776692 : f32
    %116 = vector.broadcast %cst_36 : f32 to vector<8x8xf32>
    %117 = arith.mulf %115, %116 : vector<8x8xf32>
    %118 = arith.addf %117, %7 : vector<8x8xf32>
    %cst_37 = arith.constant dense<0xFF800000> : vector<8xf32>
    %119 = vector.multi_reduction <maximumf>, %118, %cst_37 [1] : vector<8x8xf32> to vector<8xf32>
    %120 = vector.shape_cast %119 : vector<8xf32> to vector<8x1xf32>
    %121 = vector.broadcast %120 : vector<8x1xf32> to vector<8x8xf32>
    %122 = arith.subf %118, %121 : vector<8x8xf32>
    %123 = math.exp %122 : vector<8x8xf32>
    %cst_38 = arith.constant dense<0.000000e+00> : vector<8xf32>
    %124 = vector.multi_reduction <add>, %123, %cst_38 [1] : vector<8x8xf32> to vector<8xf32>
    %125 = vector.shape_cast %124 : vector<8xf32> to vector<8x1xf32>
    %126 = tpu.reciprocal %125 {approx = true} : vector<8x1xf32> -> vector<8x1xf32>
    %127 = vector.broadcast %126 : vector<8x1xf32> to vector<8x8xf32>
    %128 = arith.mulf %123, %127 : vector<8x8xf32>
    %129 = arith.truncf %128 : vector<8x8xf32> to vector<8x8xbf16>
    %cst_39 = arith.constant dense<0.000000e+00> : vector<8x32xf32>
    %130 = tpu.matmul %129, %114, %cst_39 {dimension_numbers = #tpu.dot_dimension_numbers<[1], [0], [0], [1], [0, 0, 1, 1], [], []>} : vector<8x8xbf16>, vector<8x32xbf16>, vector<8x32xf32> -> vector<8x32xf32>
    %131 = tpu.concatenate %64, %86, %108, %130 in 1 : vector<8x32xf32>, vector<8x32xf32>, vector<8x32xf32>, vector<8x32xf32> -> vector<8x128xf32>
    %132 = arith.truncf %131 : vector<8x128xf32> to vector<8x128xbf16>
    %c0_40 = arith.constant 0 : index
    %c0_41 = arith.constant 0 : index
    %133 = vector.load %arg7[%c0_40, %c0_41] : memref<128x128xbf16, #tpu.memory_space<vmem>>, vector<128x128xbf16>
    %cst_42 = arith.constant dense<0.000000e+00> : vector<8x128xf32>
    %134 = tpu.matmul %132, %133, %cst_42 {dimension_numbers = #tpu.dot_dimension_numbers<[1], [0], [0], [1], [0, 0, 1, 1], [], []>} : vector<8x128xbf16>, vector<128x128xbf16>, vector<8x128xf32> -> vector<8x128xf32>
    %c0_43 = arith.constant 0 : index
    %c0_44 = arith.constant 0 : index
    %135 = vector.load %arg8[%c0_43, %c0_44] : memref<1x128xf32, #tpu.memory_space<vmem>>, vector<1x128xf32>
    %136 = vector.broadcast %135 : vector<1x128xf32> to vector<8x128xf32>
    %137 = arith.addf %134, %136 : vector<8x128xf32>
    %138 = arith.addf %33, %137 : vector<8x128xf32>
    %c0_45 = arith.constant 0 : index
    %c0_46 = arith.constant 0 : index
    %139 = vector.load %arg9[%c0_45, %c0_46] : memref<1x128xf32, #tpu.memory_space<vmem>>, vector<1x128xf32>
    %c0_47 = arith.constant 0 : index
    %c0_48 = arith.constant 0 : index
    %140 = vector.load %arg10[%c0_47, %c0_48] : memref<1x128xf32, #tpu.memory_space<vmem>>, vector<1x128xf32>
    %cst_49 = arith.constant dense<0.000000e+00> : vector<8xf32>
    %141 = vector.multi_reduction <add>, %138, %cst_49 [1] : vector<8x128xf32> to vector<8xf32>
    %142 = vector.shape_cast %141 : vector<8xf32> to vector<8x1xf32>
    %cst_50 = arith.constant 1.280000e+02 : f32
    %143 = vector.broadcast %cst_50 : f32 to vector<8x1xf32>
    %144 = arith.divf %142, %143 : vector<8x1xf32>
    %145 = vector.broadcast %144 : vector<8x1xf32> to vector<8x128xf32>
    %146 = arith.subf %138, %145 : vector<8x128xf32>
    %147 = arith.mulf %146, %146 : vector<8x128xf32>
    %cst_51 = arith.constant dense<0.000000e+00> : vector<8xf32>
    %148 = vector.multi_reduction <add>, %147, %cst_51 [1] : vector<8x128xf32> to vector<8xf32>
    %149 = vector.shape_cast %148 : vector<8xf32> to vector<8x1xf32>
    %cst_52 = arith.constant 1.280000e+02 : f32
    %150 = vector.broadcast %cst_52 : f32 to vector<8x1xf32>
    %151 = arith.divf %149, %150 : vector<8x1xf32>
    %152 = vector.broadcast %144 : vector<8x1xf32> to vector<8x128xf32>
    %153 = arith.subf %138, %152 : vector<8x128xf32>
    %cst_53 = arith.constant 9.99999996E-13 : f32
    %154 = vector.broadcast %cst_53 : f32 to vector<8x1xf32>
    %155 = arith.addf %151, %154 : vector<8x1xf32>
    %156 = math.rsqrt %155 : vector<8x1xf32>
    %157 = vector.broadcast %156 : vector<8x1xf32> to vector<8x128xf32>
    %158 = arith.mulf %153, %157 : vector<8x128xf32>
    %159 = vector.broadcast %139 : vector<1x128xf32> to vector<8x128xf32>
    %160 = arith.mulf %158, %159 : vector<8x128xf32>
    %161 = vector.broadcast %140 : vector<1x128xf32> to vector<8x128xf32>
    %162 = arith.addf %160, %161 : vector<8x128xf32>
    %163 = arith.truncf %162 : vector<8x128xf32> to vector<8x128xbf16>
    %c0_54 = arith.constant 0 : index
    %c0_55 = arith.constant 0 : index
    %164 = vector.load %arg11[%c0_54, %c0_55] : memref<128x512xbf16, #tpu.memory_space<vmem>>, vector<128x512xbf16>
    %cst_56 = arith.constant dense<0.000000e+00> : vector<8x512xf32>
    %165 = tpu.matmul %163, %164, %cst_56 {dimension_numbers = #tpu.dot_dimension_numbers<[1], [0], [0], [1], [0, 0, 1, 1], [], []>} : vector<8x128xbf16>, vector<128x512xbf16>, vector<8x512xf32> -> vector<8x512xf32>
    %c0_57 = arith.constant 0 : index
    %c0_58 = arith.constant 0 : index
    %166 = vector.load %arg12[%c0_57, %c0_58] : memref<1x512xf32, #tpu.memory_space<vmem>>, vector<1x512xf32>
    %167 = vector.broadcast %166 : vector<1x512xf32> to vector<8x512xf32>
    %168 = arith.addf %165, %167 : vector<8x512xf32>
    %169 = arith.mulf %168, %168 : vector<8x512xf32>
    %170 = arith.mulf %168, %169 : vector<8x512xf32>
    %cst_59 = arith.constant 4.471500e-02 : f32
    %171 = vector.broadcast %cst_59 : f32 to vector<8x512xf32>
    %172 = arith.mulf %171, %170 : vector<8x512xf32>
    %173 = arith.addf %168, %172 : vector<8x512xf32>
    %cst_60 = arith.constant 0.797884583 : f32
    %174 = vector.broadcast %cst_60 : f32 to vector<8x512xf32>
    %175 = arith.mulf %174, %173 : vector<8x512xf32>
    %176 = math.tanh %175 : vector<8x512xf32>
    %cst_61 = arith.constant 1.000000e+00 : f32
    %177 = vector.broadcast %cst_61 : f32 to vector<8x512xf32>
    %178 = arith.addf %177, %176 : vector<8x512xf32>
    %cst_62 = arith.constant 5.000000e-01 : f32
    %179 = vector.broadcast %cst_62 : f32 to vector<8x512xf32>
    %180 = arith.mulf %179, %178 : vector<8x512xf32>
    %181 = arith.mulf %168, %180 : vector<8x512xf32>
    %182 = arith.truncf %181 : vector<8x512xf32> to vector<8x512xbf16>
    %c0_63 = arith.constant 0 : index
    %c0_64 = arith.constant 0 : index
    %183 = vector.load %arg13[%c0_63, %c0_64] : memref<512x128xbf16, #tpu.memory_space<vmem>>, vector<512x128xbf16>
    %cst_65 = arith.constant dense<0.000000e+00> : vector<8x128xf32>
    %184 = tpu.matmul %182, %183, %cst_65 {dimension_numbers = #tpu.dot_dimension_numbers<[1], [0], [0], [1], [0, 0, 1, 1], [], []>} : vector<8x512xbf16>, vector<512x128xbf16>, vector<8x128xf32> -> vector<8x128xf32>
    %c0_66 = arith.constant 0 : index
    %c0_67 = arith.constant 0 : index
    %185 = vector.load %arg14[%c0_66, %c0_67] : memref<1x128xf32, #tpu.memory_space<vmem>>, vector<1x128xf32>
    %186 = vector.broadcast %185 : vector<1x128xf32> to vector<8x128xf32>
    %187 = arith.addf %184, %186 : vector<8x128xf32>
    %188 = arith.addf %162, %187 : vector<8x128xf32>
    %c0_68 = arith.constant 0 : index
    %c0_69 = arith.constant 0 : index
    %189 = vector.load %arg15[%c0_68, %c0_69] : memref<1x128xf32, #tpu.memory_space<vmem>>, vector<1x128xf32>
    %c0_70 = arith.constant 0 : index
    %c0_71 = arith.constant 0 : index
    %190 = vector.load %arg16[%c0_70, %c0_71] : memref<1x128xf32, #tpu.memory_space<vmem>>, vector<1x128xf32>
    %cst_72 = arith.constant dense<0.000000e+00> : vector<8xf32>
    %191 = vector.multi_reduction <add>, %188, %cst_72 [1] : vector<8x128xf32> to vector<8xf32>
    %192 = vector.shape_cast %191 : vector<8xf32> to vector<8x1xf32>
    %cst_73 = arith.constant 1.280000e+02 : f32
    %193 = vector.broadcast %cst_73 : f32 to vector<8x1xf32>
    %194 = arith.divf %192, %193 : vector<8x1xf32>
    %195 = vector.broadcast %194 : vector<8x1xf32> to vector<8x128xf32>
    %196 = arith.subf %188, %195 : vector<8x128xf32>
    %197 = arith.mulf %196, %196 : vector<8x128xf32>
    %cst_74 = arith.constant dense<0.000000e+00> : vector<8xf32>
    %198 = vector.multi_reduction <add>, %197, %cst_74 [1] : vector<8x128xf32> to vector<8xf32>
    %199 = vector.shape_cast %198 : vector<8xf32> to vector<8x1xf32>
    %cst_75 = arith.constant 1.280000e+02 : f32
    %200 = vector.broadcast %cst_75 : f32 to vector<8x1xf32>
    %201 = arith.divf %199, %200 : vector<8x1xf32>
    %202 = vector.broadcast %194 : vector<8x1xf32> to vector<8x128xf32>
    %203 = arith.subf %188, %202 : vector<8x128xf32>
    %cst_76 = arith.constant 9.99999996E-13 : f32
    %204 = vector.broadcast %cst_76 : f32 to vector<8x1xf32>
    %205 = arith.addf %201, %204 : vector<8x1xf32>
    %206 = math.rsqrt %205 : vector<8x1xf32>
    %207 = vector.broadcast %206 : vector<8x1xf32> to vector<8x128xf32>
    %208 = arith.mulf %203, %207 : vector<8x128xf32>
    %209 = vector.broadcast %189 : vector<1x128xf32> to vector<8x128xf32>
    %210 = arith.mulf %208, %209 : vector<8x128xf32>
    %211 = vector.broadcast %190 : vector<1x128xf32> to vector<8x128xf32>
    %212 = arith.addf %210, %211 : vector<8x128xf32>
    %213 = arith.truncf %212 : vector<8x128xf32> to vector<8x128xbf16>
    %c0_77 = arith.constant 0 : index
    %c0_78 = arith.constant 0 : index
    %214 = vector.load %arg5[%c0_77, %c0_78] : memref<128x384xbf16, #tpu.memory_space<vmem>>, vector<128x384xbf16>
    %cst_79 = arith.constant dense<0.000000e+00> : vector<8x384xf32>
    %215 = tpu.matmul %213, %214, %cst_79 {dimension_numbers = #tpu.dot_dimension_numbers<[1], [0], [0], [1], [0, 0, 1, 1], [], []>} : vector<8x128xbf16>, vector<128x384xbf16>, vector<8x384xf32> -> vector<8x384xf32>
    %c0_80 = arith.constant 0 : index
    %c0_81 = arith.constant 0 : index
    %216 = vector.load %arg6[%c0_80, %c0_81] : memref<1x384xf32, #tpu.memory_space<vmem>>, vector<1x384xf32>
    %217 = vector.broadcast %216 : vector<1x384xf32> to vector<8x384xf32>
    %218 = arith.addf %215, %217 : vector<8x384xf32>
    %219 = vector.extract_strided_slice %218 {offsets = [7, 0], sizes = [1, 128], strides = [1, 1]} : vector<8x384xf32> to vector<1x128xf32>
    %220 = vector.extract_strided_slice %212 {offsets = [7, 0], sizes = [1, 128], strides = [1, 1]} : vector<8x128xf32> to vector<1x128xf32>
    %221 = vector.extract_strided_slice %218 {offsets = [0, 128], sizes = [8, 128], strides = [1, 1]} : vector<8x384xf32> to vector<8x128xf32>
    %222 = vector.extract_strided_slice %218 {offsets = [0, 256], sizes = [8, 128], strides = [1, 1]} : vector<8x384xf32> to vector<8x128xf32>
    %223 = vector.extract_strided_slice %219 {offsets = [0, 0], sizes = [1, 32], strides = [1, 1]} : vector<1x128xf32> to vector<1x32xf32>
    %224 = arith.truncf %223 : vector<1x32xf32> to vector<1x32xbf16>
    %225 = vector.extract_strided_slice %221 {offsets = [0, 0], sizes = [8, 32], strides = [1, 1]} : vector<8x128xf32> to vector<8x32xf32>
    %226 = arith.truncf %225 : vector<8x32xf32> to vector<8x32xbf16>
    %227 = vector.extract_strided_slice %222 {offsets = [0, 0], sizes = [8, 32], strides = [1, 1]} : vector<8x128xf32> to vector<8x32xf32>
    %228 = arith.truncf %227 : vector<8x32xf32> to vector<8x32xbf16>
    "tpu.trace_start"() <{level = 10 : i32, message = "qd,kd->qk"}> : () -> ()
    %cst_82 = arith.constant dense<0.000000e+00> : vector<1x8xf32>
    %229 = tpu.matmul %224, %226, %cst_82 {dimension_numbers = #tpu.dot_dimension_numbers<[1], [1], [0], [0], [0, 0, 1, 0], [], []>} : vector<1x32xbf16>, vector<8x32xbf16>, vector<1x8xf32> -> vector<1x8xf32>
    "tpu.trace_stop"() : () -> ()
    %cst_83 = arith.constant 0.176776692 : f32
    %230 = vector.broadcast %cst_83 : f32 to vector<1x8xf32>
    %231 = arith.mulf %229, %230 : vector<1x8xf32>
    %232 = arith.addf %231, %5 : vector<1x8xf32>
    %cst_84 = arith.constant dense<0xFF800000> : vector<1xf32>
    %233 = vector.multi_reduction <maximumf>, %232, %cst_84 [1] : vector<1x8xf32> to vector<1xf32>
    %234 = vector.shape_cast %233 : vector<1xf32> to vector<1x1xf32>
    %235 = vector.broadcast %234 : vector<1x1xf32> to vector<1x8xf32>
    %236 = arith.subf %232, %235 : vector<1x8xf32>
    %237 = math.exp %236 : vector<1x8xf32>
    %cst_85 = arith.constant dense<0.000000e+00> : vector<1xf32>
    %238 = vector.multi_reduction <add>, %237, %cst_85 [1] : vector<1x8xf32> to vector<1xf32>
    %239 = vector.shape_cast %238 : vector<1xf32> to vector<1x1xf32>
    %240 = tpu.reciprocal %239 {approx = true} : vector<1x1xf32> -> vector<1x1xf32>
    %241 = vector.broadcast %240 : vector<1x1xf32> to vector<1x8xf32>
    %242 = arith.mulf %237, %241 : vector<1x8xf32>
    %243 = arith.truncf %242 : vector<1x8xf32> to vector<1x8xbf16>
    %cst_86 = arith.constant dense<0.000000e+00> : vector<1x32xf32>
    %244 = tpu.matmul %243, %228, %cst_86 {dimension_numbers = #tpu.dot_dimension_numbers<[1], [0], [0], [1], [0, 0, 1, 1], [], []>} : vector<1x8xbf16>, vector<8x32xbf16>, vector<1x32xf32> -> vector<1x32xf32>
    %245 = vector.extract_strided_slice %219 {offsets = [0, 32], sizes = [1, 32], strides = [1, 1]} : vector<1x128xf32> to vector<1x32xf32>
    %246 = arith.truncf %245 : vector<1x32xf32> to vector<1x32xbf16>
    %247 = vector.extract_strided_slice %221 {offsets = [0, 32], sizes = [8, 32], strides = [1, 1]} : vector<8x128xf32> to vector<8x32xf32>
    %248 = arith.truncf %247 : vector<8x32xf32> to vector<8x32xbf16>
    %249 = vector.extract_strided_slice %222 {offsets = [0, 32], sizes = [8, 32], strides = [1, 1]} : vector<8x128xf32> to vector<8x32xf32>
    %250 = arith.truncf %249 : vector<8x32xf32> to vector<8x32xbf16>
    "tpu.trace_start"() <{level = 10 : i32, message = "qd,kd->qk"}> : () -> ()
    %cst_87 = arith.constant dense<0.000000e+00> : vector<1x8xf32>
    %251 = tpu.matmul %246, %248, %cst_87 {dimension_numbers = #tpu.dot_dimension_numbers<[1], [1], [0], [0], [0, 0, 1, 0], [], []>} : vector<1x32xbf16>, vector<8x32xbf16>, vector<1x8xf32> -> vector<1x8xf32>
    "tpu.trace_stop"() : () -> ()
    %cst_88 = arith.constant 0.176776692 : f32
    %252 = vector.broadcast %cst_88 : f32 to vector<1x8xf32>
    %253 = arith.mulf %251, %252 : vector<1x8xf32>
    %254 = arith.addf %253, %5 : vector<1x8xf32>
    %cst_89 = arith.constant dense<0xFF800000> : vector<1xf32>
    %255 = vector.multi_reduction <maximumf>, %254, %cst_89 [1] : vector<1x8xf32> to vector<1xf32>
    %256 = vector.shape_cast %255 : vector<1xf32> to vector<1x1xf32>
    %257 = vector.broadcast %256 : vector<1x1xf32> to vector<1x8xf32>
    %258 = arith.subf %254, %257 : vector<1x8xf32>
    %259 = math.exp %258 : vector<1x8xf32>
    %cst_90 = arith.constant dense<0.000000e+00> : vector<1xf32>
    %260 = vector.multi_reduction <add>, %259, %cst_90 [1] : vector<1x8xf32> to vector<1xf32>
    %261 = vector.shape_cast %260 : vector<1xf32> to vector<1x1xf32>
    %262 = tpu.reciprocal %261 {approx = true} : vector<1x1xf32> -> vector<1x1xf32>
    %263 = vector.broadcast %262 : vector<1x1xf32> to vector<1x8xf32>
    %264 = arith.mulf %259, %263 : vector<1x8xf32>
    %265 = arith.truncf %264 : vector<1x8xf32> to vector<1x8xbf16>
    %cst_91 = arith.constant dense<0.000000e+00> : vector<1x32xf32>
    %266 = tpu.matmul %265, %250, %cst_91 {dimension_numbers = #tpu.dot_dimension_numbers<[1], [0], [0], [1], [0, 0, 1, 1], [], []>} : vector<1x8xbf16>, vector<8x32xbf16>, vector<1x32xf32> -> vector<1x32xf32>
    %267 = vector.extract_strided_slice %219 {offsets = [0, 64], sizes = [1, 32], strides = [1, 1]} : vector<1x128xf32> to vector<1x32xf32>
    %268 = arith.truncf %267 : vector<1x32xf32> to vector<1x32xbf16>
    %269 = vector.extract_strided_slice %221 {offsets = [0, 64], sizes = [8, 32], strides = [1, 1]} : vector<8x128xf32> to vector<8x32xf32>
    %270 = arith.truncf %269 : vector<8x32xf32> to vector<8x32xbf16>
    %271 = vector.extract_strided_slice %222 {offsets = [0, 64], sizes = [8, 32], strides = [1, 1]} : vector<8x128xf32> to vector<8x32xf32>
    %272 = arith.truncf %271 : vector<8x32xf32> to vector<8x32xbf16>
    "tpu.trace_start"() <{level = 10 : i32, message = "qd,kd->qk"}> : () -> ()
    %cst_92 = arith.constant dense<0.000000e+00> : vector<1x8xf32>
    %273 = tpu.matmul %268, %270, %cst_92 {dimension_numbers = #tpu.dot_dimension_numbers<[1], [1], [0], [0], [0, 0, 1, 0], [], []>} : vector<1x32xbf16>, vector<8x32xbf16>, vector<1x8xf32> -> vector<1x8xf32>
    "tpu.trace_stop"() : () -> ()
    %cst_93 = arith.constant 0.176776692 : f32
    %274 = vector.broadcast %cst_93 : f32 to vector<1x8xf32>
    %275 = arith.mulf %273, %274 : vector<1x8xf32>
    %276 = arith.addf %275, %5 : vector<1x8xf32>
    %cst_94 = arith.constant dense<0xFF800000> : vector<1xf32>
    %277 = vector.multi_reduction <maximumf>, %276, %cst_94 [1] : vector<1x8xf32> to vector<1xf32>
    %278 = vector.shape_cast %277 : vector<1xf32> to vector<1x1xf32>
    %279 = vector.broadcast %278 : vector<1x1xf32> to vector<1x8xf32>
    %280 = arith.subf %276, %279 : vector<1x8xf32>
    %281 = math.exp %280 : vector<1x8xf32>
    %cst_95 = arith.constant dense<0.000000e+00> : vector<1xf32>
    %282 = vector.multi_reduction <add>, %281, %cst_95 [1] : vector<1x8xf32> to vector<1xf32>
    %283 = vector.shape_cast %282 : vector<1xf32> to vector<1x1xf32>
    %284 = tpu.reciprocal %283 {approx = true} : vector<1x1xf32> -> vector<1x1xf32>
    %285 = vector.broadcast %284 : vector<1x1xf32> to vector<1x8xf32>
    %286 = arith.mulf %281, %285 : vector<1x8xf32>
    %287 = arith.truncf %286 : vector<1x8xf32> to vector<1x8xbf16>
    %cst_96 = arith.constant dense<0.000000e+00> : vector<1x32xf32>
    %288 = tpu.matmul %287, %272, %cst_96 {dimension_numbers = #tpu.dot_dimension_numbers<[1], [0], [0], [1], [0, 0, 1, 1], [], []>} : vector<1x8xbf16>, vector<8x32xbf16>, vector<1x32xf32> -> vector<1x32xf32>
    %289 = vector.extract_strided_slice %219 {offsets = [0, 96], sizes = [1, 32], strides = [1, 1]} : vector<1x128xf32> to vector<1x32xf32>
    %290 = arith.truncf %289 : vector<1x32xf32> to vector<1x32xbf16>
    %291 = vector.extract_strided_slice %221 {offsets = [0, 96], sizes = [8, 32], strides = [1, 1]} : vector<8x128xf32> to vector<8x32xf32>
    %292 = arith.truncf %291 : vector<8x32xf32> to vector<8x32xbf16>
    %293 = vector.extract_strided_slice %222 {offsets = [0, 96], sizes = [8, 32], strides = [1, 1]} : vector<8x128xf32> to vector<8x32xf32>
    %294 = arith.truncf %293 : vector<8x32xf32> to vector<8x32xbf16>
    "tpu.trace_start"() <{level = 10 : i32, message = "qd,kd->qk"}> : () -> ()
    %cst_97 = arith.constant dense<0.000000e+00> : vector<1x8xf32>
    %295 = tpu.matmul %290, %292, %cst_97 {dimension_numbers = #tpu.dot_dimension_numbers<[1], [1], [0], [0], [0, 0, 1, 0], [], []>} : vector<1x32xbf16>, vector<8x32xbf16>, vector<1x8xf32> -> vector<1x8xf32>
    "tpu.trace_stop"() : () -> ()
    %cst_98 = arith.constant 0.176776692 : f32
    %296 = vector.broadcast %cst_98 : f32 to vector<1x8xf32>
    %297 = arith.mulf %295, %296 : vector<1x8xf32>
    %298 = arith.addf %297, %5 : vector<1x8xf32>
    %cst_99 = arith.constant dense<0xFF800000> : vector<1xf32>
    %299 = vector.multi_reduction <maximumf>, %298, %cst_99 [1] : vector<1x8xf32> to vector<1xf32>
    %300 = vector.shape_cast %299 : vector<1xf32> to vector<1x1xf32>
    %301 = vector.broadcast %300 : vector<1x1xf32> to vector<1x8xf32>
    %302 = arith.subf %298, %301 : vector<1x8xf32>
    %303 = math.exp %302 : vector<1x8xf32>
    %cst_100 = arith.constant dense<0.000000e+00> : vector<1xf32>
    %304 = vector.multi_reduction <add>, %303, %cst_100 [1] : vector<1x8xf32> to vector<1xf32>
    %305 = vector.shape_cast %304 : vector<1xf32> to vector<1x1xf32>
    %306 = tpu.reciprocal %305 {approx = true} : vector<1x1xf32> -> vector<1x1xf32>
    %307 = vector.broadcast %306 : vector<1x1xf32> to vector<1x8xf32>
    %308 = arith.mulf %303, %307 : vector<1x8xf32>
    %309 = arith.truncf %308 : vector<1x8xf32> to vector<1x8xbf16>
    %cst_101 = arith.constant dense<0.000000e+00> : vector<1x32xf32>
    %310 = tpu.matmul %309, %294, %cst_101 {dimension_numbers = #tpu.dot_dimension_numbers<[1], [0], [0], [1], [0, 0, 1, 1], [], []>} : vector<1x8xbf16>, vector<8x32xbf16>, vector<1x32xf32> -> vector<1x32xf32>
    %311 = tpu.concatenate %244, %266, %288, %310 in 1 : vector<1x32xf32>, vector<1x32xf32>, vector<1x32xf32>, vector<1x32xf32> -> vector<1x128xf32>
    %312 = arith.truncf %311 : vector<1x128xf32> to vector<1x128xbf16>
    %c0_102 = arith.constant 0 : index
    %c0_103 = arith.constant 0 : index
    %313 = vector.load %arg7[%c0_102, %c0_103] : memref<128x128xbf16, #tpu.memory_space<vmem>>, vector<128x128xbf16>
    %cst_104 = arith.constant dense<0.000000e+00> : vector<1x128xf32>
    %314 = tpu.matmul %312, %313, %cst_104 {dimension_numbers = #tpu.dot_dimension_numbers<[1], [0], [0], [1], [0, 0, 1, 1], [], []>} : vector<1x128xbf16>, vector<128x128xbf16>, vector<1x128xf32> -> vector<1x128xf32>
    %c0_105 = arith.constant 0 : index
    %c0_106 = arith.constant 0 : index
    %315 = vector.load %arg8[%c0_105, %c0_106] : memref<1x128xf32, #tpu.memory_space<vmem>>, vector<1x128xf32>
    %316 = arith.addf %314, %315 : vector<1x128xf32>
    %317 = arith.addf %220, %316 : vector<1x128xf32>
    %c0_107 = arith.constant 0 : index
    %c0_108 = arith.constant 0 : index
    %318 = vector.load %arg9[%c0_107, %c0_108] : memref<1x128xf32, #tpu.memory_space<vmem>>, vector<1x128xf32>
    %c0_109 = arith.constant 0 : index
    %c0_110 = arith.constant 0 : index
    %319 = vector.load %arg10[%c0_109, %c0_110] : memref<1x128xf32, #tpu.memory_space<vmem>>, vector<1x128xf32>
    %cst_111 = arith.constant dense<0.000000e+00> : vector<1xf32>
    %320 = vector.multi_reduction <add>, %317, %cst_111 [1] : vector<1x128xf32> to vector<1xf32>
    %321 = vector.shape_cast %320 : vector<1xf32> to vector<1x1xf32>
    %cst_112 = arith.constant 1.280000e+02 : f32
    %322 = vector.broadcast %cst_112 : f32 to vector<1x1xf32>
    %323 = arith.divf %321, %322 : vector<1x1xf32>
    %324 = vector.broadcast %323 : vector<1x1xf32> to vector<1x128xf32>
    %325 = arith.subf %317, %324 : vector<1x128xf32>
    %326 = arith.mulf %325, %325 : vector<1x128xf32>
    %cst_113 = arith.constant dense<0.000000e+00> : vector<1xf32>
    %327 = vector.multi_reduction <add>, %326, %cst_113 [1] : vector<1x128xf32> to vector<1xf32>
    %328 = vector.shape_cast %327 : vector<1xf32> to vector<1x1xf32>
    %cst_114 = arith.constant 1.280000e+02 : f32
    %329 = vector.broadcast %cst_114 : f32 to vector<1x1xf32>
    %330 = arith.divf %328, %329 : vector<1x1xf32>
    %331 = vector.broadcast %323 : vector<1x1xf32> to vector<1x128xf32>
    %332 = arith.subf %317, %331 : vector<1x128xf32>
    %cst_115 = arith.constant 9.99999996E-13 : f32
    %333 = vector.broadcast %cst_115 : f32 to vector<1x1xf32>
    %334 = arith.addf %330, %333 : vector<1x1xf32>
    %335 = math.rsqrt %334 : vector<1x1xf32>
    %336 = vector.broadcast %335 : vector<1x1xf32> to vector<1x128xf32>
    %337 = arith.mulf %332, %336 : vector<1x128xf32>
    %338 = arith.mulf %337, %318 : vector<1x128xf32>
    %339 = arith.addf %338, %319 : vector<1x128xf32>
    %340 = arith.truncf %339 : vector<1x128xf32> to vector<1x128xbf16>
    %c0_116 = arith.constant 0 : index
    %c0_117 = arith.constant 0 : index
    %341 = vector.load %arg11[%c0_116, %c0_117] : memref<128x512xbf16, #tpu.memory_space<vmem>>, vector<128x512xbf16>
    %cst_118 = arith.constant dense<0.000000e+00> : vector<1x512xf32>
    %342 = tpu.matmul %340, %341, %cst_118 {dimension_numbers = #tpu.dot_dimension_numbers<[1], [0], [0], [1], [0, 0, 1, 1], [], []>} : vector<1x128xbf16>, vector<128x512xbf16>, vector<1x512xf32> -> vector<1x512xf32>
    %c0_119 = arith.constant 0 : index
    %c0_120 = arith.constant 0 : index
    %343 = vector.load %arg12[%c0_119, %c0_120] : memref<1x512xf32, #tpu.memory_space<vmem>>, vector<1x512xf32>
    %344 = arith.addf %342, %343 : vector<1x512xf32>
    %345 = arith.mulf %344, %344 : vector<1x512xf32>
    %346 = arith.mulf %344, %345 : vector<1x512xf32>
    %cst_121 = arith.constant 4.471500e-02 : f32
    %347 = vector.broadcast %cst_121 : f32 to vector<1x512xf32>
    %348 = arith.mulf %347, %346 : vector<1x512xf32>
    %349 = arith.addf %344, %348 : vector<1x512xf32>
    %cst_122 = arith.constant 0.797884583 : f32
    %350 = vector.broadcast %cst_122 : f32 to vector<1x512xf32>
    %351 = arith.mulf %350, %349 : vector<1x512xf32>
    %352 = math.tanh %351 : vector<1x512xf32>
    %cst_123 = arith.constant 1.000000e+00 : f32
    %353 = vector.broadcast %cst_123 : f32 to vector<1x512xf32>
    %354 = arith.addf %353, %352 : vector<1x512xf32>
    %cst_124 = arith.constant 5.000000e-01 : f32
    %355 = vector.broadcast %cst_124 : f32 to vector<1x512xf32>
    %356 = arith.mulf %355, %354 : vector<1x512xf32>
    %357 = arith.mulf %344, %356 : vector<1x512xf32>
    %358 = arith.truncf %357 : vector<1x512xf32> to vector<1x512xbf16>
    %c0_125 = arith.constant 0 : index
    %c0_126 = arith.constant 0 : index
    %359 = vector.load %arg13[%c0_125, %c0_126] : memref<512x128xbf16, #tpu.memory_space<vmem>>, vector<512x128xbf16>
    %cst_127 = arith.constant dense<0.000000e+00> : vector<1x128xf32>
    %360 = tpu.matmul %358, %359, %cst_127 {dimension_numbers = #tpu.dot_dimension_numbers<[1], [0], [0], [1], [0, 0, 1, 1], [], []>} : vector<1x512xbf16>, vector<512x128xbf16>, vector<1x128xf32> -> vector<1x128xf32>
    %c0_128 = arith.constant 0 : index
    %c0_129 = arith.constant 0 : index
    %361 = vector.load %arg14[%c0_128, %c0_129] : memref<1x128xf32, #tpu.memory_space<vmem>>, vector<1x128xf32>
    %362 = arith.addf %360, %361 : vector<1x128xf32>
    %363 = arith.addf %339, %362 : vector<1x128xf32>
    %c0_130 = arith.constant 0 : index
    %c0_131 = arith.constant 0 : index
    %364 = vector.load %arg15[%c0_130, %c0_131] : memref<1x128xf32, #tpu.memory_space<vmem>>, vector<1x128xf32>
    %c0_132 = arith.constant 0 : index
    %c0_133 = arith.constant 0 : index
    %365 = vector.load %arg16[%c0_132, %c0_133] : memref<1x128xf32, #tpu.memory_space<vmem>>, vector<1x128xf32>
    %cst_134 = arith.constant dense<0.000000e+00> : vector<1xf32>
    %366 = vector.multi_reduction <add>, %363, %cst_134 [1] : vector<1x128xf32> to vector<1xf32>
    %367 = vector.shape_cast %366 : vector<1xf32> to vector<1x1xf32>
    %cst_135 = arith.constant 1.280000e+02 : f32
    %368 = vector.broadcast %cst_135 : f32 to vector<1x1xf32>
    %369 = arith.divf %367, %368 : vector<1x1xf32>
    %370 = vector.broadcast %369 : vector<1x1xf32> to vector<1x128xf32>
    %371 = arith.subf %363, %370 : vector<1x128xf32>
    %372 = arith.mulf %371, %371 : vector<1x128xf32>
    %cst_136 = arith.constant dense<0.000000e+00> : vector<1xf32>
    %373 = vector.multi_reduction <add>, %372, %cst_136 [1] : vector<1x128xf32> to vector<1xf32>
    %374 = vector.shape_cast %373 : vector<1xf32> to vector<1x1xf32>
    %cst_137 = arith.constant 1.280000e+02 : f32
    %375 = vector.broadcast %cst_137 : f32 to vector<1x1xf32>
    %376 = arith.divf %374, %375 : vector<1x1xf32>
    %377 = vector.broadcast %369 : vector<1x1xf32> to vector<1x128xf32>
    %378 = arith.subf %363, %377 : vector<1x128xf32>
    %cst_138 = arith.constant 9.99999996E-13 : f32
    %379 = vector.broadcast %cst_138 : f32 to vector<1x1xf32>
    %380 = arith.addf %376, %379 : vector<1x1xf32>
    %381 = math.rsqrt %380 : vector<1x1xf32>
    %382 = vector.broadcast %381 : vector<1x1xf32> to vector<1x128xf32>
    %383 = arith.mulf %378, %382 : vector<1x128xf32>
    %384 = arith.mulf %383, %364 : vector<1x128xf32>
    %385 = arith.addf %384, %365 : vector<1x128xf32>
    %386 = arith.truncf %385 : vector<1x128xf32> to vector<1x128xbf16>
    %c0_139 = arith.constant 0 : index
    %c0_140 = arith.constant 0 : index
    %387 = vector.load %arg17[%c0_139, %c0_140] : memref<128x128xbf16, #tpu.memory_space<vmem>>, vector<128x128xbf16>
    %cst_141 = arith.constant dense<0.000000e+00> : vector<1x128xf32>
    %388 = tpu.matmul %386, %387, %cst_141 {dimension_numbers = #tpu.dot_dimension_numbers<[1], [0], [0], [1], [0, 0, 1, 1], [], []>} : vector<1x128xbf16>, vector<128x128xbf16>, vector<1x128xf32> -> vector<1x128xf32>
    %c0_142 = arith.constant 0 : index
    %c0_143 = arith.constant 0 : index
    %389 = vector.load %arg18[%c0_142, %c0_143] : memref<1x128xf32, #tpu.memory_space<vmem>>, vector<1x128xf32>
    %390 = arith.addf %388, %389 : vector<1x128xf32>
    %391 = vector.shape_cast %390 : vector<1x128xf32> to vector<1x1x128xf32>
    %c0_144 = arith.constant 0 : index
    %c0_145 = arith.constant 0 : index
    %c0_146 = arith.constant 0 : index
    %392 = vector.load %arg19[%c0_144, %c0_145, %c0_146] : memref<1x1x128xf32, #tpu.memory_space<vmem>>, vector<1x1x128xf32>
    tpu.vector_store %arg19[%c0_144, %c0_145, %c0_146], %391 {strides = array<i32>} : memref<1x1x128xf32, #tpu.memory_space<vmem>>, vector<1x1x128xf32>,
    return
  }
  func.func @transform_0(%arg0: i32) -> (i32, i32, i32) {
    %c0_i32 = arith.constant 0 : i32
    %c0_i32_0 = arith.constant 0 : i32
    %c0_i32_1 = arith.constant 0 : i32
    return %arg0, %c0_i32, %c0_i32_0 : i32, i32, i32
  }
  func.func @transform_1(%arg0: i32) -> (i32, i32, i32) {
    %c0_i32 = arith.constant 0 : i32
    %c0_i32_0 = arith.constant 0 : i32
    %c0_i32_1 = arith.constant 0 : i32
    return %arg0, %c0_i32, %c0_i32_0 : i32, i32, i32
  }
  func.func @transform_2(%arg0: i32) -> (i32, i32) {
    %c0_i32 = arith.constant 0 : i32
    %c0_i32_0 = arith.constant 0 : i32
    %c0_i32_1 = arith.constant 0 : i32
    return %c0_i32, %c0_i32_0 : i32, i32
  }
  func.func @transform_3(%arg0: i32) -> (i32, i32) {
    %c0_i32 = arith.constant 0 : i32
    %c0_i32_0 = arith.constant 0 : i32
    %c0_i32_1 = arith.constant 0 : i32
    return %c0_i32, %c0_i32_0 : i32, i32
  }
  func.func @transform_4(%arg0: i32) -> (i32, i32) {
    %c0_i32 = arith.constant 0 : i32
    %c0_i32_0 = arith.constant 0 : i32
    %c0_i32_1 = arith.constant 0 : i32
    return %c0_i32, %c0_i32_0 : i32, i32
  }
  func.func @transform_5(%arg0: i32) -> (i32, i32) {
    %c0_i32 = arith.constant 0 : i32
    %c0_i32_0 = arith.constant 0 : i32
    %c0_i32_1 = arith.constant 0 : i32
    return %c0_i32, %c0_i32_0 : i32, i32
  }
  func.func @transform_6(%arg0: i32) -> (i32, i32) {
    %c0_i32 = arith.constant 0 : i32
    %c0_i32_0 = arith.constant 0 : i32
    %c0_i32_1 = arith.constant 0 : i32
    return %c0_i32, %c0_i32_0 : i32, i32
  }
  func.func @transform_7(%arg0: i32) -> (i32, i32) {
    %c0_i32 = arith.constant 0 : i32
    %c0_i32_0 = arith.constant 0 : i32
    %c0_i32_1 = arith.constant 0 : i32
    return %c0_i32, %c0_i32_0 : i32, i32
  }
  func.func @transform_8(%arg0: i32) -> (i32, i32) {
    %c0_i32 = arith.constant 0 : i32
    %c0_i32_0 = arith.constant 0 : i32
    %c0_i32_1 = arith.constant 0 : i32
    return %c0_i32, %c0_i32_0 : i32, i32
  }
  func.func @transform_9(%arg0: i32) -> (i32, i32) {
    %c0_i32 = arith.constant 0 : i32
    %c0_i32_0 = arith.constant 0 : i32
    %c0_i32_1 = arith.constant 0 : i32
    return %c0_i32, %c0_i32_0 : i32, i32
  }
  func.func @transform_10(%arg0: i32) -> (i32, i32) {
    %c0_i32 = arith.constant 0 : i32
    %c0_i32_0 = arith.constant 0 : i32
    %c0_i32_1 = arith.constant 0 : i32
    return %c0_i32, %c0_i32_0 : i32, i32
  }
  func.func @transform_11(%arg0: i32) -> (i32, i32) {
    %c0_i32 = arith.constant 0 : i32
    %c0_i32_0 = arith.constant 0 : i32
    %c0_i32_1 = arith.constant 0 : i32
    return %c0_i32, %c0_i32_0 : i32, i32
  }
  func.func @transform_12(%arg0: i32) -> (i32, i32) {
    %c0_i32 = arith.constant 0 : i32
    %c0_i32_0 = arith.constant 0 : i32
    %c0_i32_1 = arith.constant 0 : i32
    return %c0_i32, %c0_i32_0 : i32, i32
  }
  func.func @transform_13(%arg0: i32) -> (i32, i32) {
    %c0_i32 = arith.constant 0 : i32
    %c0_i32_0 = arith.constant 0 : i32
    %c0_i32_1 = arith.constant 0 : i32
    return %c0_i32, %c0_i32_0 : i32, i32
  }
  func.func @transform_14(%arg0: i32) -> (i32, i32) {
    %c0_i32 = arith.constant 0 : i32
    %c0_i32_0 = arith.constant 0 : i32
    %c0_i32_1 = arith.constant 0 : i32
    return %c0_i32, %c0_i32_0 : i32, i32
  }
  func.func @transform_15(%arg0: i32) -> (i32, i32) {
    %c0_i32 = arith.constant 0 : i32
    %c0_i32_0 = arith.constant 0 : i32
    %c0_i32_1 = arith.constant 0 : i32
    return %c0_i32, %c0_i32_0 : i32, i32
  }
  func.func @transform_16(%arg0: i32) -> (i32, i32) {
    %c0_i32 = arith.constant 0 : i32
    %c0_i32_0 = arith.constant 0 : i32
    %c0_i32_1 = arith.constant 0 : i32
    return %c0_i32, %c0_i32_0 : i32, i32
  }
  func.func @transform_17(%arg0: i32) -> (i32, i32) {
    %c0_i32 = arith.constant 0 : i32
    %c0_i32_0 = arith.constant 0 : i32
    %c0_i32_1 = arith.constant 0 : i32
    return %c0_i32, %c0_i32_0 : i32, i32
  }
  func.func @transform_18(%arg0: i32) -> (i32, i32, i32) {
    %c0_i32 = arith.constant 0 : i32
    %c0_i32_0 = arith.constant 0 : i32
    %c0_i32_1 = arith.constant 0 : i32
    return %arg0, %c0_i32, %c0_i32_0 : i32, i32, i32
  }
}

</mosaic_0001>

<llo_original>
// kernel: custom_bert_forward.1
$region0: #{custom_bert_forward.1}
  #allocation0 [shape = 'u32[]', space=smem, size = 0x4, offset = 0x4, fixed_abs, tag = 'smem constant byte address 0x4 - core index']
  #allocation1 [shape = 'u32[144,128]{1,0:T(1,128)}', space=vmem, size = 0x12000, scoped, tag = 'internal scratch']
  %s0 = inlined_call_operand.vmem [shape: f32[2,8,128], index: 0, kind: input, shape index: {}]
  %s1 = inlined_call_operand.vmem [shape: f32[2,1,8], index: 1, kind: input, shape index: {}]
  %s2 = inlined_call_operand.vmem [shape: f32[1,128], index: 2, kind: input, shape index: {}]
  %s3 = inlined_call_operand.hbm [shape: f32[1,128], index: 3, kind: input, shape index: {}]
  %s4 = inlined_call_operand.vmem [shape: bf16[128,384], index: 4, kind: input, shape index: {}]
  %s5 = inlined_call_operand.hbm [shape: f32[1,384], index: 5, kind: input, shape index: {}]
  %s6 = inlined_call_operand.hbm [shape: bf16[128,128], index: 6, kind: input, shape index: {}]
  %s7 = inlined_call_operand.hbm [shape: f32[1,128], index: 7, kind: input, shape index: {}]
  %s8 = inlined_call_operand.hbm [shape: f32[1,128], index: 8, kind: input, shape index: {}]
  %s9 = inlined_call_operand.hbm [shape: f32[1,128], index: 9, kind: input, shape index: {}]
  %s10 = inlined_call_operand.hbm [shape: bf16[128,512], index: 10, kind: input, shape index: {}]
  %s11 = inlined_call_operand.vmem [shape: f32[1,512], index: 11, kind: input, shape index: {}]
  %s12 = inlined_call_operand.hbm [shape: bf16[512,128], index: 12, kind: input, shape index: {}]
  %s13 = inlined_call_operand.hbm [shape: f32[1,128], index: 13, kind: input, shape index: {}]
  %s14 = inlined_call_operand.hbm [shape: f32[1,128], index: 14, kind: input, shape index: {}]
  %s15 = inlined_call_operand.hbm [shape: f32[1,128], index: 15, kind: input, shape index: {}]
  %s16 = inlined_call_operand.vmem [shape: bf16[128,128], index: 16, kind: input, shape index: {}]
  %s17 = inlined_call_operand.hbm [shape: f32[1,128], index: 17, kind: input, shape index: {}]
  %s18 = inlined_call_operand.hbm [shape: f32[2,1,128], index: 18, kind: output, shape index: {}]
  %s19 = sld [smem:[#allocation0]]
  $region153: #{custom_bert_forward.1} parent=0
    _
  %s21 = ssub.s32 1, %s19
  %s22 = scalar_select 0, %s21, %s19
  $region1: #{custom_bert_forward.1} parent=0
    #allocation2 [shape = 'u8[512]{0}', space=vmem, size = 0x400, scoped, tag = 'input window, operand 3, single buffered']
    #allocation3 [shape = 's32[2]{0}', space=sflag, size = 0x8, scoped, tag = 'scoped memory for custom_bert_forward.1']
    #allocation4 [shape = 's32[2]{0}', space=sflag, size = 0x8, scoped, tag = 'scoped memory for custom_bert_forward.1']
    #allocation5 [shape = 'u8[1536]{0}', space=vmem, size = 0x800, scoped, tag = 'input window, operand 5, single buffered']
    #allocation6 [shape = 's32[1]{0}', space=sflag, size = 0x4, scoped, tag = 'scoped memory for custom_bert_forward.1']
    #allocation7 [shape = 'u8[32768]{0}', space=vmem, size = 0x8000, scoped, tag = 'input window, operand 6, single buffered']
    #allocation8 [shape = 'u8[512]{0}', space=vmem, size = 0x400, scoped, tag = 'input window, operand 7, single buffered']
    #allocation9 [shape = 's32[1]{0}', space=sflag, size = 0x4, scoped, tag = 'scoped memory for custom_bert_forward.1']
    #allocation10 [shape = 'u8[512]{0}', space=vmem, size = 0x400, scoped, tag = 'input window, operand 8, single buffered']
    #allocation11 [shape = 'u8[512]{0}', space=vmem, size = 0x400, scoped, tag = 'input window, operand 9, single buffered']
    #allocation12 [shape = 's32[1]{0}', space=sflag, size = 0x4, scoped, tag = 'scoped memory for custom_bert_forward.1']
    #allocation13 [shape = 'u8[131072]{0}', space=vmem, size = 0x20000, scoped, tag = 'input window, operand 10, single buffered']
    #allocation14 [shape = 'u8[131072]{0}', space=vmem, size = 0x20000, scoped, tag = 'input window, operand 12, single buffered']
    #allocation15 [shape = 's32[1]{0}', space=sflag, size = 0x4, scoped, tag = 'scoped memory for custom_bert_forward.1']
    #allocation16 [shape = 'u8[512]{0}', space=vmem, size = 0x400, scoped, tag = 'input window, operand 13, single buffered']
    #allocation17 [shape = 'u8[512]{0}', space=vmem, size = 0x400, scoped, tag = 'input window, operand 14, single buffered']
    #allocation18 [shape = 's32[1]{0}', space=sflag, size = 0x4, scoped, tag = 'scoped memory for custom_bert_forward.1']
    #allocation19 [shape = 'u8[512]{0}', space=vmem, size = 0x400, scoped, tag = 'input window, operand 15, single buffered']
    #allocation20 [shape = 'u8[512]{0}', space=vmem, size = 0x400, scoped, tag = 'input window, operand 17, single buffered']
    #allocation21 [shape = 's32[1]{0}', space=sflag, size = 0x4, scoped, tag = 'scoped memory for custom_bert_forward.1']
    #allocation22 [shape = 'u8[1024]{0}', space=vmem, size = 0x400, scoped, tag = 'output window, operand 0']
    %23 = vsyncpa [#allocation3], 0
    %24 = vsyncpa [#allocation6], 0
    %25 = vsyncpa [#allocation9], 0
    %26 = vsyncpa [#allocation12], 0
    %27 = vsyncpa [#allocation15], 0
    %28 = vsyncpa [#allocation18], 0
    %29 = vsyncpa [#allocation21], 0
    %30 = vsyncpa [#allocation4], 0
    %s31 = scalar_lea.sflag [#allocation4], 1
    %32 = vsyncpa %s31, 0
    loop: start=0, step=1, limit=4
    $region2: #{custom_bert_forward.1} parent=1 // loop_pre_header
      _
    $region3: #{custom_bert_forward.1} parent=1 // loop_header
      %s34 = sphi 0, %s38
      %p35 = scmp.ge.s32.totalorder %s34, 4
      %s44 = sphi 0, %s46
      %s47 = sphi 0, %s44
      %s48 = sphi 0, %s47
      %s64 = sphi 0, %s48
      %s70 = sphi 0, %s72
      %s73 = sphi 0, %s70
      %s74 = sphi 0, %s73
      %s90 = sphi 0, %s74
      %s94 = sphi 0, %s94
      %s96 = sphi 0, %s94
      %s97 = sphi 0, %s96
      %s111 = sphi 0, %s97
      %s115 = sphi 0, %s115
      %s117 = sphi 0, %s115
      %s118 = sphi 0, %s117
      %s132 = sphi 0, %s118
      %s136 = sphi 0, %s136
      %s138 = sphi 0, %s136
      %s139 = sphi 0, %s138
      %s153 = sphi 0, %s139
      %s157 = sphi 0, %s157
      %s159 = sphi 0, %s157
      %s160 = sphi 0, %s159
      %s174 = sphi 0, %s160
      %s178 = sphi 0, %s178
      %s180 = sphi 0, %s178
      %s181 = sphi 0, %s180
      %s195 = sphi 0, %s181
      %s199 = sphi 0, %s199
      %s201 = sphi 0, %s199
      %s202 = sphi 0, %s201
      %s216 = sphi 0, %s202
      %s220 = sphi 0, %s220
      %s222 = sphi 0, %s220
      %s223 = sphi 0, %s222
      %s237 = sphi 0, %s223
      %s241 = sphi 0, %s241
      %s243 = sphi 0, %s241
      %s244 = sphi 0, %s243
      %s258 = sphi 0, %s244
      %s262 = sphi 0, %s262
      %s264 = sphi 0, %s262
      %s265 = sphi 0, %s264
      %s279 = sphi 0, %s265
      %s283 = sphi 0, %s283
      %s285 = sphi 0, %s283
      %s286 = sphi 0, %s285
      %s300 = sphi 0, %s286
      %s304 = sphi 0, %s304
      %s306 = sphi 0, %s304
      %s307 = sphi 0, %s306
      %s321 = sphi 0, %s307
      %s325 = sphi 0, %s325
      %s327 = sphi 0, %s325
      %s328 = sphi 0, %s327
      %s342 = sphi 0, %s328
      %s346 = sphi 0, %s346
      %s348 = sphi 0, %s346
      %s349 = sphi 0, %s348
      %s363 = sphi 0, %s349
      %s367 = sphi 0, %s367
      %s369 = sphi 0, %s367
      %s370 = sphi 0, %s369
      %s384 = sphi 0, %s370
      %s388 = sphi 0, %s388
      %s390 = sphi 0, %s388
      %s391 = sphi 0, %s390
      %s405 = sphi 0, %s391
      %s409 = sphi 0, %s409
      %s411 = sphi 0, %s409
      %s412 = sphi 0, %s411
      %s426 = sphi 0, %s412
      %s432 = sphi 0, %s434
      %s435 = sphi 0, %s432
      %s436 = sphi 0, %s435
      %s452 = sphi 0, %s436
    $region4: #{custom_bert_forward.1} parent=1 // loop_header_branch
      %37 = sbr.rel (%p35) target = $region8
    $region5: #{custom_bert_forward.1} parent=1 // loop_body
      %s39 = ssub.s32 %s34, 1
      %s40 = ssub.s32 %s34, 2
      %s41 = sadd.s32 %s34, 1
      %s42 = ssub.s32 %s34, %s41
      %p43 = scmp.eq.s32.totalorder %s42, 0
      %s45 = sadd.s32 %s44, 1
      %s46 = scalar_select %p43, %s44, %s45
      %p49 = pneg %p43
      %p50 = scmp.eq.s32.totalorder %s34, 1
      %p51 = por %p49, %p50
      %p52 = scmp.ne.s32.totalorder %s44, %s47
      %p53 = scmp.eq.s32.totalorder %s34, 0
      %p54 = por %p52, %p53
      %p55 = scmp.ne.s32.totalorder %s44, %s47
      %p56 = scmp.eq.s32.totalorder %s39, 1
      %p57 = por %p55, %p56
      %p58 = scmp.ne.s32.totalorder %s47, %s48
      %p59 = scmp.eq.s32.totalorder %s39, 0
      %p60 = por %p58, %p59
      %p61 = scmp.ne.s32.totalorder %s47, %s48
      %p62 = scmp.eq.s32.totalorder %s40, 1
      %p63 = por %p61, %p62
      %p65 = scmp.ne.s32.totalorder %s48, %s64
      %p66 = scmp.eq.s32.totalorder %s40, 0
      %p67 = por %p65, %p66
      %s68 = ssub.s32 %s34, %s41
      %p69 = scmp.eq.s32.totalorder %s68, 0
      %s71 = sadd.s32 %s70, 1
      %s72 = scalar_select %p69, %s70, %s71
      %p75 = pneg %p69
      %p76 = scmp.eq.s32.totalorder %s34, 1
      %p77 = por %p75, %p76
      %p78 = scmp.ne.s32.totalorder %s70, %s73
      %p79 = scmp.eq.s32.totalorder %s34, 0
      %p80 = por %p78, %p79
      %p81 = scmp.ne.s32.totalorder %s70, %s73
      %p82 = scmp.eq.s32.totalorder %s39, 1
      %p83 = por %p81, %p82
      %p84 = scmp.ne.s32.totalorder %s73, %s74
      %p85 = scmp.eq.s32.totalorder %s39, 0
      %p86 = por %p84, %p85
      %p87 = scmp.ne.s32.totalorder %s73, %s74
      %p88 = scmp.eq.s32.totalorder %s40, 1
      %p89 = por %p87, %p88
      %p91 = scmp.ne.s32.totalorder %s74, %s90
      %p92 = scmp.eq.s32.totalorder %s40, 0
      %p93 = por %p91, %p92
      %s95 = sadd.s32 %s94, 1
      %p98 = scmp.eq.s32.totalorder %s34, 1
      %p99 = scmp.ne.s32.totalorder %s94, %s96
      %p100 = scmp.eq.s32.totalorder %s34, 0
      %p101 = por %p99, %p100
      %p102 = scmp.ne.s32.totalorder %s94, %s96
      %p103 = scmp.eq.s32.totalorder %s39, 1
      %p104 = por %p102, %p103
      %p105 = scmp.ne.s32.totalorder %s96, %s97
      %p106 = scmp.eq.s32.totalorder %s39, 0
      %p107 = por %p105, %p106
      %p108 = scmp.ne.s32.totalorder %s96, %s97
      %p109 = scmp.eq.s32.totalorder %s40, 1
      %p110 = por %p108, %p109
      %p112 = scmp.ne.s32.totalorder %s97, %s111
      %p113 = scmp.eq.s32.totalorder %s40, 0
      %p114 = por %p112, %p113
      %s116 = sadd.s32 %s115, 1
      %p119 = scmp.eq.s32.totalorder %s34, 1
      %p120 = scmp.ne.s32.totalorder %s115, %s117
      %p121 = scmp.eq.s32.totalorder %s34, 0
      %p122 = por %p120, %p121
      %p123 = scmp.ne.s32.totalorder %s115, %s117
      %p124 = scmp.eq.s32.totalorder %s39, 1
      %p125 = por %p123, %p124
      %p126 = scmp.ne.s32.totalorder %s117, %s118
      %p127 = scmp.eq.s32.totalorder %s39, 0
      %p128 = por %p126, %p127
      %p129 = scmp.ne.s32.totalorder %s117, %s118
      %p130 = scmp.eq.s32.totalorder %s40, 1
      %p131 = por %p129, %p130
      %p133 = scmp.ne.s32.totalorder %s118, %s132
      %p134 = scmp.eq.s32.totalorder %s40, 0
      %p135 = por %p133, %p134
      %s137 = sadd.s32 %s136, 1
      %p140 = scmp.eq.s32.totalorder %s34, 1
      %p141 = scmp.ne.s32.totalorder %s136, %s138
      %p142 = scmp.eq.s32.totalorder %s34, 0
      %p143 = por %p141, %p142
      %p144 = scmp.ne.s32.totalorder %s136, %s138
      %p145 = scmp.eq.s32.totalorder %s39, 1
      %p146 = por %p144, %p145
      %p147 = scmp.ne.s32.totalorder %s138, %s139
      %p148 = scmp.eq.s32.totalorder %s39, 0
      %p149 = por %p147, %p148
      %p150 = scmp.ne.s32.totalorder %s138, %s139
      %p151 = scmp.eq.s32.totalorder %s40, 1
      %p152 = por %p150, %p151
      %p154 = scmp.ne.s32.totalorder %s139, %s153
      %p155 = scmp.eq.s32.totalorder %s40, 0
      %p156 = por %p154, %p155
      %s158 = sadd.s32 %s157, 1
      %p161 = scmp.eq.s32.totalorder %s34, 1
      %p162 = scmp.ne.s32.totalorder %s157, %s159
      %p163 = scmp.eq.s32.totalorder %s34, 0
      %p164 = por %p162, %p163
      %p165 = scmp.ne.s32.totalorder %s157, %s159
      %p166 = scmp.eq.s32.totalorder %s39, 1
      %p167 = por %p165, %p166
      %p168 = scmp.ne.s32.totalorder %s159, %s160
      %p169 = scmp.eq.s32.totalorder %s39, 0
      %p170 = por %p168, %p169
      %p171 = scmp.ne.s32.totalorder %s159, %s160
      %p172 = scmp.eq.s32.totalorder %s40, 1
      %p173 = por %p171, %p172
      %p175 = scmp.ne.s32.totalorder %s160, %s174
      %p176 = scmp.eq.s32.totalorder %s40, 0
      %p177 = por %p175, %p176
      %s179 = sadd.s32 %s178, 1
      %p182 = scmp.eq.s32.totalorder %s34, 1
      %p183 = scmp.ne.s32.totalorder %s178, %s180
      %p184 = scmp.eq.s32.totalorder %s34, 0
      %p185 = por %p183, %p184
      %p186 = scmp.ne.s32.totalorder %s178, %s180
      %p187 = scmp.eq.s32.totalorder %s39, 1
      %p188 = por %p186, %p187
      %p189 = scmp.ne.s32.totalorder %s180, %s181
      %p190 = scmp.eq.s32.totalorder %s39, 0
      %p191 = por %p189, %p190
      %p192 = scmp.ne.s32.totalorder %s180, %s181
      %p193 = scmp.eq.s32.totalorder %s40, 1
      %p194 = por %p192, %p193
      %p196 = scmp.ne.s32.totalorder %s181, %s195
      %p197 = scmp.eq.s32.totalorder %s40, 0
      %p198 = por %p196, %p197
      %s200 = sadd.s32 %s199, 1
      %p203 = scmp.eq.s32.totalorder %s34, 1
      %p204 = scmp.ne.s32.totalorder %s199, %s201
      %p205 = scmp.eq.s32.totalorder %s34, 0
      %p206 = por %p204, %p205
      %p207 = scmp.ne.s32.totalorder %s199, %s201
      %p208 = scmp.eq.s32.totalorder %s39, 1
      %p209 = por %p207, %p208
      %p210 = scmp.ne.s32.totalorder %s201, %s202
      %p211 = scmp.eq.s32.totalorder %s39, 0
      %p212 = por %p210, %p211
      %p213 = scmp.ne.s32.totalorder %s201, %s202
      %p214 = scmp.eq.s32.totalorder %s40, 1
      %p215 = por %p213, %p214
      %p217 = scmp.ne.s32.totalorder %s202, %s216
      %p218 = scmp.eq.s32.totalorder %s40, 0
      %p219 = por %p217, %p218
      %s221 = sadd.s32 %s220, 1
      %p224 = scmp.eq.s32.totalorder %s34, 1
      %p225 = scmp.ne.s32.totalorder %s220, %s222
      %p226 = scmp.eq.s32.totalorder %s34, 0
      %p227 = por %p225, %p226
      %p228 = scmp.ne.s32.totalorder %s220, %s222
      %p229 = scmp.eq.s32.totalorder %s39, 1
      %p230 = por %p228, %p229
      %p231 = scmp.ne.s32.totalorder %s222, %s223
      %p232 = scmp.eq.s32.totalorder %s39, 0
      %p233 = por %p231, %p232
      %p234 = scmp.ne.s32.totalorder %s222, %s223
      %p235 = scmp.eq.s32.totalorder %s40, 1
      %p236 = por %p234, %p235
      %p238 = scmp.ne.s32.totalorder %s223, %s237
      %p239 = scmp.eq.s32.totalorder %s40, 0
      %p240 = por %p238, %p239
      %s242 = sadd.s32 %s241, 1
      %p245 = scmp.eq.s32.totalorder %s34, 1
      %p246 = scmp.ne.s32.totalorder %s241, %s243
      %p247 = scmp.eq.s32.totalorder %s34, 0
      %p248 = por %p246, %p247
      %p249 = scmp.ne.s32.totalorder %s241, %s243
      %p250 = scmp.eq.s32.totalorder %s39, 1
      %p251 = por %p249, %p250
      %p252 = scmp.ne.s32.totalorder %s243, %s244
      %p253 = scmp.eq.s32.totalorder %s39, 0
      %p254 = por %p252, %p253
      %p255 = scmp.ne.s32.totalorder %s243, %s244
      %p256 = scmp.eq.s32.totalorder %s40, 1
      %p257 = por %p255, %p256
      %p259 = scmp.ne.s32.totalorder %s244, %s258
      %p260 = scmp.eq.s32.totalorder %s40, 0
      %p261 = por %p259, %p260
      %s263 = sadd.s32 %s262, 1
      %p266 = scmp.eq.s32.totalorder %s34, 1
      %p267 = scmp.ne.s32.totalorder %s262, %s264
      %p268 = scmp.eq.s32.totalorder %s34, 0
      %p269 = por %p267, %p268
      %p270 = scmp.ne.s32.totalorder %s262, %s264
      %p271 = scmp.eq.s32.totalorder %s39, 1
      %p272 = por %p270, %p271
      %p273 = scmp.ne.s32.totalorder %s264, %s265
      %p274 = scmp.eq.s32.totalorder %s39, 0
      %p275 = por %p273, %p274
      %p276 = scmp.ne.s32.totalorder %s264, %s265
      %p277 = scmp.eq.s32.totalorder %s40, 1
      %p278 = por %p276, %p277
      %p280 = scmp.ne.s32.totalorder %s265, %s279
      %p281 = scmp.eq.s32.totalorder %s40, 0
      %p282 = por %p280, %p281
      %s284 = sadd.s32 %s283, 1
      %p287 = scmp.eq.s32.totalorder %s34, 1
      %p288 = scmp.ne.s32.totalorder %s283, %s285
      %p289 = scmp.eq.s32.totalorder %s34, 0
      %p290 = por %p288, %p289
      %p291 = scmp.ne.s32.totalorder %s283, %s285
      %p292 = scmp.eq.s32.totalorder %s39, 1
      %p293 = por %p291, %p292
      %p294 = scmp.ne.s32.totalorder %s285, %s286
      %p295 = scmp.eq.s32.totalorder %s39, 0
      %p296 = por %p294, %p295
      %p297 = scmp.ne.s32.totalorder %s285, %s286
      %p298 = scmp.eq.s32.totalorder %s40, 1
      %p299 = por %p297, %p298
      %p301 = scmp.ne.s32.totalorder %s286, %s300
      %p302 = scmp.eq.s32.totalorder %s40, 0
      %p303 = por %p301, %p302
      %s305 = sadd.s32 %s304, 1
      %p308 = scmp.eq.s32.totalorder %s34, 1
      %p309 = scmp.ne.s32.totalorder %s304, %s306
      %p310 = scmp.eq.s32.totalorder %s34, 0
      %p311 = por %p309, %p310
      %p312 = scmp.ne.s32.totalorder %s304, %s306
      %p313 = scmp.eq.s32.totalorder %s39, 1
      %p314 = por %p312, %p313
      %p315 = scmp.ne.s32.totalorder %s306, %s307
      %p316 = scmp.eq.s32.totalorder %s39, 0
      %p317 = por %p315, %p316
      %p318 = scmp.ne.s32.totalorder %s306, %s307
      %p319 = scmp.eq.s32.totalorder %s40, 1
      %p320 = por %p318, %p319
      %p322 = scmp.ne.s32.totalorder %s307, %s321
      %p323 = scmp.eq.s32.totalorder %s40, 0
      %p324 = por %p322, %p323
      %s326 = sadd.s32 %s325, 1
      %p329 = scmp.eq.s32.totalorder %s34, 1
      %p330 = scmp.ne.s32.totalorder %s325, %s327
      %p331 = scmp.eq.s32.totalorder %s34, 0
      %p332 = por %p330, %p331
      %p333 = scmp.ne.s32.totalorder %s325, %s327
      %p334 = scmp.eq.s32.totalorder %s39, 1
      %p335 = por %p333, %p334
      %p336 = scmp.ne.s32.totalorder %s327, %s328
      %p337 = scmp.eq.s32.totalorder %s39, 0
      %p338 = por %p336, %p337
      %p339 = scmp.ne.s32.totalorder %s327, %s328
      %p340 = scmp.eq.s32.totalorder %s40, 1
      %p341 = por %p339, %p340
      %p343 = scmp.ne.s32.totalorder %s328, %s342
      %p344 = scmp.eq.s32.totalorder %s40, 0
      %p345 = por %p343, %p344
      %s347 = sadd.s32 %s346, 1
      %p350 = scmp.eq.s32.totalorder %s34, 1
      %p351 = scmp.ne.s32.totalorder %s346, %s348
      %p352 = scmp.eq.s32.totalorder %s34, 0
      %p353 = por %p351, %p352
      %p354 = scmp.ne.s32.totalorder %s346, %s348
      %p355 = scmp.eq.s32.totalorder %s39, 1
      %p356 = por %p354, %p355
      %p357 = scmp.ne.s32.totalorder %s348, %s349
      %p358 = scmp.eq.s32.totalorder %s39, 0
      %p359 = por %p357, %p358
      %p360 = scmp.ne.s32.totalorder %s348, %s349
      %p361 = scmp.eq.s32.totalorder %s40, 1
      %p362 = por %p360, %p361
      %p364 = scmp.ne.s32.totalorder %s349, %s363
      %p365 = scmp.eq.s32.totalorder %s40, 0
      %p366 = por %p364, %p365
      %s368 = sadd.s32 %s367, 1
      %p371 = scmp.eq.s32.totalorder %s34, 1
      %p372 = scmp.ne.s32.totalorder %s367, %s369
      %p373 = scmp.eq.s32.totalorder %s34, 0
      %p374 = por %p372, %p373
      %p375 = scmp.ne.s32.totalorder %s367, %s369
      %p376 = scmp.eq.s32.totalorder %s39, 1
      %p377 = por %p375, %p376
      %p378 = scmp.ne.s32.totalorder %s369, %s370
      %p379 = scmp.eq.s32.totalorder %s39, 0
      %p380 = por %p378, %p379
      %p381 = scmp.ne.s32.totalorder %s369, %s370
      %p382 = scmp.eq.s32.totalorder %s40, 1
      %p383 = por %p381, %p382
      %p385 = scmp.ne.s32.totalorder %s370, %s384
      %p386 = scmp.eq.s32.totalorder %s40, 0
      %p387 = por %p385, %p386
      %s389 = sadd.s32 %s388, 1
      %p392 = scmp.eq.s32.totalorder %s34, 1
      %p393 = scmp.ne.s32.totalorder %s388, %s390
      %p394 = scmp.eq.s32.totalorder %s34, 0
      %p395 = por %p393, %p394
      %p396 = scmp.ne.s32.totalorder %s388, %s390
      %p397 = scmp.eq.s32.totalorder %s39, 1
      %p398 = por %p396, %p397
      %p399 = scmp.ne.s32.totalorder %s390, %s391
      %p400 = scmp.eq.s32.totalorder %s39, 0
      %p401 = por %p399, %p400
      %p402 = scmp.ne.s32.totalorder %s390, %s391
      %p403 = scmp.eq.s32.totalorder %s40, 1
      %p404 = por %p402, %p403
      %p406 = scmp.ne.s32.totalorder %s391, %s405
      %p407 = scmp.eq.s32.totalorder %s40, 0
      %p408 = por %p406, %p407
      %s410 = sadd.s32 %s409, 1
      %p413 = scmp.eq.s32.totalorder %s34, 1
      %p414 = scmp.ne.s32.totalorder %s409, %s411
      %p415 = scmp.eq.s32.totalorder %s34, 0
      %p416 = por %p414, %p415
      %p417 = scmp.ne.s32.totalorder %s409, %s411
      %p418 = scmp.eq.s32.totalorder %s39, 1
      %p419 = por %p417, %p418
      %p420 = scmp.ne.s32.totalorder %s411, %s412
      %p421 = scmp.eq.s32.totalorder %s39, 0
      %p422 = por %p420, %p421
      %p423 = scmp.ne.s32.totalorder %s411, %s412
      %p424 = scmp.eq.s32.totalorder %s40, 1
      %p425 = por %p423, %p424
      %p427 = scmp.ne.s32.totalorder %s412, %s426
      %p428 = scmp.eq.s32.totalorder %s40, 0
      %p429 = por %p427, %p428
      %s430 = ssub.s32 %s34, %s41
      %p431 = scmp.eq.s32.totalorder %s430, 0
      %s433 = sadd.s32 %s432, 1
      %s434 = scalar_select %p431, %s432, %s433
      %p437 = pneg %p431
      %p438 = scmp.eq.s32.totalorder %s34, 1
      %p439 = por %p437, %p438
      %p440 = scmp.ne.s32.totalorder %s432, %s435
      %p441 = scmp.eq.s32.totalorder %s34, 0
      %p442 = por %p440, %p441
      %p443 = scmp.ne.s32.totalorder %s432, %s435
      %p444 = scmp.eq.s32.totalorder %s39, 1
      %p445 = por %p443, %p444
      %p446 = scmp.ne.s32.totalorder %s435, %s436
      %p447 = scmp.eq.s32.totalorder %s39, 0
      %p448 = por %p446, %p447
      %p449 = scmp.ne.s32.totalorder %s435, %s436
      %p450 = scmp.eq.s32.totalorder %s40, 1
      %p451 = por %p449, %p450
      %p453 = scmp.ne.s32.totalorder %s436, %s452
      %p454 = scmp.eq.s32.totalorder %s40, 0
      %p455 = por %p453, %p454
      %p456 = scmp.le.s32.totalorder 1, %s34
      %p457 = scmp.lt.s32.totalorder %s34, 3
      %p458 = pnand %p456, %p457
      %p459 = pneg %p458
      // Predicated region
      $region9: #{custom_bert_forward.1} parent=5 // pred_check
        _
      $region10: #{custom_bert_forward.1} parent=5 // pred_check_branch
        %461 = sbr.rel (%p458) target = $region12
      $region11: #{custom_bert_forward.1} parent=5 // pred_region
        %s462 = ssub.s32 %s34, 1
        // Predicated region
        $region13: #{custom_bert_forward.1} parent=11 // pred_check
          %p463 = pneg %p107
        $region14: #{custom_bert_forward.1} parent=11 // pred_check_branch
          %465 = sbr.rel (%p463) target = $region16
        $region15: #{custom_bert_forward.1} parent=11 // pred_region
          _
        $region16: #{custom_bert_forward.1} parent=11 // pred_fallthru
          _
        // Predicated region
        $region17: #{custom_bert_forward.1} parent=11 // pred_check
          %p466 = pneg %p128
        $region18: #{custom_bert_forward.1} parent=11 // pred_check_branch
          %468 = sbr.rel (%p466) target = $region20
        $region19: #{custom_bert_forward.1} parent=11 // pred_region
          %s470 = ssub.s32 16, 16
          %471 = vsyncadd [#allocation3], %s470
          %s473 = sshll.u32 [#allocation2], 4
          %s474 = int_to_ptr.vmem [resolvable:$true] %s473
          %476 = dma.hbm_to_vmem [thread:$0]  %s3, 16, %s474, [#allocation3]
        $region20: #{custom_bert_forward.1} parent=11 // pred_fallthru
          _
        // Predicated region
        $region21: #{custom_bert_forward.1} parent=11 // pred_check
          %p477 = pneg %p149
        $region22: #{custom_bert_forward.1} parent=11 // pred_check_branch
          %479 = sbr.rel (%p477) target = $region24
        $region23: #{custom_bert_forward.1} parent=11 // pred_region
          _
        $region24: #{custom_bert_forward.1} parent=11 // pred_fallthru
          _
        // Predicated region
        $region25: #{custom_bert_forward.1} parent=11 // pred_check
          %p480 = pneg %p170
        $region26: #{custom_bert_forward.1} parent=11 // pred_check_branch
          %482 = sbr.rel (%p480) target = $region28
        $region27: #{custom_bert_forward.1} parent=11 // pred_region
          %s484 = ssub.s32 48, 48
          %485 = vsyncadd [#allocation6], %s484
          %s487 = sshll.u32 [#allocation5], 4
          %s488 = int_to_ptr.vmem [resolvable:$true] %s487
          %490 = dma.hbm_to_vmem [thread:$0]  %s5, 48, %s488, [#allocation6]
        $region28: #{custom_bert_forward.1} parent=11 // pred_fallthru
          _
        // Predicated region
        $region29: #{custom_bert_forward.1} parent=11 // pred_check
          %p491 = pneg %p191
        $region30: #{custom_bert_forward.1} parent=11 // pred_check_branch
          %493 = sbr.rel (%p491) target = $region32
        $region31: #{custom_bert_forward.1} parent=11 // pred_region
          %s495 = ssub.s32 1024, 1024
          %496 = vsyncadd [#allocation6], %s495
          %s497 = sshll.u32 [#allocation7], 4
          %s498 = int_to_ptr.vmem [resolvable:$true] %s497
          %503 = dma.hbm_to_vmem [thread:$0]  %s6, 1024, %s498, [#allocation6], 64, 64, 4
        $region32: #{custom_bert_forward.1} parent=11 // pred_fallthru
          _
        // Predicated region
        $region33: #{custom_bert_forward.1} parent=11 // pred_check
          %p504 = pneg %p212
        $region34: #{custom_bert_forward.1} parent=11 // pred_check_branch
          %506 = sbr.rel (%p504) target = $region36
        $region35: #{custom_bert_forward.1} parent=11 // pred_region
          %s508 = ssub.s32 16, 16
          %509 = vsyncadd [#allocation9], %s508
          %s511 = sshll.u32 [#allocation8], 4
          %s512 = int_to_ptr.vmem [resolvable:$true] %s511
          %514 = dma.hbm_to_vmem [thread:$0]  %s7, 16, %s512, [#allocation9]
        $region36: #{custom_bert_forward.1} parent=11 // pred_fallthru
          _
        // Predicated region
        $region37: #{custom_bert_forward.1} parent=11 // pred_check
          %p515 = pneg %p233
        $region38: #{custom_bert_forward.1} parent=11 // pred_check_branch
          %517 = sbr.rel (%p515) target = $region40
        $region39: #{custom_bert_forward.1} parent=11 // pred_region
          %s519 = ssub.s32 16, 16
          %520 = vsyncadd [#allocation9], %s519
          %s522 = sshll.u32 [#allocation10], 4
          %s523 = int_to_ptr.vmem [resolvable:$true] %s522
          %525 = dma.hbm_to_vmem [thread:$0]  %s8, 16, %s523, [#allocation9]
        $region40: #{custom_bert_forward.1} parent=11 // pred_fallthru
          _
        // Predicated region
        $region41: #{custom_bert_forward.1} parent=11 // pred_check
          %p526 = pneg %p254
        $region42: #{custom_bert_forward.1} parent=11 // pred_check_branch
          %528 = sbr.rel (%p526) target = $region44
        $region43: #{custom_bert_forward.1} parent=11 // pred_region
          %s530 = ssub.s32 16, 16
          %531 = vsyncadd [#allocation12], %s530
          %s533 = sshll.u32 [#allocation11], 4
          %s534 = int_to_ptr.vmem [resolvable:$true] %s533
          %536 = dma.hbm_to_vmem [thread:$0]  %s9, 16, %s534, [#allocation12]
        $region44: #{custom_bert_forward.1} parent=11 // pred_fallthru
          _
        // Predicated region
        $region45: #{custom_bert_forward.1} parent=11 // pred_check
          %p537 = pneg %p275
        $region46: #{custom_bert_forward.1} parent=11 // pred_check_branch
          %539 = sbr.rel (%p537) target = $region48
        $region47: #{custom_bert_forward.1} parent=11 // pred_region
          %s541 = ssub.s32 4096, 4096
          %542 = vsyncadd [#allocation12], %s541
          %s543 = sshll.u32 [#allocation13], 4
          %s544 = int_to_ptr.vmem [resolvable:$true] %s543
          %549 = dma.hbm_to_vmem [thread:$0]  %s10, 4096, %s544, [#allocation12], 256, 256, 16
        $region48: #{custom_bert_forward.1} parent=11 // pred_fallthru
          _
        // Predicated region
        $region49: #{custom_bert_forward.1} parent=11 // pred_check
          %p550 = pneg %p296
        $region50: #{custom_bert_forward.1} parent=11 // pred_check_branch
          %552 = sbr.rel (%p550) target = $region52
        $region51: #{custom_bert_forward.1} parent=11 // pred_region
          _
        $region52: #{custom_bert_forward.1} parent=11 // pred_fallthru
          _
        // Predicated region
        $region53: #{custom_bert_forward.1} parent=11 // pred_check
          %p553 = pneg %p317
        $region54: #{custom_bert_forward.1} parent=11 // pred_check_branch
          %555 = sbr.rel (%p553) target = $region56
        $region55: #{custom_bert_forward.1} parent=11 // pred_region
          %s557 = ssub.s32 4096, 4096
          %558 = vsyncadd [#allocation15], %s557
          %s559 = sshll.u32 [#allocation14], 4
          %s560 = int_to_ptr.vmem [resolvable:$true] %s559
          %565 = dma.hbm_to_vmem [thread:$0]  %s12, 4096, %s560, [#allocation15], 64, 64, 4
        $region56: #{custom_bert_forward.1} parent=11 // pred_fallthru
          _
        // Predicated region
        $region57: #{custom_bert_forward.1} parent=11 // pred_check
          %p566 = pneg %p338
        $region58: #{custom_bert_forward.1} parent=11 // pred_check_branch
          %568 = sbr.rel (%p566) target = $region60
        $region59: #{custom_bert_forward.1} parent=11 // pred_region
          %s570 = ssub.s32 16, 16
          %571 = vsyncadd [#allocation15], %s570
          %s573 = sshll.u32 [#allocation16], 4
          %s574 = int_to_ptr.vmem [resolvable:$true] %s573
          %576 = dma.hbm_to_vmem [thread:$0]  %s13, 16, %s574, [#allocation15]
        $region60: #{custom_bert_forward.1} parent=11 // pred_fallthru
          _
        // Predicated region
        $region61: #{custom_bert_forward.1} parent=11 // pred_check
          %p577 = pneg %p359
        $region62: #{custom_bert_forward.1} parent=11 // pred_check_branch
          %579 = sbr.rel (%p577) target = $region64
        $region63: #{custom_bert_forward.1} parent=11 // pred_region
          %s581 = ssub.s32 16, 16
          %582 = vsyncadd [#allocation18], %s581
          %s584 = sshll.u32 [#allocation17], 4
          %s585 = int_to_ptr.vmem [resolvable:$true] %s584
          %587 = dma.hbm_to_vmem [thread:$0]  %s14, 16, %s585, [#allocation18]
        $region64: #{custom_bert_forward.1} parent=11 // pred_fallthru
          _
        // Predicated region
        $region65: #{custom_bert_forward.1} parent=11 // pred_check
          %p588 = pneg %p380
        $region66: #{custom_bert_forward.1} parent=11 // pred_check_branch
          %590 = sbr.rel (%p588) target = $region68
        $region67: #{custom_bert_forward.1} parent=11 // pred_region
          %s592 = ssub.s32 16, 16
          %593 = vsyncadd [#allocation18], %s592
          %s595 = sshll.u32 [#allocation19], 4
          %s596 = int_to_ptr.vmem [resolvable:$true] %s595
          %598 = dma.hbm_to_vmem [thread:$0]  %s15, 16, %s596, [#allocation18]
        $region68: #{custom_bert_forward.1} parent=11 // pred_fallthru
          _
        // Predicated region
        $region69: #{custom_bert_forward.1} parent=11 // pred_check
          %p599 = pneg %p401
        $region70: #{custom_bert_forward.1} parent=11 // pred_check_branch
          %601 = sbr.rel (%p599) target = $region72
        $region71: #{custom_bert_forward.1} parent=11 // pred_region
          _
        $region72: #{custom_bert_forward.1} parent=11 // pred_fallthru
          _
        // Predicated region
        $region73: #{custom_bert_forward.1} parent=11 // pred_check
          %p602 = pneg %p422
        $region74: #{custom_bert_forward.1} parent=11 // pred_check_branch
          %604 = sbr.rel (%p602) target = $region76
        $region75: #{custom_bert_forward.1} parent=11 // pred_region
          %s606 = ssub.s32 16, 16
          %607 = vsyncadd [#allocation21], %s606
          %s609 = sshll.u32 [#allocation20], 4
          %s610 = int_to_ptr.vmem [resolvable:$true] %s609
          %612 = dma.hbm_to_vmem [thread:$0]  %s17, 16, %s610, [#allocation21]
        $region76: #{custom_bert_forward.1} parent=11 // pred_fallthru
          _
      $region12: #{custom_bert_forward.1} parent=5 // pred_fallthru
        _
      %p613 = scmp.lt.s32.totalorder %s34, 2
      // Predicated region
      $region77: #{custom_bert_forward.1} parent=5 // pred_check
        %p614 = pneg %p613
      $region78: #{custom_bert_forward.1} parent=5 // pred_check_branch
        %616 = sbr.rel (%p614) target = $region80
      $region79: #{custom_bert_forward.1} parent=5 // pred_region
        // Predicated region
        $region81: #{custom_bert_forward.1} parent=79 // pred_check
          %p617 = pneg %p54
        $region82: #{custom_bert_forward.1} parent=79 // pred_check_branch
          %619 = sbr.rel (%p617) target = $region84
        $region83: #{custom_bert_forward.1} parent=79 // pred_region
          %p620 = scmp.lt.s32.totalorder %s34, 1
          %s621 = scalar_select %p620, %s34, 1
          %s622 = smul.addr %s621, 8
          %s623 = scalar_lea.vmem %s0, %s622
        $region84: #{custom_bert_forward.1} parent=79 // pred_fallthru
          _
        // Predicated region
        $region85: #{custom_bert_forward.1} parent=79 // pred_check
          %p624 = pneg %p80
        $region86: #{custom_bert_forward.1} parent=79 // pred_check_branch
          %626 = sbr.rel (%p624) target = $region88
        $region87: #{custom_bert_forward.1} parent=79 // pred_region
          %p627 = scmp.lt.s32.totalorder %s34, 1
          %s628 = scalar_select %p627, %s34, 1
          %s629 = scalar_lea.vmem %s1, %s628
        $region88: #{custom_bert_forward.1} parent=79 // pred_fallthru
          _
      $region80: #{custom_bert_forward.1} parent=5 // pred_fallthru
        _
      %p630 = scmp.le.s32.totalorder 1, %s34
      %p631 = scmp.lt.s32.totalorder %s34, 3
      %p632 = pnand %p630, %p631
      %p633 = pneg %p632
      // Predicated region
      $region89: #{custom_bert_forward.1} parent=5 // pred_check
        _
      $region90: #{custom_bert_forward.1} parent=5 // pred_check_branch
        %635 = sbr.rel (%p632) target = $region92
      $region91: #{custom_bert_forward.1} parent=5 // pred_region
        %s636 = ssub.s32 %s34, 1
        // Predicated region
        $region93: #{custom_bert_forward.1} parent=91 // pred_check
          %p637 = pneg %p128
        $region94: #{custom_bert_forward.1} parent=91 // pred_check_branch
          %639 = sbr.rel (%p637) target = $region96
        $region95: #{custom_bert_forward.1} parent=91 // pred_region
          %640 = dma.done [#allocation3], 16
        $region96: #{custom_bert_forward.1} parent=91 // pred_fallthru
          _
        // Predicated region
        $region97: #{custom_bert_forward.1} parent=91 // pred_check
          %p641 = pneg %p170
        $region98: #{custom_bert_forward.1} parent=91 // pred_check_branch
          %643 = sbr.rel (%p641) target = $region100
        $region99: #{custom_bert_forward.1} parent=91 // pred_region
          %644 = dma.done [#allocation6], 48
        $region100: #{custom_bert_forward.1} parent=91 // pred_fallthru
          _
        // Predicated region
        $region101: #{custom_bert_forward.1} parent=91 // pred_check
          %p645 = pneg %p191
        $region102: #{custom_bert_forward.1} parent=91 // pred_check_branch
          %647 = sbr.rel (%p645) target = $region104
        $region103: #{custom_bert_forward.1} parent=91 // pred_region
          %648 = dma.done [#allocation6], 1024
        $region104: #{custom_bert_forward.1} parent=91 // pred_fallthru
          _
        // Predicated region
        $region105: #{custom_bert_forward.1} parent=91 // pred_check
          %p649 = pneg %p212
        $region106: #{custom_bert_forward.1} parent=91 // pred_check_branch
          %651 = sbr.rel (%p649) target = $region108
        $region107: #{custom_bert_forward.1} parent=91 // pred_region
          %652 = dma.done [#allocation9], 16
        $region108: #{custom_bert_forward.1} parent=91 // pred_fallthru
          _
        // Predicated region
        $region109: #{custom_bert_forward.1} parent=91 // pred_check
          %p653 = pneg %p233
        $region110: #{custom_bert_forward.1} parent=91 // pred_check_branch
          %655 = sbr.rel (%p653) target = $region112
        $region111: #{custom_bert_forward.1} parent=91 // pred_region
          %656 = dma.done [#allocation9], 16
        $region112: #{custom_bert_forward.1} parent=91 // pred_fallthru
          _
        // Predicated region
        $region113: #{custom_bert_forward.1} parent=91 // pred_check
          %p657 = pneg %p254
        $region114: #{custom_bert_forward.1} parent=91 // pred_check_branch
          %659 = sbr.rel (%p657) target = $region116
        $region115: #{custom_bert_forward.1} parent=91 // pred_region
          %660 = dma.done [#allocation12], 16
        $region116: #{custom_bert_forward.1} parent=91 // pred_fallthru
          _
        // Predicated region
        $region117: #{custom_bert_forward.1} parent=91 // pred_check
          %p661 = pneg %p275
        $region118: #{custom_bert_forward.1} parent=91 // pred_check_branch
          %663 = sbr.rel (%p661) target = $region120
        $region119: #{custom_bert_forward.1} parent=91 // pred_region
          %664 = dma.done [#allocation12], 4096
        $region120: #{custom_bert_forward.1} parent=91 // pred_fallthru
          _
        // Predicated region
        $region121: #{custom_bert_forward.1} parent=91 // pred_check
          %p665 = pneg %p317
        $region122: #{custom_bert_forward.1} parent=91 // pred_check_branch
          %667 = sbr.rel (%p665) target = $region124
        $region123: #{custom_bert_forward.1} parent=91 // pred_region
          %668 = dma.done [#allocation15], 4096
        $region124: #{custom_bert_forward.1} parent=91 // pred_fallthru
          _
        // Predicated region
        $region125: #{custom_bert_forward.1} parent=91 // pred_check
          %p669 = pneg %p338
        $region126: #{custom_bert_forward.1} parent=91 // pred_check_branch
          %671 = sbr.rel (%p669) target = $region128
        $region127: #{custom_bert_forward.1} parent=91 // pred_region
          %672 = dma.done [#allocation15], 16
        $region128: #{custom_bert_forward.1} parent=91 // pred_fallthru
          _
        // Predicated region
        $region129: #{custom_bert_forward.1} parent=91 // pred_check
          %p673 = pneg %p359
        $region130: #{custom_bert_forward.1} parent=91 // pred_check_branch
          %675 = sbr.rel (%p673) target = $region132
        $region131: #{custom_bert_forward.1} parent=91 // pred_region
          %676 = dma.done [#allocation18], 16
        $region132: #{custom_bert_forward.1} parent=91 // pred_fallthru
          _
        // Predicated region
        $region133: #{custom_bert_forward.1} parent=91 // pred_check
          %p677 = pneg %p380
        $region134: #{custom_bert_forward.1} parent=91 // pred_check_branch
          %679 = sbr.rel (%p677) target = $region136
        $region135: #{custom_bert_forward.1} parent=91 // pred_region
          %680 = dma.done [#allocation18], 16
        $region136: #{custom_bert_forward.1} parent=91 // pred_fallthru
          _
        // Predicated region
        $region137: #{custom_bert_forward.1} parent=91 // pred_check
          %p681 = pneg %p422
        $region138: #{custom_bert_forward.1} parent=91 // pred_check_branch
          %683 = sbr.rel (%p681) target = $region140
        $region139: #{custom_bert_forward.1} parent=91 // pred_region
          %684 = dma.done [#allocation21], 16
        $region140: #{custom_bert_forward.1} parent=91 // pred_fallthru
          _
        %p685 = scmp.lt.s32.totalorder %s39, 1
        %s686 = scalar_select %p685, %s39, 1
        %s687 = smul.addr %s686, 8
        %s688 = scalar_lea.vmem %s0, %s687
        %p689 = pneg %p60
        %p690 = pneg %p57
        %p691 = scmp.lt.s32.totalorder %s39, 1
        %s692 = scalar_select %p691, %s39, 1
        %s693 = scalar_lea.vmem %s1, %s692
        %p694 = pneg %p86
        %p695 = pneg %p83
        %p696 = pneg %p107
        %p697 = pneg %p104
        %p698 = pneg %p128
        %p699 = pneg %p125
        %p700 = pneg %p149
        %p701 = pneg %p146
        %p702 = pneg %p170
        %p703 = pneg %p167
        %p704 = pneg %p191
        %p705 = pneg %p188
        %p706 = pneg %p212
        %p707 = pneg %p209
        %p708 = pneg %p233
        %p709 = pneg %p230
        %p710 = pneg %p254
        %p711 = pneg %p251
        %p712 = pneg %p275
        %p713 = pneg %p272
        %p714 = pneg %p296
        %p715 = pneg %p293
        %p716 = pneg %p317
        %p717 = pneg %p314
        %p718 = pneg %p338
        %p719 = pneg %p335
        %p720 = pneg %p359
        %p721 = pneg %p356
        %p722 = pneg %p380
        %p723 = pneg %p377
        %p724 = pneg %p401
        %p725 = pneg %p398
        %p726 = pneg %p422
        %p727 = pneg %p419
        %p728 = pneg %p448
        %p729 = pneg %p445
        %s730 = sand.u32 %s435, 1
        %s731 = scalar_lea.sflag [#allocation4], %s730
        %s732 = sand.u32 %s435, 1
        %s733 = scalar_lea.vmem [#allocation22], %s732
        %p734 = scmp.lt.s32.totalorder %s39, 1
        %s735 = scalar_select %p734, %s39, 1
        %s736 = smul.addr %s735, 8
        %s737 = scalar_lea.vmem %s0, %s736
        %p738 = scmp.lt.s32.totalorder %s39, 1
        %s739 = scalar_select %p738, %s39, 1
        %s740 = scalar_lea.vmem %s1, %s739
        %v742 = vld [vmem:[%s740] sm:$0x1]
        %v743 = vsub.f32 1.0, %v742
        %v744 = vmul.f32 %v743, -1e+09
        %v746 = vlaneseq
        %v747 = vshrl.u32 %v746, 7
        %v748 = vsub.s32 0, %v747
        %v749 = vrot.slane %v744, %v748
        %v751 = vld [vmem:[%s737] sm:$0xff]
        %v752 = vld [vmem:[%s2] sm:$0x1]
        %v753 = vld [vmem:[#allocation2] sm:$0x1]
        %754 = vadd.xlane.f32.xlu0 %v751
        %v755 = vpop.xlane.xlu0 %754
        %v756 = vrcp.pop 128.0
        %v757 = vmul.f32 %v755, %v756
        %v758 = vsub.f32 %v751, %v757
        %v759 = vmul.f32 %v758, %v758
        %760 = vadd.xlane.f32.xlu0 %v759
        %v761 = vpop.xlane.xlu0 %760
        %v762 = vmul.f32 %v761, %v756
        %v763 = vadd.f32 %v762, 1e-12
        %v764 = vrsqrt.pop %v763
        %v765 = vmul.f32 %v758, %v764
        %v767 = vlaneseq
        %v768 = vshrl.u32 %v767, 7
        %v769 = vsub.s32 0, %v768
        %v770 = vrot.slane %v752, %v769
        %v772 = vmul.f32 %v765, %v770
        %v774 = vlaneseq
        %v775 = vshrl.u32 %v774, 7
        %v776 = vsub.s32 0, %v775
        %v777 = vrot.slane %v753, %v776
        %v779 = vadd.f32 %v772, %v777
        %v780 = vpack.c.bf16 %v779, %v779
        %v781 = vld [vmem:[%s4] sm:$0xff]
        %v782 = vld [vmem:[%s4 + $0x8] sm:$0xf]
        %v783 = vld [vmem:[%s4 + $0xc] sm:$0xff]
        %v784 = vld [vmem:[%s4 + $0x14] sm:$0xf]
        %v785 = vld [vmem:[%s4 + $0x18] sm:$0xff]
        %v786 = vld [vmem:[%s4 + $0x20] sm:$0xf]
        %v787 = vld [vmem:[%s4 + $0x24] sm:$0xff]
        %v788 = vld [vmem:[%s4 + $0x2c] sm:$0xf]
        %v789 = vld [vmem:[%s4 + $0x30] sm:$0xff]
        %v790 = vld [vmem:[%s4 + $0x38] sm:$0xf]
        %v791 = vld [vmem:[%s4 + $0x3c] sm:$0xff]
        %v792 = vld [vmem:[%s4 + $0x44] sm:$0xf]
        %v793 = vld [vmem:[%s4 + $0x48] sm:$0xff]
        %v794 = vld [vmem:[%s4 + $0x50] sm:$0xf]
        %v795 = vld [vmem:[%s4 + $0x54] sm:$0xff]
        %v796 = vld [vmem:[%s4 + $0x5c] sm:$0xf]
        %v797 = vld [vmem:[%s4 + $0x60] sm:$0xff]
        %v798 = vld [vmem:[%s4 + $0x68] sm:$0xf]
        %v799 = vld [vmem:[%s4 + $0x6c] sm:$0xff]
        %v800 = vld [vmem:[%s4 + $0x74] sm:$0xf]
        %v801 = vld [vmem:[%s4 + $0x78] sm:$0xff]
        %v802 = vld [vmem:[%s4 + $0x80] sm:$0xf]
        %v803 = vld [vmem:[%s4 + $0x84] sm:$0xff]
        %v804 = vld [vmem:[%s4 + $0x8c] sm:$0xf]
        %v805 = vld [vmem:[%s4 + $0x90] sm:$0xff]
        %v806 = vld [vmem:[%s4 + $0x98] sm:$0xf]
        %v807 = vld [vmem:[%s4 + $0x9c] sm:$0xff]
        %v808 = vld [vmem:[%s4 + $0xa4] sm:$0xf]
        %v809 = vld [vmem:[%s4 + $0xa8] sm:$0xff]
        %v810 = vld [vmem:[%s4 + $0xb0] sm:$0xf]
        %v811 = vld [vmem:[%s4 + $0xb4] sm:$0xff]
        %v812 = vld [vmem:[%s4 + $0xbc] sm:$0xf]
        %v813 = vld [vmem:[#allocation5] sm:$0x7]
        %v815 = vlaneseq
        %v816 = vshrl.u32 %v815, 7
        %v817 = vsub.s32 0, %v816
        %v818 = vrot.slane %v813, %v817
        %v819 = vlaneseq
        %v820 = vshrl.u32 %v819, 7
        %v821 = vsub.s32 1, %v820
        %v822 = vrot.slane %v813, %v821
        %v823 = vlaneseq
        %v824 = vshrl.u32 %v823, 7
        %v825 = vsub.s32 2, %v824
        %v826 = vrot.slane %v813, %v825
        %v862 = vunpack.c.l.b16 %v781
        %v863 = vunpack.c.h.b16 %v781
        %v864 = vunpack.c.l.b16 %v782
        %v865 = vunpack.c.l.b16 %v783
        %v866 = vunpack.c.h.b16 %v783
        %v867 = vunpack.c.l.b16 %v784
        %v868 = vunpack.c.l.b16 %v785
        %v869 = vunpack.c.h.b16 %v785
        %v870 = vunpack.c.l.b16 %v786
        %v871 = vunpack.c.l.b16 %v787
        %v872 = vunpack.c.h.b16 %v787
        %v873 = vunpack.c.l.b16 %v788
        %v874 = vunpack.c.l.b16 %v789
        %v875 = vunpack.c.h.b16 %v789
        %v876 = vunpack.c.l.b16 %v790
        %v877 = vunpack.c.l.b16 %v791
        %v878 = vunpack.c.h.b16 %v791
        %v879 = vunpack.c.l.b16 %v792
        %v880 = vunpack.c.l.b16 %v793
        %v881 = vunpack.c.h.b16 %v793
        %v882 = vunpack.c.l.b16 %v794
        %v883 = vunpack.c.l.b16 %v795
        %v884 = vunpack.c.h.b16 %v795
        %v885 = vunpack.c.l.b16 %v796
        %v886 = vunpack.c.l.b16 %v797
        %v887 = vunpack.c.h.b16 %v797
        %v888 = vunpack.c.l.b16 %v798
        %v889 = vunpack.c.l.b16 %v799
        %v890 = vunpack.c.h.b16 %v799
        %v891 = vunpack.c.l.b16 %v800
        %v892 = vunpack.c.l.b16 %v801
        %v893 = vunpack.c.h.b16 %v801
        %v894 = vunpack.c.l.b16 %v802
        %v895 = vunpack.c.l.b16 %v803
        %v896 = vunpack.c.h.b16 %v803
        %v897 = vunpack.c.l.b16 %v804
        %v898 = vunpack.c.l.b16 %v805
        %v899 = vunpack.c.h.b16 %v805
        %v900 = vunpack.c.l.b16 %v806
        %v901 = vunpack.c.l.b16 %v807
        %v902 = vunpack.c.h.b16 %v807
        %v903 = vunpack.c.l.b16 %v808
        %v904 = vunpack.c.l.b16 %v809
        %v905 = vunpack.c.h.b16 %v809
        %v906 = vunpack.c.l.b16 %v810
        %v907 = vunpack.c.l.b16 %v811
        %v908 = vunpack.c.h.b16 %v811
        %v909 = vunpack.c.l.b16 %v812
        %v910 = vpack.c.b16 %v865, %v862
        %v911 = vpack.c.b16 %v866, %v863
        %v912 = vpack.c.b16 %v867, %v864
        %v913 = vpack.c.b16 %v871, %v868
        %v914 = vpack.c.b16 %v872, %v869
        %v915 = vpack.c.b16 %v873, %v870
        %v916 = vpack.c.b16 %v877, %v874
        %v917 = vpack.c.b16 %v878, %v875
        %v918 = vpack.c.b16 %v879, %v876
        %v919 = vpack.c.b16 %v883, %v880
        %v920 = vpack.c.b16 %v884, %v881
        %v921 = vpack.c.b16 %v885, %v882
        %v922 = vpack.c.b16 %v889, %v886
        %v923 = vpack.c.b16 %v890, %v887
        %v924 = vpack.c.b16 %v891, %v888
        %v925 = vpack.c.b16 %v895, %v892
        %v926 = vpack.c.b16 %v896, %v893
        %v927 = vpack.c.b16 %v897, %v894
        %v928 = vpack.c.b16 %v901, %v898
        %v929 = vpack.c.b16 %v902, %v899
        %v930 = vpack.c.b16 %v903, %v900
        %v931 = vpack.c.b16 %v907, %v904
        %v932 = vpack.c.b16 %v908, %v905
        %v933 = vpack.c.b16 %v909, %v906
        %958 = vmatprep.subr.bf16.mxu0 %v911
        %959 = vmatpush1.bf16.msra.mxu0 %v910
        %960 = vmatprep.subr.bf16.mxu0 %v914
        %961 = vmatpush1.bf16.msra.mxu0 %v913
        %962 = vmatprep.subr.bf16.mxu0 %v917
        %963 = vmatpush1.bf16.msra.mxu0 %v916
        %964 = vmatprep.subr.bf16.mxu0 %v920
        %965 = vmatpush1.bf16.msra.mxu0 %v919
        %966 = vmatprep.subr.bf16.mxu0 %v923
        %967 = vmatpush1.bf16.msra.mxu0 %v922
        %968 = vmatprep.subr.bf16.mxu0 %v926
        %969 = vmatpush1.bf16.msra.mxu0 %v925
        %970 = vmatprep.subr.bf16.mxu0 %v929
        %971 = vmatpush1.bf16.msra.mxu0 %v928
        %972 = vmatprep.subr.bf16.mxu0 %v932
        %973 = vmatpush1.bf16.msra.mxu0 %v931
        %974 = vmatprep.subr.bf16.mxu0 0
        %975 = vmatpush1.bf16.msra.mxu0 0
        %976 = vmatprep.subr.bf16.mxu0 0
        %977 = vmatpush1.bf16.msra.mxu0 0
        %978 = vmatprep.subr.bf16.mxu0 0
        %979 = vmatpush1.bf16.msra.mxu0 0
        %980 = vmatprep.subr.bf16.mxu0 0
        %981 = vmatpush1.bf16.msra.mxu0 0
        %982 = vmatprep.subr.bf16.mxu0 0
        %983 = vmatpush1.bf16.msra.mxu0 0
        %984 = vmatprep.subr.bf16.mxu0 0
        %985 = vmatpush1.bf16.msra.mxu0 0
        %986 = vmatprep.subr.bf16.mxu0 0
        %987 = vmatpush1.bf16.msra.mxu0 0
        %988 = vmatprep.subr.bf16.mxu0 0
        %989 = vmatpush1.bf16.msra.mxu0 0
        %990 = vmatprep.mubr.bf16.mxu0 0
        %991 = vmatmul.mubr.bf16.gmra.mrb[0].mxu0 %v780
        %v992 = vpop.f32.mrb[0].mxu0
        %v993 = vadd.f32 %v818, %v992
        %v994 = vpop.f32.mrb[0].mxu0
        %v995 = vadd.f32 %v822, %v994
        %v996 = vpop.f32.mrb[0].mxu0
        %v997 = vpop.f32.mrb[0].mxu0
        %998 = vdwg.mxu0
        %999 = vmatprep.subr.bf16.mxu0 0
        %1000 = vmatpush1.bf16.msra.mxu0 %v912
        %1001 = vmatprep.subr.bf16.mxu0 0
        %1002 = vmatpush1.bf16.msra.mxu0 %v915
        %1003 = vmatprep.subr.bf16.mxu0 0
        %1004 = vmatpush1.bf16.msra.mxu0 %v918
        %1005 = vmatprep.subr.bf16.mxu0 0
        %1006 = vmatpush1.bf16.msra.mxu0 %v921
        %1007 = vmatprep.subr.bf16.mxu0 0
        %1008 = vmatpush1.bf16.msra.mxu0 %v924
        %1009 = vmatprep.subr.bf16.mxu0 0
        %1010 = vmatpush1.bf16.msra.mxu0 %v927
        %1011 = vmatprep.subr.bf16.mxu0 0
        %1012 = vmatpush1.bf16.msra.mxu0 %v930
        %1013 = vmatprep.subr.bf16.mxu0 0
        %1014 = vmatpush1.bf16.msra.mxu0 %v933
        %1015 = vmatprep.subr.bf16.mxu0 0
        %1016 = vmatpush1.bf16.msra.mxu0 0
        %1017 = vmatprep.subr.bf16.mxu0 0
        %1018 = vmatpush1.bf16.msra.mxu0 0
        %1019 = vmatprep.subr.bf16.mxu0 0
        %1020 = vmatpush1.bf16.msra.mxu0 0
        %1021 = vmatprep.subr.bf16.mxu0 0
        %1022 = vmatpush1.bf16.msra.mxu0 0
        %1023 = vmatprep.subr.bf16.mxu0 0
        %1024 = vmatpush1.bf16.msra.mxu0 0
        %1025 = vmatprep.subr.bf16.mxu0 0
        %1026 = vmatpush1.bf16.msra.mxu0 0
        %1027 = vmatprep.subr.bf16.mxu0 0
        %1028 = vmatpush1.bf16.msra.mxu0 0
        %1029 = vmatprep.subr.bf16.mxu0 0
        %1030 = vmatpush1.bf16.msra.mxu0 0
        %1031 = vmatprep.mubr.bf16.mxu0 0
        %1032 = vmatmul.mubr.bf16.gmra.mrb[0].mxu0 %v780
        %v1033 = vpop.f32.mrb[0].mxu0
        %v1034 = vadd.f32 %v826, %v1033
        %v1035 = vpop.f32.mrb[0].mxu0
        %v1036 = vpop.f32.mrb[0].mxu0
        %v1037 = vpop.f32.mrb[0].mxu0
        %1038 = vdwg.mxu0
        %v1039 = vpack.c.bf16 %v993, %v993
        %v1040 = vpack.c.bf16 %v995, %v995
        %v1041 = vpack.c.bf16 %v1034, %v1034
        %vm1042 = vcmask 261120
        %v1044 = vsel %vm1042, %v1039, 0
        %v1047 = vsel %vm1042, %v1040, 0
        %1049 = vmatprep.subr.bf16.mxu0 0
        %1050 = vmatpush1.bf16.xpose.msra.mxu0 %v1047
        %1051 = vmatprep.subr.bf16.mxu0 0
        %1052 = vmatpush1.bf16.xpose.msra.mxu0 0
        %1053 = vmatprep.subr.bf16.mxu0 0
        %1054 = vmatpush1.bf16.xpose.msra.mxu0 0
        %1055 = vmatprep.subr.bf16.mxu0 0
        %1056 = vmatpush1.bf16.xpose.msra.mxu0 0
        %1057 = vmatprep.subr.bf16.mxu0 0
        %1058 = vmatpush1.bf16.xpose.msra.mxu0 0
        %1059 = vmatprep.subr.bf16.mxu0 0
        %1060 = vmatpush1.bf16.xpose.msra.mxu0 0
        %1061 = vmatprep.subr.bf16.mxu0 0
        %1062 = vmatpush1.bf16.xpose.msra.mxu0 0
        %1063 = vmatprep.subr.bf16.mxu0 0
        %1064 = vmatpush1.bf16.xpose.msra.mxu0 0
        %1065 = vmatprep.subr.bf16.mxu0 0
        %1066 = vmatpush1.bf16.xpose.msra.mxu0 0
        %1067 = vmatprep.subr.bf16.mxu0 0
        %1068 = vmatpush1.bf16.xpose.msra.mxu0 0
        %1069 = vmatprep.subr.bf16.mxu0 0
        %1070 = vmatpush1.bf16.xpose.msra.mxu0 0
        %1071 = vmatprep.subr.bf16.mxu0 0
        %1072 = vmatpush1.bf16.xpose.msra.mxu0 0
        %1073 = vmatprep.subr.bf16.mxu0 0
        %1074 = vmatpush1.bf16.xpose.msra.mxu0 0
        %1075 = vmatprep.subr.bf16.mxu0 0
        %1076 = vmatpush1.bf16.xpose.msra.mxu0 0
        %1077 = vmatprep.subr.bf16.mxu0 0
        %1078 = vmatpush1.bf16.xpose.msra.mxu0 0
        %1079 = vmatprep.subr.bf16.mxu0 0
        %1080 = vmatpush1.bf16.xpose.msra.mxu0 0
        %1081 = vmatprep.mubr.bf16.mxu0 0
        %1082 = vmatmul.mubr.bf16.gmra.mrb[0].mxu0 %v1044
        %v1083 = vpop.f32.mrb[0].mxu0
        %v1084 = vadd.f32 0.0, %v1083
        %v1085 = vpop.f32.mrb[0].mxu0
        %v1086 = vpop.f32.mrb[0].mxu0
        %v1087 = vpop.f32.mrb[0].mxu0
        %1088 = vdwg.mxu0
        %v1089 = vmul.f32 %v1084, 0.17677669
        %v1090 = vadd.f32 %v1089, %v749
        %vm1091 = vcmask 64512
        %v1092 = vsel %vm1091, %v1090, -inf
        %1093 = vmax.xlane.f32.xlu0 %v1092
        %v1094 = vpop.xlane.xlu0 %1093
        %v1095 = vsub.f32 %v1090, %v1094
        %v1096 = vmul.f32 %v1095, 1.442695
        %v1097 = vpow.pop %v1096
        %v1098 = vsel %vm1091, %v1097, 0.0
        %1099 = vadd.xlane.f32.xlu0 %v1098
        %v1100 = vpop.xlane.xlu0 %1099
        %v1101 = vrcp.pop %v1100
        %v1102 = vmul.f32 %v1097, %v1101
        %v1103 = vpack.c.bf16 %v1102, %v1102
        %v1105 = vsel %vm1091, %v1103, 0
        %vm1107 = vcmask 1043456
        %v1109 = vsel %vm1107, %v1041, 0
        %1111 = vmatprep.subr.bf16.mxu0 0
        %1112 = vmatpush1.bf16.msra.mxu0 %v1109
        %1113 = vmatprep.subr.bf16.mxu0 0
        %1114 = vmatpush1.bf16.msra.mxu0 0
        %1115 = vmatprep.subr.bf16.mxu0 0
        %1116 = vmatpush1.bf16.msra.mxu0 0
        %1117 = vmatprep.subr.bf16.mxu0 0
        %1118 = vmatpush1.bf16.msra.mxu0 0
        %1119 = vmatprep.subr.bf16.mxu0 0
        %1120 = vmatpush1.bf16.msra.mxu0 0
        %1121 = vmatprep.subr.bf16.mxu0 0
        %1122 = vmatpush1.bf16.msra.mxu0 0
        %1123 = vmatprep.subr.bf16.mxu0 0
        %1124 = vmatpush1.bf16.msra.mxu0 0
        %1125 = vmatprep.subr.bf16.mxu0 0
        %1126 = vmatpush1.bf16.msra.mxu0 0
        %1127 = vmatprep.subr.bf16.mxu0 0
        %1128 = vmatpush1.bf16.msra.mxu0 0
        %1129 = vmatprep.subr.bf16.mxu0 0
        %1130 = vmatpush1.bf16.msra.mxu0 0
        %1131 = vmatprep.subr.bf16.mxu0 0
        %1132 = vmatpush1.bf16.msra.mxu0 0
        %1133 = vmatprep.subr.bf16.mxu0 0
        %1134 = vmatpush1.bf16.msra.mxu0 0
        %1135 = vmatprep.subr.bf16.mxu0 0
        %1136 = vmatpush1.bf16.msra.mxu0 0
        %1137 = vmatprep.subr.bf16.mxu0 0
        %1138 = vmatpush1.bf16.msra.mxu0 0
        %1139 = vmatprep.subr.bf16.mxu0 0
        %1140 = vmatpush1.bf16.msra.mxu0 0
        %1141 = vmatprep.subr.bf16.mxu0 0
        %1142 = vmatpush1.bf16.msra.mxu0 0
        %1143 = vmatprep.mubr.bf16.mxu0 0
        %1144 = vmatmul.mubr.bf16.gmra.mrb[0].mxu0 %v1105
        %v1145 = vpop.f32.mrb[0].mxu0
        %v1146 = vadd.f32 0.0, %v1145
        %v1147 = vpop.f32.mrb[0].mxu0
        %v1148 = vpop.f32.mrb[0].mxu0
        %v1149 = vpop.f32.mrb[0].mxu0
        %1150 = vdwg.mxu0
        %1152 = vrot.lane.b32.xlu0 %v1039, 96
        %v1153 = vpop.permute.xlu0 %1152
        %1155 = vrot.lane.b32.xlu0 %v1040, 96
        %v1156 = vpop.permute.xlu0 %1155
        %v1158 = vsel %vm1042, %v1153, 0
        %v1161 = vsel %vm1042, %v1156, 0
        %1163 = vmatprep.subr.bf16.mxu0 0
        %1164 = vmatpush1.bf16.xpose.msra.mxu0 %v1161
        %1165 = vmatprep.subr.bf16.mxu0 0
        %1166 = vmatpush1.bf16.xpose.msra.mxu0 0
        %1167 = vmatprep.subr.bf16.mxu0 0
        %1168 = vmatpush1.bf16.xpose.msra.mxu0 0
        %1169 = vmatprep.subr.bf16.mxu0 0
        %1170 = vmatpush1.bf16.xpose.msra.mxu0 0
        %1171 = vmatprep.subr.bf16.mxu0 0
        %1172 = vmatpush1.bf16.xpose.msra.mxu0 0
        %1173 = vmatprep.subr.bf16.mxu0 0
        %1174 = vmatpush1.bf16.xpose.msra.mxu0 0
        %1175 = vmatprep.subr.bf16.mxu0 0
        %1176 = vmatpush1.bf16.xpose.msra.mxu0 0
        %1177 = vmatprep.subr.bf16.mxu0 0
        %1178 = vmatpush1.bf16.xpose.msra.mxu0 0
        %1179 = vmatprep.subr.bf16.mxu0 0
        %1180 = vmatpush1.bf16.xpose.msra.mxu0 0
        %1181 = vmatprep.subr.bf16.mxu0 0
        %1182 = vmatpush1.bf16.xpose.msra.mxu0 0
        %1183 = vmatprep.subr.bf16.mxu0 0
        %1184 = vmatpush1.bf16.xpose.msra.mxu0 0
        %1185 = vmatprep.subr.bf16.mxu0 0
        %1186 = vmatpush1.bf16.xpose.msra.mxu0 0
        %1187 = vmatprep.subr.bf16.mxu0 0
        %1188 = vmatpush1.bf16.xpose.msra.mxu0 0
        %1189 = vmatprep.subr.bf16.mxu0 0
        %1190 = vmatpush1.bf16.xpose.msra.mxu0 0
        %1191 = vmatprep.subr.bf16.mxu0 0
        %1192 = vmatpush1.bf16.xpose.msra.mxu0 0
        %1193 = vmatprep.subr.bf16.mxu0 0
        %1194 = vmatpush1.bf16.xpose.msra.mxu0 0
        %1195 = vmatprep.mubr.bf16.mxu0 0
        %1196 = vmatmul.mubr.bf16.gmra.mrb[0].mxu0 %v1158
        %v1197 = vpop.f32.mrb[0].mxu0
        %v1198 = vadd.f32 0.0, %v1197
        %v1199 = vpop.f32.mrb[0].mxu0
        %v1200 = vpop.f32.mrb[0].mxu0
        %v1201 = vpop.f32.mrb[0].mxu0
        %1202 = vdwg.mxu0
        %v1203 = vmul.f32 %v1198, 0.17677669
        %v1204 = vadd.f32 %v1203, %v749
        %v1205 = vsel %vm1091, %v1204, -inf
        %1206 = vmax.xlane.f32.xlu0 %v1205
        %v1207 = vpop.xlane.xlu0 %1206
        %v1208 = vsub.f32 %v1204, %v1207
        %v1209 = vmul.f32 %v1208, 1.442695
        %v1210 = vpow.pop %v1209
        %v1211 = vsel %vm1091, %v1210, 0.0
        %1212 = vadd.xlane.f32.xlu0 %v1211
        %v1213 = vpop.xlane.xlu0 %1212
        %v1214 = vrcp.pop %v1213
        %v1215 = vmul.f32 %v1210, %v1214
        %v1216 = vpack.c.bf16 %v1215, %v1215
        %1218 = vrot.lane.b32.xlu0 %v1041, 96
        %v1219 = vpop.permute.xlu0 %1218
        %v1221 = vsel %vm1091, %v1216, 0
        %v1224 = vsel %vm1107, %v1219, 0
        %1226 = vmatprep.subr.bf16.mxu0 0
        %1227 = vmatpush1.bf16.msra.mxu0 %v1224
        %1228 = vmatprep.subr.bf16.mxu0 0
        %1229 = vmatpush1.bf16.msra.mxu0 0
        %1230 = vmatprep.subr.bf16.mxu0 0
        %1231 = vmatpush1.bf16.msra.mxu0 0
        %1232 = vmatprep.subr.bf16.mxu0 0
        %1233 = vmatpush1.bf16.msra.mxu0 0
        %1234 = vmatprep.subr.bf16.mxu0 0
        %1235 = vmatpush1.bf16.msra.mxu0 0
        %1236 = vmatprep.subr.bf16.mxu0 0
        %1237 = vmatpush1.bf16.msra.mxu0 0
        %1238 = vmatprep.subr.bf16.mxu0 0
        %1239 = vmatpush1.bf16.msra.mxu0 0
        %1240 = vmatprep.subr.bf16.mxu0 0
        %1241 = vmatpush1.bf16.msra.mxu0 0
        %1242 = vmatprep.subr.bf16.mxu0 0
        %1243 = vmatpush1.bf16.msra.mxu0 0
        %1244 = vmatprep.subr.bf16.mxu0 0
        %1245 = vmatpush1.bf16.msra.mxu0 0
        %1246 = vmatprep.subr.bf16.mxu0 0
        %1247 = vmatpush1.bf16.msra.mxu0 0
        %1248 = vmatprep.subr.bf16.mxu0 0
        %1249 = vmatpush1.bf16.msra.mxu0 0
        %1250 = vmatprep.subr.bf16.mxu0 0
        %1251 = vmatpush1.bf16.msra.mxu0 0
        %1252 = vmatprep.subr.bf16.mxu0 0
        %1253 = vmatpush1.bf16.msra.mxu0 0
        %1254 = vmatprep.subr.bf16.mxu0 0
        %1255 = vmatpush1.bf16.msra.mxu0 0
        %1256 = vmatprep.subr.bf16.mxu0 0
        %1257 = vmatpush1.bf16.msra.mxu0 0
        %1258 = vmatprep.mubr.bf16.mxu0 0
        %1259 = vmatmul.mubr.bf16.gmra.mrb[0].mxu0 %v1221
        %v1260 = vpop.f32.mrb[0].mxu0
        %v1261 = vadd.f32 0.0, %v1260
        %v1262 = vpop.f32.mrb[0].mxu0
        %v1263 = vpop.f32.mrb[0].mxu0
        %v1264 = vpop.f32.mrb[0].mxu0
        %1265 = vdwg.mxu0
        %1266 = vrot.lane.b32.xlu0 %v1039, 64
        %v1267 = vpop.permute.xlu0 %1266
        %1268 = vrot.lane.b32.xlu0 %v1040, 64
        %v1269 = vpop.permute.xlu0 %1268
        %v1271 = vsel %vm1042, %v1267, 0
        %v1274 = vsel %vm1042, %v1269, 0
        %1276 = vmatprep.subr.bf16.mxu0 0
        %1277 = vmatpush1.bf16.xpose.msra.mxu0 %v1274
        %1278 = vmatprep.subr.bf16.mxu0 0
        %1279 = vmatpush1.bf16.xpose.msra.mxu0 0
        %1280 = vmatprep.subr.bf16.mxu0 0
        %1281 = vmatpush1.bf16.xpose.msra.mxu0 0
        %1282 = vmatprep.subr.bf16.mxu0 0
        %1283 = vmatpush1.bf16.xpose.msra.mxu0 0
        %1284 = vmatprep.subr.bf16.mxu0 0
        %1285 = vmatpush1.bf16.xpose.msra.mxu0 0
        %1286 = vmatprep.subr.bf16.mxu0 0
        %1287 = vmatpush1.bf16.xpose.msra.mxu0 0
        %1288 = vmatprep.subr.bf16.mxu0 0
        %1289 = vmatpush1.bf16.xpose.msra.mxu0 0
        %1290 = vmatprep.subr.bf16.mxu0 0
        %1291 = vmatpush1.bf16.xpose.msra.mxu0 0
        %1292 = vmatprep.subr.bf16.mxu0 0
        %1293 = vmatpush1.bf16.xpose.msra.mxu0 0
        %1294 = vmatprep.subr.bf16.mxu0 0
        %1295 = vmatpush1.bf16.xpose.msra.mxu0 0
        %1296 = vmatprep.subr.bf16.mxu0 0
        %1297 = vmatpush1.bf16.xpose.msra.mxu0 0
        %1298 = vmatprep.subr.bf16.mxu0 0
        %1299 = vmatpush1.bf16.xpose.msra.mxu0 0
        %1300 = vmatprep.subr.bf16.mxu0 0
        %1301 = vmatpush1.bf16.xpose.msra.mxu0 0
        %1302 = vmatprep.subr.bf16.mxu0 0
        %1303 = vmatpush1.bf16.xpose.msra.mxu0 0
        %1304 = vmatprep.subr.bf16.mxu0 0
        %1305 = vmatpush1.bf16.xpose.msra.mxu0 0
        %1306 = vmatprep.subr.bf16.mxu0 0
        %1307 = vmatpush1.bf16.xpose.msra.mxu0 0
        %1308 = vmatprep.mubr.bf16.mxu0 0
        %1309 = vmatmul.mubr.bf16.gmra.mrb[0].mxu0 %v1271
        %v1310 = vpop.f32.mrb[0].mxu0
        %v1311 = vadd.f32 0.0, %v1310
        %v1312 = vpop.f32.mrb[0].mxu0
        %v1313 = vpop.f32.mrb[0].mxu0
        %v1314 = vpop.f32.mrb[0].mxu0
        %1315 = vdwg.mxu0
        %v1316 = vmul.f32 %v1311, 0.17677669
        %v1317 = vadd.f32 %v1316, %v749
        %v1318 = vsel %vm1091, %v1317, -inf
        %1319 = vmax.xlane.f32.xlu0 %v1318
        %v1320 = vpop.xlane.xlu0 %1319
        %v1321 = vsub.f32 %v1317, %v1320
        %v1322 = vmul.f32 %v1321, 1.442695
        %v1323 = vpow.pop %v1322
        %v1324 = vsel %vm1091, %v1323, 0.0
        %1325 = vadd.xlane.f32.xlu0 %v1324
        %v1326 = vpop.xlane.xlu0 %1325
        %v1327 = vrcp.pop %v1326
        %v1328 = vmul.f32 %v1323, %v1327
        %v1329 = vpack.c.bf16 %v1328, %v1328
        %1330 = vrot.lane.b32.xlu0 %v1041, 64
        %v1331 = vpop.permute.xlu0 %1330
        %v1333 = vsel %vm1091, %v1329, 0
        %v1336 = vsel %vm1107, %v1331, 0
        %1338 = vmatprep.subr.bf16.mxu0 0
        %1339 = vmatpush1.bf16.msra.mxu0 %v1336
        %1340 = vmatprep.subr.bf16.mxu0 0
        %1341 = vmatpush1.bf16.msra.mxu0 0
        %1342 = vmatprep.subr.bf16.mxu0 0
        %1343 = vmatpush1.bf16.msra.mxu0 0
        %1344 = vmatprep.subr.bf16.mxu0 0
        %1345 = vmatpush1.bf16.msra.mxu0 0
        %1346 = vmatprep.subr.bf16.mxu0 0
        %1347 = vmatpush1.bf16.msra.mxu0 0
        %1348 = vmatprep.subr.bf16.mxu0 0
        %1349 = vmatpush1.bf16.msra.mxu0 0
        %1350 = vmatprep.subr.bf16.mxu0 0
        %1351 = vmatpush1.bf16.msra.mxu0 0
        %1352 = vmatprep.subr.bf16.mxu0 0
        %1353 = vmatpush1.bf16.msra.mxu0 0
        %1354 = vmatprep.subr.bf16.mxu0 0
        %1355 = vmatpush1.bf16.msra.mxu0 0
        %1356 = vmatprep.subr.bf16.mxu0 0
        %1357 = vmatpush1.bf16.msra.mxu0 0
        %1358 = vmatprep.subr.bf16.mxu0 0
        %1359 = vmatpush1.bf16.msra.mxu0 0
        %1360 = vmatprep.subr.bf16.mxu0 0
        %1361 = vmatpush1.bf16.msra.mxu0 0
        %1362 = vmatprep.subr.bf16.mxu0 0
        %1363 = vmatpush1.bf16.msra.mxu0 0
        %1364 = vmatprep.subr.bf16.mxu0 0
        %1365 = vmatpush1.bf16.msra.mxu0 0
        %1366 = vmatprep.subr.bf16.mxu0 0
        %1367 = vmatpush1.bf16.msra.mxu0 0
        %1368 = vmatprep.subr.bf16.mxu0 0
        %1369 = vmatpush1.bf16.msra.mxu0 0
        %1370 = vmatprep.mubr.bf16.mxu0 0
        %1371 = vmatmul.mubr.bf16.gmra.mrb[0].mxu0 %v1333
        %v1372 = vpop.f32.mrb[0].mxu0
        %v1373 = vadd.f32 0.0, %v1372
        %v1374 = vpop.f32.mrb[0].mxu0
        %v1375 = vpop.f32.mrb[0].mxu0
        %v1376 = vpop.f32.mrb[0].mxu0
        %1377 = vdwg.mxu0
        %1378 = vrot.lane.b32.xlu0 %v1039, 32
        %v1379 = vpop.permute.xlu0 %1378
        %1380 = vrot.lane.b32.xlu0 %v1040, 32
        %v1381 = vpop.permute.xlu0 %1380
        %v1383 = vsel %vm1042, %v1379, 0
        %v1386 = vsel %vm1042, %v1381, 0
        %1388 = vmatprep.subr.bf16.mxu0 0
        %1389 = vmatpush1.bf16.xpose.msra.mxu0 %v1386
        %1390 = vmatprep.subr.bf16.mxu0 0
        %1391 = vmatpush1.bf16.xpose.msra.mxu0 0
        %1392 = vmatprep.subr.bf16.mxu0 0
        %1393 = vmatpush1.bf16.xpose.msra.mxu0 0
        %1394 = vmatprep.subr.bf16.mxu0 0
        %1395 = vmatpush1.bf16.xpose.msra.mxu0 0
        %1396 = vmatprep.subr.bf16.mxu0 0
        %1397 = vmatpush1.bf16.xpose.msra.mxu0 0
        %1398 = vmatprep.subr.bf16.mxu0 0
        %1399 = vmatpush1.bf16.xpose.msra.mxu0 0
        %1400 = vmatprep.subr.bf16.mxu0 0
        %1401 = vmatpush1.bf16.xpose.msra.mxu0 0
        %1402 = vmatprep.subr.bf16.mxu0 0
        %1403 = vmatpush1.bf16.xpose.msra.mxu0 0
        %1404 = vmatprep.subr.bf16.mxu0 0
        %1405 = vmatpush1.bf16.xpose.msra.mxu0 0
        %1406 = vmatprep.subr.bf16.mxu0 0
        %1407 = vmatpush1.bf16.xpose.msra.mxu0 0
        %1408 = vmatprep.subr.bf16.mxu0 0
        %1409 = vmatpush1.bf16.xpose.msra.mxu0 0
        %1410 = vmatprep.subr.bf16.mxu0 0
        %1411 = vmatpush1.bf16.xpose.msra.mxu0 0
        %1412 = vmatprep.subr.bf16.mxu0 0
        %1413 = vmatpush1.bf16.xpose.msra.mxu0 0
        %1414 = vmatprep.subr.bf16.mxu0 0
        %1415 = vmatpush1.bf16.xpose.msra.mxu0 0
        %1416 = vmatprep.subr.bf16.mxu0 0
        %1417 = vmatpush1.bf16.xpose.msra.mxu0 0
        %1418 = vmatprep.subr.bf16.mxu0 0
        %1419 = vmatpush1.bf16.xpose.msra.mxu0 0
        %1420 = vmatprep.mubr.bf16.mxu0 0
        %1421 = vmatmul.mubr.bf16.gmra.mrb[0].mxu0 %v1383
        %v1422 = vpop.f32.mrb[0].mxu0
        %v1423 = vadd.f32 0.0, %v1422
        %v1424 = vpop.f32.mrb[0].mxu0
        %v1425 = vpop.f32.mrb[0].mxu0
        %v1426 = vpop.f32.mrb[0].mxu0
        %1427 = vdwg.mxu0
        %v1428 = vmul.f32 %v1423, 0.17677669
        %v1429 = vadd.f32 %v1428, %v749
        %v1430 = vsel %vm1091, %v1429, -inf
        %1431 = vmax.xlane.f32.xlu0 %v1430
        %v1432 = vpop.xlane.xlu0 %1431
        %v1433 = vsub.f32 %v1429, %v1432
        %v1434 = vmul.f32 %v1433, 1.442695
        %v1435 = vpow.pop %v1434
        %v1436 = vsel %vm1091, %v1435, 0.0
        %1437 = vadd.xlane.f32.xlu0 %v1436
        %v1438 = vpop.xlane.xlu0 %1437
        %v1439 = vrcp.pop %v1438
        %v1440 = vmul.f32 %v1435, %v1439
        %v1441 = vpack.c.bf16 %v1440, %v1440
        %1442 = vrot.lane.b32.xlu0 %v1041, 32
        %v1443 = vpop.permute.xlu0 %1442
        %v1445 = vsel %vm1091, %v1441, 0
        %v1448 = vsel %vm1107, %v1443, 0
        %1450 = vmatprep.subr.bf16.mxu0 0
        %1451 = vmatpush1.bf16.msra.mxu0 %v1448
        %1452 = vmatprep.subr.bf16.mxu0 0
        %1453 = vmatpush1.bf16.msra.mxu0 0
        %1454 = vmatprep.subr.bf16.mxu0 0
        %1455 = vmatpush1.bf16.msra.mxu0 0
        %1456 = vmatprep.subr.bf16.mxu0 0
        %1457 = vmatpush1.bf16.msra.mxu0 0
        %1458 = vmatprep.subr.bf16.mxu0 0
        %1459 = vmatpush1.bf16.msra.mxu0 0
        %1460 = vmatprep.subr.bf16.mxu0 0
        %1461 = vmatpush1.bf16.msra.mxu0 0
        %1462 = vmatprep.subr.bf16.mxu0 0
        %1463 = vmatpush1.bf16.msra.mxu0 0
        %1464 = vmatprep.subr.bf16.mxu0 0
        %1465 = vmatpush1.bf16.msra.mxu0 0
        %1466 = vmatprep.subr.bf16.mxu0 0
        %1467 = vmatpush1.bf16.msra.mxu0 0
        %1468 = vmatprep.subr.bf16.mxu0 0
        %1469 = vmatpush1.bf16.msra.mxu0 0
        %1470 = vmatprep.subr.bf16.mxu0 0
        %1471 = vmatpush1.bf16.msra.mxu0 0
        %1472 = vmatprep.subr.bf16.mxu0 0
        %1473 = vmatpush1.bf16.msra.mxu0 0
        %1474 = vmatprep.subr.bf16.mxu0 0
        %1475 = vmatpush1.bf16.msra.mxu0 0
        %1476 = vmatprep.subr.bf16.mxu0 0
        %1477 = vmatpush1.bf16.msra.mxu0 0
        %1478 = vmatprep.subr.bf16.mxu0 0
        %1479 = vmatpush1.bf16.msra.mxu0 0
        %1480 = vmatprep.subr.bf16.mxu0 0
        %1481 = vmatpush1.bf16.msra.mxu0 0
        %1482 = vmatprep.mubr.bf16.mxu0 0
        %1483 = vmatmul.mubr.bf16.gmra.mrb[0].mxu0 %v1445
        %v1484 = vpop.f32.mrb[0].mxu0
        %v1485 = vadd.f32 0.0, %v1484
        %v1486 = vpop.f32.mrb[0].mxu0
        %v1487 = vpop.f32.mrb[0].mxu0
        %v1488 = vpop.f32.mrb[0].mxu0
        %1489 = vdwg.mxu0
        %1491 = vrot.lane.b32.xlu0 %v1261, 32
        %v1492 = vpop.permute.xlu0 %1491
        %1495 = vrot.lane.b32.xlu0 %v1373, 64
        %v1496 = vpop.permute.xlu0 %1495
        %1499 = vrot.lane.b32.xlu0 %v1485, 96
        %v1500 = vpop.permute.xlu0 %1499
        %v1502 = vsel %vm1042, %v1146, %v1492
        %vm1503 = vcmask 523264
        %v1504 = vsel %vm1503, %v1502, %v1496
        %vm1505 = vcmask 785408
        %v1506 = vsel %vm1505, %v1504, %v1500
        %v1507 = vpack.c.bf16 %v1506, %v1506
        %v1508 = vld [vmem:[#allocation7] sm:$0xf]
        %v1509 = vld [vmem:[#allocation7 + $0x4] sm:$0xf]
        %v1510 = vld [vmem:[#allocation7 + $0x8] sm:$0xf]
        %v1511 = vld [vmem:[#allocation7 + $0xc] sm:$0xf]
        %v1512 = vld [vmem:[#allocation7 + $0x10] sm:$0xf]
        %v1513 = vld [vmem:[#allocation7 + $0x14] sm:$0xf]
        %v1514 = vld [vmem:[#allocation7 + $0x18] sm:$0xf]
        %v1515 = vld [vmem:[#allocation7 + $0x1c] sm:$0xf]
        %v1516 = vld [vmem:[#allocation7 + $0x20] sm:$0xf]
        %v1517 = vld [vmem:[#allocation7 + $0x24] sm:$0xf]
        %v1518 = vld [vmem:[#allocation7 + $0x28] sm:$0xf]
        %v1519 = vld [vmem:[#allocation7 + $0x2c] sm:$0xf]
        %v1520 = vld [vmem:[#allocation7 + $0x30] sm:$0xf]
        %v1521 = vld [vmem:[#allocation7 + $0x34] sm:$0xf]
        %v1522 = vld [vmem:[#allocation7 + $0x38] sm:$0xf]
        %v1523 = vld [vmem:[#allocation7 + $0x3c] sm:$0xf]
        %v1524 = vld [vmem:[#allocation8] sm:$0x1]
        %v1526 = vlaneseq
        %v1527 = vshrl.u32 %v1526, 7
        %v1528 = vsub.s32 0, %v1527
        %v1529 = vrot.slane %v1524, %v1528
        %v1547 = vunpack.c.l.b16 %v1508
        %v1548 = vunpack.c.l.b16 %v1509
        %v1549 = vunpack.c.l.b16 %v1510
        %v1550 = vunpack.c.l.b16 %v1511
        %v1551 = vunpack.c.l.b16 %v1512
        %v1552 = vunpack.c.l.b16 %v1513
        %v1553 = vunpack.c.l.b16 %v1514
        %v1554 = vunpack.c.l.b16 %v1515
        %v1555 = vunpack.c.l.b16 %v1516
        %v1556 = vunpack.c.l.b16 %v1517
        %v1557 = vunpack.c.l.b16 %v1518
        %v1558 = vunpack.c.l.b16 %v1519
        %v1559 = vunpack.c.l.b16 %v1520
        %v1560 = vunpack.c.l.b16 %v1521
        %v1561 = vunpack.c.l.b16 %v1522
        %v1562 = vunpack.c.l.b16 %v1523
        %v1563 = vpack.c.b16 %v1548, %v1547
        %v1564 = vpack.c.b16 %v1550, %v1549
        %v1565 = vpack.c.b16 %v1552, %v1551
        %v1566 = vpack.c.b16 %v1554, %v1553
        %v1567 = vpack.c.b16 %v1556, %v1555
        %v1568 = vpack.c.b16 %v1558, %v1557
        %v1569 = vpack.c.b16 %v1560, %v1559
        %v1570 = vpack.c.b16 %v1562, %v1561
        %1579 = vmatprep.subr.bf16.mxu0 0
        %1580 = vmatpush1.bf16.msra.mxu0 %v1563
        %1581 = vmatprep.subr.bf16.mxu0 0
        %1582 = vmatpush1.bf16.msra.mxu0 %v1564
        %1583 = vmatprep.subr.bf16.mxu0 0
        %1584 = vmatpush1.bf16.msra.mxu0 %v1565
        %1585 = vmatprep.subr.bf16.mxu0 0
        %1586 = vmatpush1.bf16.msra.mxu0 %v1566
        %1587 = vmatprep.subr.bf16.mxu0 0
        %1588 = vmatpush1.bf16.msra.mxu0 %v1567
        %1589 = vmatprep.subr.bf16.mxu0 0
        %1590 = vmatpush1.bf16.msra.mxu0 %v1568
        %1591 = vmatprep.subr.bf16.mxu0 0
        %1592 = vmatpush1.bf16.msra.mxu0 %v1569
        %1593 = vmatprep.subr.bf16.mxu0 0
        %1594 = vmatpush1.bf16.msra.mxu0 %v1570
        %1595 = vmatprep.subr.bf16.mxu0 0
        %1596 = vmatpush1.bf16.msra.mxu0 0
        %1597 = vmatprep.subr.bf16.mxu0 0
        %1598 = vmatpush1.bf16.msra.mxu0 0
        %1599 = vmatprep.subr.bf16.mxu0 0
        %1600 = vmatpush1.bf16.msra.mxu0 0
        %1601 = vmatprep.subr.bf16.mxu0 0
        %1602 = vmatpush1.bf16.msra.mxu0 0
        %1603 = vmatprep.subr.bf16.mxu0 0
        %1604 = vmatpush1.bf16.msra.mxu0 0
        %1605 = vmatprep.subr.bf16.mxu0 0
        %1606 = vmatpush1.bf16.msra.mxu0 0
        %1607 = vmatprep.subr.bf16.mxu0 0
        %1608 = vmatpush1.bf16.msra.mxu0 0
        %1609 = vmatprep.subr.bf16.mxu0 0
        %1610 = vmatpush1.bf16.msra.mxu0 0
        %1611 = vmatprep.mubr.bf16.mxu0 0
        %1612 = vmatmul.mubr.bf16.gmra.mrb[0].mxu0 %v1507
        %v1613 = vpop.f32.mrb[0].mxu0
        %v1614 = vadd.f32 %v1529, %v1613
        %v1615 = vpop.f32.mrb[0].mxu0
        %v1616 = vpop.f32.mrb[0].mxu0
        %v1617 = vpop.f32.mrb[0].mxu0
        %1618 = vdwg.mxu0
        %v1619 = vadd.f32 %v779, %v1614
        %v1620 = vld [vmem:[#allocation10] sm:$0x1]
        %v1621 = vld [vmem:[#allocation11] sm:$0x1]
        %1622 = vadd.xlane.f32.xlu0 %v1619
        %v1623 = vpop.xlane.xlu0 %1622
        %v1624 = vmul.f32 %v1623, %v756
        %v1625 = vsub.f32 %v1619, %v1624
        %v1626 = vmul.f32 %v1625, %v1625
        %1627 = vadd.xlane.f32.xlu0 %v1626
        %v1628 = vpop.xlane.xlu0 %1627
        %v1629 = vmul.f32 %v1628, %v756
        %v1630 = vadd.f32 %v1629, 1e-12
        %v1631 = vrsqrt.pop %v1630
        %v1632 = vmul.f32 %v1625, %v1631
        %v1634 = vlaneseq
        %v1635 = vshrl.u32 %v1634, 7
        %v1636 = vsub.s32 0, %v1635
        %v1637 = vrot.slane %v1620, %v1636
        %v1639 = vmul.f32 %v1632, %v1637
        %v1641 = vlaneseq
        %v1642 = vshrl.u32 %v1641, 7
        %v1643 = vsub.s32 0, %v1642
        %v1644 = vrot.slane %v1621, %v1643
        %v1646 = vadd.f32 %v1639, %v1644
        %v1647 = vpack.c.bf16 %v1646, %v1646
        %v1648 = vld [vmem:[#allocation13] sm:$0xff]
        %v1649 = vld [vmem:[#allocation13 + $0x8] sm:$0xff]
        %v1650 = vld [vmem:[#allocation13 + $0x10] sm:$0xff]
        %v1651 = vld [vmem:[#allocation13 + $0x18] sm:$0xff]
        %v1652 = vld [vmem:[#allocation13 + $0x20] sm:$0xff]
        %v1653 = vld [vmem:[#allocation13 + $0x28] sm:$0xff]
        %v1654 = vld [vmem:[#allocation13 + $0x30] sm:$0xff]
        %v1655 = vld [vmem:[#allocation13 + $0x38] sm:$0xff]
        %v1656 = vld [vmem:[#allocation13 + $0x40] sm:$0xff]
        %v1657 = vld [vmem:[#allocation13 + $0x48] sm:$0xff]
        %v1658 = vld [vmem:[#allocation13 + $0x50] sm:$0xff]
        %v1659 = vld [vmem:[#allocation13 + $0x58] sm:$0xff]
        %v1660 = vld [vmem:[#allocation13 + $0x60] sm:$0xff]
        %v1661 = vld [vmem:[#allocation13 + $0x68] sm:$0xff]
        %v1662 = vld [vmem:[#allocation13 + $0x70] sm:$0xff]
        %v1663 = vld [vmem:[#allocation13 + $0x78] sm:$0xff]
        %v1664 = vld [vmem:[#allocation13 + $0x80] sm:$0xff]
        %v1665 = vld [vmem:[#allocation13 + $0x88] sm:$0xff]
        %v1666 = vld [vmem:[#allocation13 + $0x90] sm:$0xff]
        %v1667 = vld [vmem:[#allocation13 + $0x98] sm:$0xff]
        %v1668 = vld [vmem:[#allocation13 + $0xa0] sm:$0xff]
        %v1669 = vld [vmem:[#allocation13 + $0xa8] sm:$0xff]
        %v1670 = vld [vmem:[#allocation13 + $0xb0] sm:$0xff]
        %v1671 = vld [vmem:[#allocation13 + $0xb8] sm:$0xff]
        %v1672 = vld [vmem:[#allocation13 + $0xc0] sm:$0xff]
        %v1673 = vld [vmem:[#allocation13 + $0xc8] sm:$0xff]
        %v1674 = vld [vmem:[#allocation13 + $0xd0] sm:$0xff]
        %v1675 = vld [vmem:[#allocation13 + $0xd8] sm:$0xff]
        %v1676 = vld [vmem:[#allocation13 + $0xe0] sm:$0xff]
        %v1677 = vld [vmem:[#allocation13 + $0xe8] sm:$0xff]
        %v1678 = vld [vmem:[#allocation13 + $0xf0] sm:$0xff]
        %v1679 = vld [vmem:[#allocation13 + $0xf8] sm:$0xff]
        %v1680 = vld [vmem:[%s11] sm:$0xf]
        %v1682 = vlaneseq
        %v1683 = vshrl.u32 %v1682, 7
        %v1684 = vsub.s32 0, %v1683
        %v1685 = vrot.slane %v1680, %v1684
        %v1686 = vlaneseq
        %v1687 = vshrl.u32 %v1686, 7
        %v1688 = vsub.s32 1, %v1687
        %v1689 = vrot.slane %v1680, %v1688
        %v1690 = vlaneseq
        %v1691 = vshrl.u32 %v1690, 7
        %v1692 = vsub.s32 2, %v1691
        %v1693 = vrot.slane %v1680, %v1692
        %v1694 = vlaneseq
        %v1695 = vshrl.u32 %v1694, 7
        %v1696 = vsub.s32 3, %v1695
        %v1697 = vrot.slane %v1680, %v1696
        %v1734 = vunpack.c.l.b16 %v1648
        %v1735 = vunpack.c.h.b16 %v1648
        %v1736 = vunpack.c.l.b16 %v1649
        %v1737 = vunpack.c.h.b16 %v1649
        %v1738 = vunpack.c.l.b16 %v1650
        %v1739 = vunpack.c.h.b16 %v1650
        %v1740 = vunpack.c.l.b16 %v1651
        %v1741 = vunpack.c.h.b16 %v1651
        %v1742 = vunpack.c.l.b16 %v1652
        %v1743 = vunpack.c.h.b16 %v1652
        %v1744 = vunpack.c.l.b16 %v1653
        %v1745 = vunpack.c.h.b16 %v1653
        %v1746 = vunpack.c.l.b16 %v1654
        %v1747 = vunpack.c.h.b16 %v1654
        %v1748 = vunpack.c.l.b16 %v1655
        %v1749 = vunpack.c.h.b16 %v1655
        %v1750 = vunpack.c.l.b16 %v1656
        %v1751 = vunpack.c.h.b16 %v1656
        %v1752 = vunpack.c.l.b16 %v1657
        %v1753 = vunpack.c.h.b16 %v1657
        %v1754 = vunpack.c.l.b16 %v1658
        %v1755 = vunpack.c.h.b16 %v1658
        %v1756 = vunpack.c.l.b16 %v1659
        %v1757 = vunpack.c.h.b16 %v1659
        %v1758 = vunpack.c.l.b16 %v1660
        %v1759 = vunpack.c.h.b16 %v1660
        %v1760 = vunpack.c.l.b16 %v1661
        %v1761 = vunpack.c.h.b16 %v1661
        %v1762 = vunpack.c.l.b16 %v1662
        %v1763 = vunpack.c.h.b16 %v1662
        %v1764 = vunpack.c.l.b16 %v1663
        %v1765 = vunpack.c.h.b16 %v1663
        %v1766 = vunpack.c.l.b16 %v1664
        %v1767 = vunpack.c.h.b16 %v1664
        %v1768 = vunpack.c.l.b16 %v1665
        %v1769 = vunpack.c.h.b16 %v1665
        %v1770 = vunpack.c.l.b16 %v1666
        %v1771 = vunpack.c.h.b16 %v1666
        %v1772 = vunpack.c.l.b16 %v1667
        %v1773 = vunpack.c.h.b16 %v1667
        %v1774 = vunpack.c.l.b16 %v1668
        %v1775 = vunpack.c.h.b16 %v1668
        %v1776 = vunpack.c.l.b16 %v1669
        %v1777 = vunpack.c.h.b16 %v1669
        %v1778 = vunpack.c.l.b16 %v1670
        %v1779 = vunpack.c.h.b16 %v1670
        %v1780 = vunpack.c.l.b16 %v1671
        %v1781 = vunpack.c.h.b16 %v1671
        %v1782 = vunpack.c.l.b16 %v1672
        %v1783 = vunpack.c.h.b16 %v1672
        %v1784 = vunpack.c.l.b16 %v1673
        %v1785 = vunpack.c.h.b16 %v1673
        %v1786 = vunpack.c.l.b16 %v1674
        %v1787 = vunpack.c.h.b16 %v1674
        %v1788 = vunpack.c.l.b16 %v1675
        %v1789 = vunpack.c.h.b16 %v1675
        %v1790 = vunpack.c.l.b16 %v1676
        %v1791 = vunpack.c.h.b16 %v1676
        %v1792 = vunpack.c.l.b16 %v1677
        %v1793 = vunpack.c.h.b16 %v1677
        %v1794 = vunpack.c.l.b16 %v1678
        %v1795 = vunpack.c.h.b16 %v1678
        %v1796 = vunpack.c.l.b16 %v1679
        %v1797 = vunpack.c.h.b16 %v1679
        %v1798 = vpack.c.b16 %v1738, %v1734
        %v1799 = vpack.c.b16 %v1739, %v1735
        %v1800 = vpack.c.b16 %v1740, %v1736
        %v1801 = vpack.c.b16 %v1741, %v1737
        %v1802 = vpack.c.b16 %v1746, %v1742
        %v1803 = vpack.c.b16 %v1747, %v1743
        %v1804 = vpack.c.b16 %v1748, %v1744
        %v1805 = vpack.c.b16 %v1749, %v1745
        %v1806 = vpack.c.b16 %v1754, %v1750
        %v1807 = vpack.c.b16 %v1755, %v1751
        %v1808 = vpack.c.b16 %v1756, %v1752
        %v1809 = vpack.c.b16 %v1757, %v1753
        %v1810 = vpack.c.b16 %v1762, %v1758
        %v1811 = vpack.c.b16 %v1763, %v1759
        %v1812 = vpack.c.b16 %v1764, %v1760
        %v1813 = vpack.c.b16 %v1765, %v1761
        %v1814 = vpack.c.b16 %v1770, %v1766
        %v1815 = vpack.c.b16 %v1771, %v1767
        %v1816 = vpack.c.b16 %v1772, %v1768
        %v1817 = vpack.c.b16 %v1773, %v1769
        %v1818 = vpack.c.b16 %v1778, %v1774
        %v1819 = vpack.c.b16 %v1779, %v1775
        %v1820 = vpack.c.b16 %v1780, %v1776
        %v1821 = vpack.c.b16 %v1781, %v1777
        %v1822 = vpack.c.b16 %v1786, %v1782
        %v1823 = vpack.c.b16 %v1787, %v1783
        %v1824 = vpack.c.b16 %v1788, %v1784
        %v1825 = vpack.c.b16 %v1789, %v1785
        %v1826 = vpack.c.b16 %v1794, %v1790
        %v1827 = vpack.c.b16 %v1795, %v1791
        %v1828 = vpack.c.b16 %v1796, %v1792
        %v1829 = vpack.c.b16 %v1797, %v1793
        %1862 = vmatprep.subr.bf16.mxu0 %v1799
        %1863 = vmatpush1.bf16.msra.mxu0 %v1798
        %1864 = vmatprep.subr.bf16.mxu0 %v1803
        %1865 = vmatpush1.bf16.msra.mxu0 %v1802
        %1866 = vmatprep.subr.bf16.mxu0 %v1807
        %1867 = vmatpush1.bf16.msra.mxu0 %v1806
        %1868 = vmatprep.subr.bf16.mxu0 %v1811
        %1869 = vmatpush1.bf16.msra.mxu0 %v1810
        %1870 = vmatprep.subr.bf16.mxu0 %v1815
        %1871 = vmatpush1.bf16.msra.mxu0 %v1814
        %1872 = vmatprep.subr.bf16.mxu0 %v1819
        %1873 = vmatpush1.bf16.msra.mxu0 %v1818
        %1874 = vmatprep.subr.bf16.mxu0 %v1823
        %1875 = vmatpush1.bf16.msra.mxu0 %v1822
        %1876 = vmatprep.subr.bf16.mxu0 %v1827
        %1877 = vmatpush1.bf16.msra.mxu0 %v1826
        %1878 = vmatprep.subr.bf16.mxu0 0
        %1879 = vmatpush1.bf16.msra.mxu0 0
        %1880 = vmatprep.subr.bf16.mxu0 0
        %1881 = vmatpush1.bf16.msra.mxu0 0
        %1882 = vmatprep.subr.bf16.mxu0 0
        %1883 = vmatpush1.bf16.msra.mxu0 0
        %1884 = vmatprep.subr.bf16.mxu0 0
        %1885 = vmatpush1.bf16.msra.mxu0 0
        %1886 = vmatprep.subr.bf16.mxu0 0
        %1887 = vmatpush1.bf16.msra.mxu0 0
        %1888 = vmatprep.subr.bf16.mxu0 0
        %1889 = vmatpush1.bf16.msra.mxu0 0
        %1890 = vmatprep.subr.bf16.mxu0 0
        %1891 = vmatpush1.bf16.msra.mxu0 0
        %1892 = vmatprep.subr.bf16.mxu0 0
        %1893 = vmatpush1.bf16.msra.mxu0 0
        %1894 = vmatprep.mubr.bf16.mxu0 0
        %1895 = vmatmul.mubr.bf16.gmra.mrb[0].mxu0 %v1647
        %v1896 = vpop.f32.mrb[0].mxu0
        %v1897 = vadd.f32 %v1685, %v1896
        %v1898 = vpop.f32.mrb[0].mxu0
        %v1899 = vadd.f32 %v1689, %v1898
        %v1900 = vpop.f32.mrb[0].mxu0
        %v1901 = vpop.f32.mrb[0].mxu0
        %1902 = vdwg.mxu0
        %1903 = vmatprep.subr.bf16.mxu0 %v1801
        %1904 = vmatpush1.bf16.msra.mxu0 %v1800
        %1905 = vmatprep.subr.bf16.mxu0 %v1805
        %1906 = vmatpush1.bf16.msra.mxu0 %v1804
        %1907 = vmatprep.subr.bf16.mxu0 %v1809
        %1908 = vmatpush1.bf16.msra.mxu0 %v1808
        %1909 = vmatprep.subr.bf16.mxu0 %v1813
        %1910 = vmatpush1.bf16.msra.mxu0 %v1812
        %1911 = vmatprep.subr.bf16.mxu0 %v1817
        %1912 = vmatpush1.bf16.msra.mxu0 %v1816
        %1913 = vmatprep.subr.bf16.mxu0 %v1821
        %1914 = vmatpush1.bf16.msra.mxu0 %v1820
        %1915 = vmatprep.subr.bf16.mxu0 %v1825
        %1916 = vmatpush1.bf16.msra.mxu0 %v1824
        %1917 = vmatprep.subr.bf16.mxu0 %v1829
        %1918 = vmatpush1.bf16.msra.mxu0 %v1828
        %1919 = vmatprep.subr.bf16.mxu0 0
        %1920 = vmatpush1.bf16.msra.mxu0 0
        %1921 = vmatprep.subr.bf16.mxu0 0
        %1922 = vmatpush1.bf16.msra.mxu0 0
        %1923 = vmatprep.subr.bf16.mxu0 0
        %1924 = vmatpush1.bf16.msra.mxu0 0
        %1925 = vmatprep.subr.bf16.mxu0 0
        %1926 = vmatpush1.bf16.msra.mxu0 0
        %1927 = vmatprep.subr.bf16.mxu0 0
        %1928 = vmatpush1.bf16.msra.mxu0 0
        %1929 = vmatprep.subr.bf16.mxu0 0
        %1930 = vmatpush1.bf16.msra.mxu0 0
        %1931 = vmatprep.subr.bf16.mxu0 0
        %1932 = vmatpush1.bf16.msra.mxu0 0
        %1933 = vmatprep.subr.bf16.mxu0 0
        %1934 = vmatpush1.bf16.msra.mxu0 0
        %1935 = vmatprep.mubr.bf16.mxu0 0
        %1936 = vmatmul.mubr.bf16.gmra.mrb[0].mxu0 %v1647
        %v1937 = vpop.f32.mrb[0].mxu0
        %v1938 = vadd.f32 %v1693, %v1937
        %v1939 = vpop.f32.mrb[0].mxu0
        %v1940 = vadd.f32 %v1697, %v1939
        %v1941 = vpop.f32.mrb[0].mxu0
        %v1942 = vpop.f32.mrb[0].mxu0
        %1943 = vdwg.mxu0
        %v1944 = vmul.f32 %v1897, %v1897
        %v1945 = vmul.f32 %v1899, %v1899
        %v1946 = vmul.f32 %v1938, %v1938
        %v1947 = vmul.f32 %v1940, %v1940
        %v1948 = vmul.f32 %v1897, %v1944
        %v1949 = vmul.f32 %v1899, %v1945
        %v1950 = vmul.f32 %v1938, %v1946
        %v1951 = vmul.f32 %v1940, %v1947
        %v1952 = vmul.f32 %v1948, 0.044715
        %v1953 = vmul.f32 %v1949, 0.044715
        %v1954 = vmul.f32 %v1950, 0.044715
        %v1955 = vmul.f32 %v1951, 0.044715
        %v1956 = vadd.f32 %v1897, %v1952
        %v1957 = vadd.f32 %v1899, %v1953
        %v1958 = vadd.f32 %v1938, %v1954
        %v1959 = vadd.f32 %v1940, %v1955
        %v1960 = vmul.f32 %v1956, 0.7978846
        %v1961 = vmul.f32 %v1957, 0.7978846
        %v1962 = vmul.f32 %v1958, 0.7978846
        %v1963 = vmul.f32 %v1959, 0.7978846
        %v1964 = vtanh.pop %v1960
        %v1965 = vtanh.pop %v1961
        %v1966 = vtanh.pop %v1962
        %v1967 = vtanh.pop %v1963
        %v1968 = vadd.f32 %v1964, 1.0
        %v1969 = vadd.f32 %v1965, 1.0
        %v1970 = vadd.f32 %v1966, 1.0
        %v1971 = vadd.f32 %v1967, 1.0
        %v1972 = vmul.f32 %v1968, 0.5
        %v1973 = vmul.f32 %v1969, 0.5
        %v1974 = vmul.f32 %v1970, 0.5
        %v1975 = vmul.f32 %v1971, 0.5
        %v1976 = vmul.f32 %v1897, %v1972
        %v1977 = vmul.f32 %v1899, %v1973
        %v1978 = vmul.f32 %v1938, %v1974
        %v1979 = vmul.f32 %v1940, %v1975
        %v1980 = vpack.c.bf16 %v1976, %v1976
        %v1981 = vpack.c.bf16 %v1977, %v1977
        %v1982 = vpack.c.bf16 %v1978, %v1978
        %v1983 = vpack.c.bf16 %v1979, %v1979
        %v1984 = vld [vmem:[#allocation14] sm:$0xf]
        %v1985 = vld [vmem:[#allocation14 + $0x4] sm:$0xf]
        %v1986 = vld [vmem:[#allocation14 + $0x8] sm:$0xf]
        %v1987 = vld [vmem:[#allocation14 + $0xc] sm:$0xf]
        %v1988 = vld [vmem:[#allocation14 + $0x10] sm:$0xf]
        %v1989 = vld [vmem:[#allocation14 + $0x14] sm:$0xf]
        %v1990 = vld [vmem:[#allocation14 + $0x18] sm:$0xf]
        %v1991 = vld [vmem:[#allocation14 + $0x1c] sm:$0xf]
        %v1992 = vld [vmem:[#allocation14 + $0x20] sm:$0xf]
        %v1993 = vld [vmem:[#allocation14 + $0x24] sm:$0xf]
        %v1994 = vld [vmem:[#allocation14 + $0x28] sm:$0xf]
        %v1995 = vld [vmem:[#allocation14 + $0x2c] sm:$0xf]
        %v1996 = vld [vmem:[#allocation14 + $0x30] sm:$0xf]
        %v1997 = vld [vmem:[#allocation14 + $0x34] sm:$0xf]
        %v1998 = vld [vmem:[#allocation14 + $0x38] sm:$0xf]
        %v1999 = vld [vmem:[#allocation14 + $0x3c] sm:$0xf]
        %v2000 = vld [vmem:[#allocation14 + $0x40] sm:$0xf]
        %v2001 = vld [vmem:[#allocation14 + $0x44] sm:$0xf]
        %v2002 = vld [vmem:[#allocation14 + $0x48] sm:$0xf]
        %v2003 = vld [vmem:[#allocation14 + $0x4c] sm:$0xf]
        %v2004 = vld [vmem:[#allocation14 + $0x50] sm:$0xf]
        %v2005 = vld [vmem:[#allocation14 + $0x54] sm:$0xf]
        %v2006 = vld [vmem:[#allocation14 + $0x58] sm:$0xf]
        %v2007 = vld [vmem:[#allocation14 + $0x5c] sm:$0xf]
        %v2008 = vld [vmem:[#allocation14 + $0x60] sm:$0xf]
        %v2009 = vld [vmem:[#allocation14 + $0x64] sm:$0xf]
        %v2010 = vld [vmem:[#allocation14 + $0x68] sm:$0xf]
        %v2011 = vld [vmem:[#allocation14 + $0x6c] sm:$0xf]
        %v2012 = vld [vmem:[#allocation14 + $0x70] sm:$0xf]
        %v2013 = vld [vmem:[#allocation14 + $0x74] sm:$0xf]
        %v2014 = vld [vmem:[#allocation14 + $0x78] sm:$0xf]
        %v2015 = vld [vmem:[#allocation14 + $0x7c] sm:$0xf]
        %v2016 = vld [vmem:[#allocation14 + $0x80] sm:$0xf]
        %v2017 = vld [vmem:[#allocation14 + $0x84] sm:$0xf]
        %v2018 = vld [vmem:[#allocation14 + $0x88] sm:$0xf]
        %v2019 = vld [vmem:[#allocation14 + $0x8c] sm:$0xf]
        %v2020 = vld [vmem:[#allocation14 + $0x90] sm:$0xf]
        %v2021 = vld [vmem:[#allocation14 + $0x94] sm:$0xf]
        %v2022 = vld [vmem:[#allocation14 + $0x98] sm:$0xf]
        %v2023 = vld [vmem:[#allocation14 + $0x9c] sm:$0xf]
        %v2024 = vld [vmem:[#allocation14 + $0xa0] sm:$0xf]
        %v2025 = vld [vmem:[#allocation14 + $0xa4] sm:$0xf]
        %v2026 = vld [vmem:[#allocation14 + $0xa8] sm:$0xf]
        %v2027 = vld [vmem:[#allocation14 + $0xac] sm:$0xf]
        %v2028 = vld [vmem:[#allocation14 + $0xb0] sm:$0xf]
        %v2029 = vld [vmem:[#allocation14 + $0xb4] sm:$0xf]
        %v2030 = vld [vmem:[#allocation14 + $0xb8] sm:$0xf]
        %v2031 = vld [vmem:[#allocation14 + $0xbc] sm:$0xf]
        %v2032 = vld [vmem:[#allocation14 + $0xc0] sm:$0xf]
        %v2033 = vld [vmem:[#allocation14 + $0xc4] sm:$0xf]
        %v2034 = vld [vmem:[#allocation14 + $0xc8] sm:$0xf]
        %v2035 = vld [vmem:[#allocation14 + $0xcc] sm:$0xf]
        %v2036 = vld [vmem:[#allocation14 + $0xd0] sm:$0xf]
        %v2037 = vld [vmem:[#allocation14 + $0xd4] sm:$0xf]
        %v2038 = vld [vmem:[#allocation14 + $0xd8] sm:$0xf]
        %v2039 = vld [vmem:[#allocation14 + $0xdc] sm:$0xf]
        %v2040 = vld [vmem:[#allocation14 + $0xe0] sm:$0xf]
        %v2041 = vld [vmem:[#allocation14 + $0xe4] sm:$0xf]
        %v2042 = vld [vmem:[#allocation14 + $0xe8] sm:$0xf]
        %v2043 = vld [vmem:[#allocation14 + $0xec] sm:$0xf]
        %v2044 = vld [vmem:[#allocation14 + $0xf0] sm:$0xf]
        %v2045 = vld [vmem:[#allocation14 + $0xf4] sm:$0xf]
        %v2046 = vld [vmem:[#allocation14 + $0xf8] sm:$0xf]
        %v2047 = vld [vmem:[#allocation14 + $0xfc] sm:$0xf]
        %v2048 = vld [vmem:[#allocation16] sm:$0x1]
        %v2050 = vlaneseq
        %v2051 = vshrl.u32 %v2050, 7
        %v2052 = vsub.s32 0, %v2051
        %v2053 = vrot.slane %v2048, %v2052
        %v2119 = vunpack.c.l.b16 %v1984
        %v2120 = vunpack.c.l.b16 %v1985
        %v2121 = vunpack.c.l.b16 %v1986
        %v2122 = vunpack.c.l.b16 %v1987
        %v2123 = vunpack.c.l.b16 %v1988
        %v2124 = vunpack.c.l.b16 %v1989
        %v2125 = vunpack.c.l.b16 %v1990
        %v2126 = vunpack.c.l.b16 %v1991
        %v2127 = vunpack.c.l.b16 %v1992
        %v2128 = vunpack.c.l.b16 %v1993
        %v2129 = vunpack.c.l.b16 %v1994
        %v2130 = vunpack.c.l.b16 %v1995
        %v2131 = vunpack.c.l.b16 %v1996
        %v2132 = vunpack.c.l.b16 %v1997
        %v2133 = vunpack.c.l.b16 %v1998
        %v2134 = vunpack.c.l.b16 %v1999
        %v2135 = vunpack.c.l.b16 %v2000
        %v2136 = vunpack.c.l.b16 %v2001
        %v2137 = vunpack.c.l.b16 %v2002
        %v2138 = vunpack.c.l.b16 %v2003
        %v2139 = vunpack.c.l.b16 %v2004
        %v2140 = vunpack.c.l.b16 %v2005
        %v2141 = vunpack.c.l.b16 %v2006
        %v2142 = vunpack.c.l.b16 %v2007
        %v2143 = vunpack.c.l.b16 %v2008
        %v2144 = vunpack.c.l.b16 %v2009
        %v2145 = vunpack.c.l.b16 %v2010
        %v2146 = vunpack.c.l.b16 %v2011
        %v2147 = vunpack.c.l.b16 %v2012
        %v2148 = vunpack.c.l.b16 %v2013
        %v2149 = vunpack.c.l.b16 %v2014
        %v2150 = vunpack.c.l.b16 %v2015
        %v2151 = vunpack.c.l.b16 %v2016
        %v2152 = vunpack.c.l.b16 %v2017
        %v2153 = vunpack.c.l.b16 %v2018
        %v2154 = vunpack.c.l.b16 %v2019
        %v2155 = vunpack.c.l.b16 %v2020
        %v2156 = vunpack.c.l.b16 %v2021
        %v2157 = vunpack.c.l.b16 %v2022
        %v2158 = vunpack.c.l.b16 %v2023
        %v2159 = vunpack.c.l.b16 %v2024
        %v2160 = vunpack.c.l.b16 %v2025
        %v2161 = vunpack.c.l.b16 %v2026
        %v2162 = vunpack.c.l.b16 %v2027
        %v2163 = vunpack.c.l.b16 %v2028
        %v2164 = vunpack.c.l.b16 %v2029
        %v2165 = vunpack.c.l.b16 %v2030
        %v2166 = vunpack.c.l.b16 %v2031
        %v2167 = vunpack.c.l.b16 %v2032
        %v2168 = vunpack.c.l.b16 %v2033
        %v2169 = vunpack.c.l.b16 %v2034
        %v2170 = vunpack.c.l.b16 %v2035
        %v2171 = vunpack.c.l.b16 %v2036
        %v2172 = vunpack.c.l.b16 %v2037
        %v2173 = vunpack.c.l.b16 %v2038
        %v2174 = vunpack.c.l.b16 %v2039
        %v2175 = vunpack.c.l.b16 %v2040
        %v2176 = vunpack.c.l.b16 %v2041
        %v2177 = vunpack.c.l.b16 %v2042
        %v2178 = vunpack.c.l.b16 %v2043
        %v2179 = vunpack.c.l.b16 %v2044
        %v2180 = vunpack.c.l.b16 %v2045
        %v2181 = vunpack.c.l.b16 %v2046
        %v2182 = vunpack.c.l.b16 %v2047
        %v2183 = vpack.c.b16 %v2120, %v2119
        %v2184 = vpack.c.b16 %v2122, %v2121
        %v2185 = vpack.c.b16 %v2124, %v2123
        %v2186 = vpack.c.b16 %v2126, %v2125
        %v2187 = vpack.c.b16 %v2128, %v2127
        %v2188 = vpack.c.b16 %v2130, %v2129
        %v2189 = vpack.c.b16 %v2132, %v2131
        %v2190 = vpack.c.b16 %v2134, %v2133
        %v2191 = vpack.c.b16 %v2136, %v2135
        %v2192 = vpack.c.b16 %v2138, %v2137
        %v2193 = vpack.c.b16 %v2140, %v2139
        %v2194 = vpack.c.b16 %v2142, %v2141
        %v2195 = vpack.c.b16 %v2144, %v2143
        %v2196 = vpack.c.b16 %v2146, %v2145
        %v2197 = vpack.c.b16 %v2148, %v2147
        %v2198 = vpack.c.b16 %v2150, %v2149
        %v2199 = vpack.c.b16 %v2152, %v2151
        %v2200 = vpack.c.b16 %v2154, %v2153
        %v2201 = vpack.c.b16 %v2156, %v2155
        %v2202 = vpack.c.b16 %v2158, %v2157
        %v2203 = vpack.c.b16 %v2160, %v2159
        %v2204 = vpack.c.b16 %v2162, %v2161
        %v2205 = vpack.c.b16 %v2164, %v2163
        %v2206 = vpack.c.b16 %v2166, %v2165
        %v2207 = vpack.c.b16 %v2168, %v2167
        %v2208 = vpack.c.b16 %v2170, %v2169
        %v2209 = vpack.c.b16 %v2172, %v2171
        %v2210 = vpack.c.b16 %v2174, %v2173
        %v2211 = vpack.c.b16 %v2176, %v2175
        %v2212 = vpack.c.b16 %v2178, %v2177
        %v2213 = vpack.c.b16 %v2180, %v2179
        %v2214 = vpack.c.b16 %v2182, %v2181
        %2247 = vmatprep.subr.bf16.mxu0 0
        %2248 = vmatpush1.bf16.msra.mxu0 %v2183
        %2249 = vmatprep.subr.bf16.mxu0 0
        %2250 = vmatpush1.bf16.msra.mxu0 %v2184
        %2251 = vmatprep.subr.bf16.mxu0 0
        %2252 = vmatpush1.bf16.msra.mxu0 %v2185
        %2253 = vmatprep.subr.bf16.mxu0 0
        %2254 = vmatpush1.bf16.msra.mxu0 %v2186
        %2255 = vmatprep.subr.bf16.mxu0 0
        %2256 = vmatpush1.bf16.msra.mxu0 %v2187
        %2257 = vmatprep.subr.bf16.mxu0 0
        %2258 = vmatpush1.bf16.msra.mxu0 %v2188
        %2259 = vmatprep.subr.bf16.mxu0 0
        %2260 = vmatpush1.bf16.msra.mxu0 %v2189
        %2261 = vmatprep.subr.bf16.mxu0 0
        %2262 = vmatpush1.bf16.msra.mxu0 %v2190
        %2263 = vmatprep.subr.bf16.mxu0 0
        %2264 = vmatpush1.bf16.msra.mxu0 %v2191
        %2265 = vmatprep.subr.bf16.mxu0 0
        %2266 = vmatpush1.bf16.msra.mxu0 %v2192
        %2267 = vmatprep.subr.bf16.mxu0 0
        %2268 = vmatpush1.bf16.msra.mxu0 %v2193
        %2269 = vmatprep.subr.bf16.mxu0 0
        %2270 = vmatpush1.bf16.msra.mxu0 %v2194
        %2271 = vmatprep.subr.bf16.mxu0 0
        %2272 = vmatpush1.bf16.msra.mxu0 %v2195
        %2273 = vmatprep.subr.bf16.mxu0 0
        %2274 = vmatpush1.bf16.msra.mxu0 %v2196
        %2275 = vmatprep.subr.bf16.mxu0 0
        %2276 = vmatpush1.bf16.msra.mxu0 %v2197
        %2277 = vmatprep.subr.bf16.mxu0 0
        %2278 = vmatpush1.bf16.msra.mxu0 %v2198
        %2279 = vmatprep.mubr.bf16.mxu0 %v1981
        %2280 = vmatmul.mubr.bf16.gmra.mrb[0].mxu0 %v1980
        %v2281 = vpop.f32.mrb[0].mxu0
        %v2282 = vadd.f32 %v2053, %v2281
        %v2283 = vpop.f32.mrb[0].mxu0
        %v2284 = vpop.f32.mrb[0].mxu0
        %v2285 = vpop.f32.mrb[0].mxu0
        %2286 = vdwg.mxu0
        %2287 = vmatprep.subr.bf16.mxu0 0
        %2288 = vmatpush1.bf16.msra.mxu0 %v2199
        %2289 = vmatprep.subr.bf16.mxu0 0
        %2290 = vmatpush1.bf16.msra.mxu0 %v2200
        %2291 = vmatprep.subr.bf16.mxu0 0
        %2292 = vmatpush1.bf16.msra.mxu0 %v2201
        %2293 = vmatprep.subr.bf16.mxu0 0
        %2294 = vmatpush1.bf16.msra.mxu0 %v2202
        %2295 = vmatprep.subr.bf16.mxu0 0
        %2296 = vmatpush1.bf16.msra.mxu0 %v2203
        %2297 = vmatprep.subr.bf16.mxu0 0
        %2298 = vmatpush1.bf16.msra.mxu0 %v2204
        %2299 = vmatprep.subr.bf16.mxu0 0
        %2300 = vmatpush1.bf16.msra.mxu0 %v2205
        %2301 = vmatprep.subr.bf16.mxu0 0
        %2302 = vmatpush1.bf16.msra.mxu0 %v2206
        %2303 = vmatprep.subr.bf16.mxu0 0
        %2304 = vmatpush1.bf16.msra.mxu0 %v2207
        %2305 = vmatprep.subr.bf16.mxu0 0
        %2306 = vmatpush1.bf16.msra.mxu0 %v2208
        %2307 = vmatprep.subr.bf16.mxu0 0
        %2308 = vmatpush1.bf16.msra.mxu0 %v2209
        %2309 = vmatprep.subr.bf16.mxu0 0
        %2310 = vmatpush1.bf16.msra.mxu0 %v2210
        %2311 = vmatprep.subr.bf16.mxu0 0
        %2312 = vmatpush1.bf16.msra.mxu0 %v2211
        %2313 = vmatprep.subr.bf16.mxu0 0
        %2314 = vmatpush1.bf16.msra.mxu0 %v2212
        %2315 = vmatprep.subr.bf16.mxu0 0
        %2316 = vmatpush1.bf16.msra.mxu0 %v2213
        %2317 = vmatprep.subr.bf16.mxu0 0
        %2318 = vmatpush1.bf16.msra.mxu0 %v2214
        %2319 = vmatprep.mubr.bf16.mxu0 %v1983
        %2320 = vmatmul.mubr.bf16.gmra.mrb[0].mxu0 %v1982
        %v2321 = vpop.f32.mrb[0].mxu0
        %v2322 = vadd.f32 %v2282, %v2321
        %v2323 = vpop.f32.mrb[0].mxu0
        %v2324 = vpop.f32.mrb[0].mxu0
        %v2325 = vpop.f32.mrb[0].mxu0
        %2326 = vdwg.mxu0
        %v2327 = vadd.f32 %v1646, %v2322
        %v2328 = vld [vmem:[#allocation17] sm:$0x1]
        %v2329 = vld [vmem:[#allocation19] sm:$0x1]
        %2330 = vadd.xlane.f32.xlu0 %v2327
        %v2331 = vpop.xlane.xlu0 %2330
        %v2332 = vmul.f32 %v2331, %v756
        %v2333 = vsub.f32 %v2327, %v2332
        %v2334 = vmul.f32 %v2333, %v2333
        %2335 = vadd.xlane.f32.xlu0 %v2334
        %v2336 = vpop.xlane.xlu0 %2335
        %v2337 = vmul.f32 %v2336, %v756
        %v2338 = vadd.f32 %v2337, 1e-12
        %v2339 = vrsqrt.pop %v2338
        %v2340 = vmul.f32 %v2333, %v2339
        %v2342 = vlaneseq
        %v2343 = vshrl.u32 %v2342, 7
        %v2344 = vsub.s32 0, %v2343
        %v2345 = vrot.slane %v2328, %v2344
        %v2347 = vmul.f32 %v2340, %v2345
        %v2349 = vlaneseq
        %v2350 = vshrl.u32 %v2349, 7
        %v2351 = vsub.s32 0, %v2350
        %v2352 = vrot.slane %v2329, %v2351
        %v2354 = vadd.f32 %v2347, %v2352
        %v2355 = vpack.c.bf16 %v2354, %v2354
        %v2356 = vld [vmem:[%s4] sm:$0xff]
        %v2357 = vld [vmem:[%s4 + $0x8] sm:$0xf]
        %v2358 = vld [vmem:[%s4 + $0xc] sm:$0xff]
        %v2359 = vld [vmem:[%s4 + $0x14] sm:$0xf]
        %v2360 = vld [vmem:[%s4 + $0x18] sm:$0xff]
        %v2361 = vld [vmem:[%s4 + $0x20] sm:$0xf]
        %v2362 = vld [vmem:[%s4 + $0x24] sm:$0xff]
        %v2363 = vld [vmem:[%s4 + $0x2c] sm:$0xf]
        %v2364 = vld [vmem:[%s4 + $0x30] sm:$0xff]
        %v2365 = vld [vmem:[%s4 + $0x38] sm:$0xf]
        %v2366 = vld [vmem:[%s4 + $0x3c] sm:$0xff]
        %v2367 = vld [vmem:[%s4 + $0x44] sm:$0xf]
        %v2368 = vld [vmem:[%s4 + $0x48] sm:$0xff]
        %v2369 = vld [vmem:[%s4 + $0x50] sm:$0xf]
        %v2370 = vld [vmem:[%s4 + $0x54] sm:$0xff]
        %v2371 = vld [vmem:[%s4 + $0x5c] sm:$0xf]
        %v2372 = vld [vmem:[%s4 + $0x60] sm:$0xff]
        %v2373 = vld [vmem:[%s4 + $0x68] sm:$0xf]
        %v2374 = vld [vmem:[%s4 + $0x6c] sm:$0xff]
        %v2375 = vld [vmem:[%s4 + $0x74] sm:$0xf]
        %v2376 = vld [vmem:[%s4 + $0x78] sm:$0xff]
        %v2377 = vld [vmem:[%s4 + $0x80] sm:$0xf]
        %v2378 = vld [vmem:[%s4 + $0x84] sm:$0xff]
        %v2379 = vld [vmem:[%s4 + $0x8c] sm:$0xf]
        %v2380 = vld [vmem:[%s4 + $0x90] sm:$0xff]
        %v2381 = vld [vmem:[%s4 + $0x98] sm:$0xf]
        %v2382 = vld [vmem:[%s4 + $0x9c] sm:$0xff]
        %v2383 = vld [vmem:[%s4 + $0xa4] sm:$0xf]
        %v2384 = vld [vmem:[%s4 + $0xa8] sm:$0xff]
        %v2385 = vld [vmem:[%s4 + $0xb0] sm:$0xf]
        %v2386 = vld [vmem:[%s4 + $0xb4] sm:$0xff]
        %v2387 = vld [vmem:[%s4 + $0xbc] sm:$0xf]
        %v2388 = vld [vmem:[#allocation5] sm:$0x7]
        %v2390 = vlaneseq
        %v2391 = vshrl.u32 %v2390, 7
        %v2392 = vsub.s32 0, %v2391
        %v2393 = vrot.slane %v2388, %v2392
        %v2394 = vlaneseq
        %v2395 = vshrl.u32 %v2394, 7
        %v2396 = vsub.s32 1, %v2395
        %v2397 = vrot.slane %v2388, %v2396
        %v2398 = vlaneseq
        %v2399 = vshrl.u32 %v2398, 7
        %v2400 = vsub.s32 2, %v2399
        %v2401 = vrot.slane %v2388, %v2400
        %v2437 = vunpack.c.l.b16 %v2356
        %v2438 = vunpack.c.h.b16 %v2356
        %v2439 = vunpack.c.l.b16 %v2357
        %v2440 = vunpack.c.l.b16 %v2358
        %v2441 = vunpack.c.h.b16 %v2358
        %v2442 = vunpack.c.l.b16 %v2359
        %v2443 = vunpack.c.l.b16 %v2360
        %v2444 = vunpack.c.h.b16 %v2360
        %v2445 = vunpack.c.l.b16 %v2361
        %v2446 = vunpack.c.l.b16 %v2362
        %v2447 = vunpack.c.h.b16 %v2362
        %v2448 = vunpack.c.l.b16 %v2363
        %v2449 = vunpack.c.l.b16 %v2364
        %v2450 = vunpack.c.h.b16 %v2364
        %v2451 = vunpack.c.l.b16 %v2365
        %v2452 = vunpack.c.l.b16 %v2366
        %v2453 = vunpack.c.h.b16 %v2366
        %v2454 = vunpack.c.l.b16 %v2367
        %v2455 = vunpack.c.l.b16 %v2368
        %v2456 = vunpack.c.h.b16 %v2368
        %v2457 = vunpack.c.l.b16 %v2369
        %v2458 = vunpack.c.l.b16 %v2370
        %v2459 = vunpack.c.h.b16 %v2370
        %v2460 = vunpack.c.l.b16 %v2371
        %v2461 = vunpack.c.l.b16 %v2372
        %v2462 = vunpack.c.h.b16 %v2372
        %v2463 = vunpack.c.l.b16 %v2373
        %v2464 = vunpack.c.l.b16 %v2374
        %v2465 = vunpack.c.h.b16 %v2374
        %v2466 = vunpack.c.l.b16 %v2375
        %v2467 = vunpack.c.l.b16 %v2376
        %v2468 = vunpack.c.h.b16 %v2376
        %v2469 = vunpack.c.l.b16 %v2377
        %v2470 = vunpack.c.l.b16 %v2378
        %v2471 = vunpack.c.h.b16 %v2378
        %v2472 = vunpack.c.l.b16 %v2379
        %v2473 = vunpack.c.l.b16 %v2380
        %v2474 = vunpack.c.h.b16 %v2380
        %v2475 = vunpack.c.l.b16 %v2381
        %v2476 = vunpack.c.l.b16 %v2382
        %v2477 = vunpack.c.h.b16 %v2382
        %v2478 = vunpack.c.l.b16 %v2383
        %v2479 = vunpack.c.l.b16 %v2384
        %v2480 = vunpack.c.h.b16 %v2384
        %v2481 = vunpack.c.l.b16 %v2385
        %v2482 = vunpack.c.l.b16 %v2386
        %v2483 = vunpack.c.h.b16 %v2386
        %v2484 = vunpack.c.l.b16 %v2387
        %v2485 = vpack.c.b16 %v2440, %v2437
        %v2486 = vpack.c.b16 %v2441, %v2438
        %v2487 = vpack.c.b16 %v2442, %v2439
        %v2488 = vpack.c.b16 %v2446, %v2443
        %v2489 = vpack.c.b16 %v2447, %v2444
        %v2490 = vpack.c.b16 %v2448, %v2445
        %v2491 = vpack.c.b16 %v2452, %v2449
        %v2492 = vpack.c.b16 %v2453, %v2450
        %v2493 = vpack.c.b16 %v2454, %v2451
        %v2494 = vpack.c.b16 %v2458, %v2455
        %v2495 = vpack.c.b16 %v2459, %v2456
        %v2496 = vpack.c.b16 %v2460, %v2457
        %v2497 = vpack.c.b16 %v2464, %v2461
        %v2498 = vpack.c.b16 %v2465, %v2462
        %v2499 = vpack.c.b16 %v2466, %v2463
        %v2500 = vpack.c.b16 %v2470, %v2467
        %v2501 = vpack.c.b16 %v2471, %v2468
        %v2502 = vpack.c.b16 %v2472, %v2469
        %v2503 = vpack.c.b16 %v2476, %v2473
        %v2504 = vpack.c.b16 %v2477, %v2474
        %v2505 = vpack.c.b16 %v2478, %v2475
        %v2506 = vpack.c.b16 %v2482, %v2479
        %v2507 = vpack.c.b16 %v2483, %v2480
        %v2508 = vpack.c.b16 %v2484, %v2481
        %2533 = vmatprep.subr.bf16.mxu0 %v2486
        %2534 = vmatpush1.bf16.msra.mxu0 %v2485
        %2535 = vmatprep.subr.bf16.mxu0 %v2489
        %2536 = vmatpush1.bf16.msra.mxu0 %v2488
        %2537 = vmatprep.subr.bf16.mxu0 %v2492
        %2538 = vmatpush1.bf16.msra.mxu0 %v2491
        %2539 = vmatprep.subr.bf16.mxu0 %v2495
        %2540 = vmatpush1.bf16.msra.mxu0 %v2494
        %2541 = vmatprep.subr.bf16.mxu0 %v2498
        %2542 = vmatpush1.bf16.msra.mxu0 %v2497
        %2543 = vmatprep.subr.bf16.mxu0 %v2501
        %2544 = vmatpush1.bf16.msra.mxu0 %v2500
        %2545 = vmatprep.subr.bf16.mxu0 %v2504
        %2546 = vmatpush1.bf16.msra.mxu0 %v2503
        %2547 = vmatprep.subr.bf16.mxu0 %v2507
        %2548 = vmatpush1.bf16.msra.mxu0 %v2506
        %2549 = vmatprep.subr.bf16.mxu0 0
        %2550 = vmatpush1.bf16.msra.mxu0 0
        %2551 = vmatprep.subr.bf16.mxu0 0
        %2552 = vmatpush1.bf16.msra.mxu0 0
        %2553 = vmatprep.subr.bf16.mxu0 0
        %2554 = vmatpush1.bf16.msra.mxu0 0
        %2555 = vmatprep.subr.bf16.mxu0 0
        %2556 = vmatpush1.bf16.msra.mxu0 0
        %2557 = vmatprep.subr.bf16.mxu0 0
        %2558 = vmatpush1.bf16.msra.mxu0 0
        %2559 = vmatprep.subr.bf16.mxu0 0
        %2560 = vmatpush1.bf16.msra.mxu0 0
        %2561 = vmatprep.subr.bf16.mxu0 0
        %2562 = vmatpush1.bf16.msra.mxu0 0
        %2563 = vmatprep.subr.bf16.mxu0 0
        %2564 = vmatpush1.bf16.msra.mxu0 0
        %2565 = vmatprep.mubr.bf16.mxu0 0
        %2566 = vmatmul.mubr.bf16.gmra.mrb[0].mxu0 %v2355
        %v2567 = vpop.f32.mrb[0].mxu0
        %v2568 = vadd.f32 %v2393, %v2567
        %v2569 = vpop.f32.mrb[0].mxu0
        %v2570 = vadd.f32 %v2397, %v2569
        %v2571 = vpop.f32.mrb[0].mxu0
        %v2572 = vpop.f32.mrb[0].mxu0
        %2573 = vdwg.mxu0
        %2574 = vmatprep.subr.bf16.mxu0 0
        %2575 = vmatpush1.bf16.msra.mxu0 %v2487
        %2576 = vmatprep.subr.bf16.mxu0 0
        %2577 = vmatpush1.bf16.msra.mxu0 %v2490
        %2578 = vmatprep.subr.bf16.mxu0 0
        %2579 = vmatpush1.bf16.msra.mxu0 %v2493
        %2580 = vmatprep.subr.bf16.mxu0 0
        %2581 = vmatpush1.bf16.msra.mxu0 %v2496
        %2582 = vmatprep.subr.bf16.mxu0 0
        %2583 = vmatpush1.bf16.msra.mxu0 %v2499
        %2584 = vmatprep.subr.bf16.mxu0 0
        %2585 = vmatpush1.bf16.msra.mxu0 %v2502
        %2586 = vmatprep.subr.bf16.mxu0 0
        %2587 = vmatpush1.bf16.msra.mxu0 %v2505
        %2588 = vmatprep.subr.bf16.mxu0 0
        %2589 = vmatpush1.bf16.msra.mxu0 %v2508
        %2590 = vmatprep.subr.bf16.mxu0 0
        %2591 = vmatpush1.bf16.msra.mxu0 0
        %2592 = vmatprep.subr.bf16.mxu0 0
        %2593 = vmatpush1.bf16.msra.mxu0 0
        %2594 = vmatprep.subr.bf16.mxu0 0
        %2595 = vmatpush1.bf16.msra.mxu0 0
        %2596 = vmatprep.subr.bf16.mxu0 0
        %2597 = vmatpush1.bf16.msra.mxu0 0
        %2598 = vmatprep.subr.bf16.mxu0 0
        %2599 = vmatpush1.bf16.msra.mxu0 0
        %2600 = vmatprep.subr.bf16.mxu0 0
        %2601 = vmatpush1.bf16.msra.mxu0 0
        %2602 = vmatprep.subr.bf16.mxu0 0
        %2603 = vmatpush1.bf16.msra.mxu0 0
        %2604 = vmatprep.subr.bf16.mxu0 0
        %2605 = vmatpush1.bf16.msra.mxu0 0
        %2606 = vmatprep.mubr.bf16.mxu0 0
        %2607 = vmatmul.mubr.bf16.gmra.mrb[0].mxu0 %v2355
        %v2608 = vpop.f32.mrb[0].mxu0
        %v2609 = vadd.f32 %v2401, %v2608
        %v2610 = vpop.f32.mrb[0].mxu0
        %v2611 = vpop.f32.mrb[0].mxu0
        %v2612 = vpop.f32.mrb[0].mxu0
        %2613 = vdwg.mxu0
        %v2614 = vpack.c.bf16 %v2568, %v2568
        %v2615 = vpack.c.bf16 %v2570, %v2570
        %v2616 = vpack.c.bf16 %v2609, %v2609
        %v2618 = vshrl.u32 %v2614, 16
        %v2620 = vrot.slane %v2618, 3
        %v2622 = vsel %vm1042, %v2620, 0
        %v2625 = vsel %vm1042, %v2615, 0
        %2627 = vmatprep.subr.bf16.mxu0 0
        %2628 = vmatpush1.bf16.xpose.msra.mxu0 %v2625
        %2629 = vmatprep.subr.bf16.mxu0 0
        %2630 = vmatpush1.bf16.xpose.msra.mxu0 0
        %2631 = vmatprep.subr.bf16.mxu0 0
        %2632 = vmatpush1.bf16.xpose.msra.mxu0 0
        %2633 = vmatprep.subr.bf16.mxu0 0
        %2634 = vmatpush1.bf16.xpose.msra.mxu0 0
        %2635 = vmatprep.subr.bf16.mxu0 0
        %2636 = vmatpush1.bf16.xpose.msra.mxu0 0
        %2637 = vmatprep.subr.bf16.mxu0 0
        %2638 = vmatpush1.bf16.xpose.msra.mxu0 0
        %2639 = vmatprep.subr.bf16.mxu0 0
        %2640 = vmatpush1.bf16.xpose.msra.mxu0 0
        %2641 = vmatprep.subr.bf16.mxu0 0
        %2642 = vmatpush1.bf16.xpose.msra.mxu0 0
        %2643 = vmatprep.subr.bf16.mxu0 0
        %2644 = vmatpush1.bf16.xpose.msra.mxu0 0
        %2645 = vmatprep.subr.bf16.mxu0 0
        %2646 = vmatpush1.bf16.xpose.msra.mxu0 0
        %2647 = vmatprep.subr.bf16.mxu0 0
        %2648 = vmatpush1.bf16.xpose.msra.mxu0 0
        %2649 = vmatprep.subr.bf16.mxu0 0
        %2650 = vmatpush1.bf16.xpose.msra.mxu0 0
        %2651 = vmatprep.subr.bf16.mxu0 0
        %2652 = vmatpush1.bf16.xpose.msra.mxu0 0
        %2653 = vmatprep.subr.bf16.mxu0 0
        %2654 = vmatpush1.bf16.xpose.msra.mxu0 0
        %2655 = vmatprep.subr.bf16.mxu0 0
        %2656 = vmatpush1.bf16.xpose.msra.mxu0 0
        %2657 = vmatprep.subr.bf16.mxu0 0
        %2658 = vmatpush1.bf16.xpose.msra.mxu0 0
        %2659 = vmatprep.mubr.bf16.mxu0 0
        %2660 = vmatmul.mubr.bf16.gmra.mrb[0].mxu0 %v2622
        %v2661 = vpop.f32.mrb[0].mxu0
        %v2662 = vadd.f32 0.0, %v2661
        %v2663 = vpop.f32.mrb[0].mxu0
        %v2664 = vpop.f32.mrb[0].mxu0
        %v2665 = vpop.f32.mrb[0].mxu0
        %2666 = vdwg.mxu0
        %v2667 = vmul.f32 %v2662, 0.17677669
        %v2668 = vadd.f32 %v2667, %v744
        %vm2669 = vcmask 57344
        %v2670 = vsel %vm2669, %v2668, -inf
        %2671 = vmax.xlane.f32.xlu0 %v2670
        %v2672 = vpop.xlane.xlu0 %2671
        %v2673 = vsub.f32 %v2668, %v2672
        %v2674 = vmul.f32 %v2673, 1.442695
        %v2675 = vpow.pop %v2674
        %v2676 = vsel %vm2669, %v2675, 0.0
        %2677 = vadd.xlane.f32.xlu0 %v2676
        %v2678 = vpop.xlane.xlu0 %2677
        %v2679 = vrcp.pop %v2678
        %v2680 = vmul.f32 %v2675, %v2679
        %v2681 = vpack.c.bf16 %v2680, %v2680
        %v2683 = vsel %vm1091, %v2681, 0
        %v2686 = vsel %vm1107, %v2616, 0
        %2688 = vmatprep.subr.bf16.mxu0 0
        %2689 = vmatpush1.bf16.msra.mxu0 %v2686
        %2690 = vmatprep.subr.bf16.mxu0 0
        %2691 = vmatpush1.bf16.msra.mxu0 0
        %2692 = vmatprep.subr.bf16.mxu0 0
        %2693 = vmatpush1.bf16.msra.mxu0 0
        %2694 = vmatprep.subr.bf16.mxu0 0
        %2695 = vmatpush1.bf16.msra.mxu0 0
        %2696 = vmatprep.subr.bf16.mxu0 0
        %2697 = vmatpush1.bf16.msra.mxu0 0
        %2698 = vmatprep.subr.bf16.mxu0 0
        %2699 = vmatpush1.bf16.msra.mxu0 0
        %2700 = vmatprep.subr.bf16.mxu0 0
        %2701 = vmatpush1.bf16.msra.mxu0 0
        %2702 = vmatprep.subr.bf16.mxu0 0
        %2703 = vmatpush1.bf16.msra.mxu0 0
        %2704 = vmatprep.subr.bf16.mxu0 0
        %2705 = vmatpush1.bf16.msra.mxu0 0
        %2706 = vmatprep.subr.bf16.mxu0 0
        %2707 = vmatpush1.bf16.msra.mxu0 0
        %2708 = vmatprep.subr.bf16.mxu0 0
        %2709 = vmatpush1.bf16.msra.mxu0 0
        %2710 = vmatprep.subr.bf16.mxu0 0
        %2711 = vmatpush1.bf16.msra.mxu0 0
        %2712 = vmatprep.subr.bf16.mxu0 0
        %2713 = vmatpush1.bf16.msra.mxu0 0
        %2714 = vmatprep.subr.bf16.mxu0 0
        %2715 = vmatpush1.bf16.msra.mxu0 0
        %2716 = vmatprep.subr.bf16.mxu0 0
        %2717 = vmatpush1.bf16.msra.mxu0 0
        %2718 = vmatprep.subr.bf16.mxu0 0
        %2719 = vmatpush1.bf16.msra.mxu0 0
        %2720 = vmatprep.mubr.bf16.mxu0 0
        %2721 = vmatmul.mubr.bf16.gmra.mrb[0].mxu0 %v2683
        %v2722 = vpop.f32.mrb[0].mxu0
        %v2723 = vadd.f32 0.0, %v2722
        %v2724 = vpop.f32.mrb[0].mxu0
        %v2725 = vpop.f32.mrb[0].mxu0
        %v2726 = vpop.f32.mrb[0].mxu0
        %2727 = vdwg.mxu0
        %2728 = vrot.lane.b32.xlu0 %v2620, 96
        %v2729 = vpop.permute.xlu0 %2728
        %2731 = vrot.lane.b32.xlu0 %v2615, 96
        %v2732 = vpop.permute.xlu0 %2731
        %v2734 = vsel %vm1042, %v2729, 0
        %v2737 = vsel %vm1042, %v2732, 0
        %2739 = vmatprep.subr.bf16.mxu0 0
        %2740 = vmatpush1.bf16.xpose.msra.mxu0 %v2737
        %2741 = vmatprep.subr.bf16.mxu0 0
        %2742 = vmatpush1.bf16.xpose.msra.mxu0 0
        %2743 = vmatprep.subr.bf16.mxu0 0
        %2744 = vmatpush1.bf16.xpose.msra.mxu0 0
        %2745 = vmatprep.subr.bf16.mxu0 0
        %2746 = vmatpush1.bf16.xpose.msra.mxu0 0
        %2747 = vmatprep.subr.bf16.mxu0 0
        %2748 = vmatpush1.bf16.xpose.msra.mxu0 0
        %2749 = vmatprep.subr.bf16.mxu0 0
        %2750 = vmatpush1.bf16.xpose.msra.mxu0 0
        %2751 = vmatprep.subr.bf16.mxu0 0
        %2752 = vmatpush1.bf16.xpose.msra.mxu0 0
        %2753 = vmatprep.subr.bf16.mxu0 0
        %2754 = vmatpush1.bf16.xpose.msra.mxu0 0
        %2755 = vmatprep.subr.bf16.mxu0 0
        %2756 = vmatpush1.bf16.xpose.msra.mxu0 0
        %2757 = vmatprep.subr.bf16.mxu0 0
        %2758 = vmatpush1.bf16.xpose.msra.mxu0 0
        %2759 = vmatprep.subr.bf16.mxu0 0
        %2760 = vmatpush1.bf16.xpose.msra.mxu0 0
        %2761 = vmatprep.subr.bf16.mxu0 0
        %2762 = vmatpush1.bf16.xpose.msra.mxu0 0
        %2763 = vmatprep.subr.bf16.mxu0 0
        %2764 = vmatpush1.bf16.xpose.msra.mxu0 0
        %2765 = vmatprep.subr.bf16.mxu0 0
        %2766 = vmatpush1.bf16.xpose.msra.mxu0 0
        %2767 = vmatprep.subr.bf16.mxu0 0
        %2768 = vmatpush1.bf16.xpose.msra.mxu0 0
        %2769 = vmatprep.subr.bf16.mxu0 0
        %2770 = vmatpush1.bf16.xpose.msra.mxu0 0
        %2771 = vmatprep.mubr.bf16.mxu0 0
        %2772 = vmatmul.mubr.bf16.gmra.mrb[0].mxu0 %v2734
        %v2773 = vpop.f32.mrb[0].mxu0
        %v2774 = vadd.f32 0.0, %v2773
        %v2775 = vpop.f32.mrb[0].mxu0
        %v2776 = vpop.f32.mrb[0].mxu0
        %v2777 = vpop.f32.mrb[0].mxu0
        %2778 = vdwg.mxu0
        %v2779 = vmul.f32 %v2774, 0.17677669
        %v2780 = vadd.f32 %v2779, %v744
        %v2781 = vsel %vm2669, %v2780, -inf
        %2782 = vmax.xlane.f32.xlu0 %v2781
        %v2783 = vpop.xlane.xlu0 %2782
        %v2784 = vsub.f32 %v2780, %v2783
        %v2785 = vmul.f32 %v2784, 1.442695
        %v2786 = vpow.pop %v2785
        %v2787 = vsel %vm2669, %v2786, 0.0
        %2788 = vadd.xlane.f32.xlu0 %v2787
        %v2789 = vpop.xlane.xlu0 %2788
        %v2790 = vrcp.pop %v2789
        %v2791 = vmul.f32 %v2786, %v2790
        %v2792 = vpack.c.bf16 %v2791, %v2791
        %2794 = vrot.lane.b32.xlu0 %v2616, 96
        %v2795 = vpop.permute.xlu0 %2794
        %v2797 = vsel %vm1091, %v2792, 0
        %v2800 = vsel %vm1107, %v2795, 0
        %2802 = vmatprep.subr.bf16.mxu0 0
        %2803 = vmatpush1.bf16.msra.mxu0 %v2800
        %2804 = vmatprep.subr.bf16.mxu0 0
        %2805 = vmatpush1.bf16.msra.mxu0 0
        %2806 = vmatprep.subr.bf16.mxu0 0
        %2807 = vmatpush1.bf16.msra.mxu0 0
        %2808 = vmatprep.subr.bf16.mxu0 0
        %2809 = vmatpush1.bf16.msra.mxu0 0
        %2810 = vmatprep.subr.bf16.mxu0 0
        %2811 = vmatpush1.bf16.msra.mxu0 0
        %2812 = vmatprep.subr.bf16.mxu0 0
        %2813 = vmatpush1.bf16.msra.mxu0 0
        %2814 = vmatprep.subr.bf16.mxu0 0
        %2815 = vmatpush1.bf16.msra.mxu0 0
        %2816 = vmatprep.subr.bf16.mxu0 0
        %2817 = vmatpush1.bf16.msra.mxu0 0
        %2818 = vmatprep.subr.bf16.mxu0 0
        %2819 = vmatpush1.bf16.msra.mxu0 0
        %2820 = vmatprep.subr.bf16.mxu0 0
        %2821 = vmatpush1.bf16.msra.mxu0 0
        %2822 = vmatprep.subr.bf16.mxu0 0
        %2823 = vmatpush1.bf16.msra.mxu0 0
        %2824 = vmatprep.subr.bf16.mxu0 0
        %2825 = vmatpush1.bf16.msra.mxu0 0
        %2826 = vmatprep.subr.bf16.mxu0 0
        %2827 = vmatpush1.bf16.msra.mxu0 0
        %2828 = vmatprep.subr.bf16.mxu0 0
        %2829 = vmatpush1.bf16.msra.mxu0 0
        %2830 = vmatprep.subr.bf16.mxu0 0
        %2831 = vmatpush1.bf16.msra.mxu0 0
        %2832 = vmatprep.subr.bf16.mxu0 0
        %2833 = vmatpush1.bf16.msra.mxu0 0
        %2834 = vmatprep.mubr.bf16.mxu0 0
        %2835 = vmatmul.mubr.bf16.gmra.mrb[0].mxu0 %v2797
        %v2836 = vpop.f32.mrb[0].mxu0
        %v2837 = vadd.f32 0.0, %v2836
        %v2838 = vpop.f32.mrb[0].mxu0
        %v2839 = vpop.f32.mrb[0].mxu0
        %v2840 = vpop.f32.mrb[0].mxu0
        %2841 = vdwg.mxu0
        %2842 = vrot.lane.b32.xlu0 %v2620, 64
        %v2843 = vpop.permute.xlu0 %2842
        %2844 = vrot.lane.b32.xlu0 %v2615, 64
        %v2845 = vpop.permute.xlu0 %2844
        %v2847 = vsel %vm1042, %v2843, 0
        %v2850 = vsel %vm1042, %v2845, 0
        %2852 = vmatprep.subr.bf16.mxu0 0
        %2853 = vmatpush1.bf16.xpose.msra.mxu0 %v2850
        %2854 = vmatprep.subr.bf16.mxu0 0
        %2855 = vmatpush1.bf16.xpose.msra.mxu0 0
        %2856 = vmatprep.subr.bf16.mxu0 0
        %2857 = vmatpush1.bf16.xpose.msra.mxu0 0
        %2858 = vmatprep.subr.bf16.mxu0 0
        %2859 = vmatpush1.bf16.xpose.msra.mxu0 0
        %2860 = vmatprep.subr.bf16.mxu0 0
        %2861 = vmatpush1.bf16.xpose.msra.mxu0 0
        %2862 = vmatprep.subr.bf16.mxu0 0
        %2863 = vmatpush1.bf16.xpose.msra.mxu0 0
        %2864 = vmatprep.subr.bf16.mxu0 0
        %2865 = vmatpush1.bf16.xpose.msra.mxu0 0
        %2866 = vmatprep.subr.bf16.mxu0 0
        %2867 = vmatpush1.bf16.xpose.msra.mxu0 0
        %2868 = vmatprep.subr.bf16.mxu0 0
        %2869 = vmatpush1.bf16.xpose.msra.mxu0 0
        %2870 = vmatprep.subr.bf16.mxu0 0
        %2871 = vmatpush1.bf16.xpose.msra.mxu0 0
        %2872 = vmatprep.subr.bf16.mxu0 0
        %2873 = vmatpush1.bf16.xpose.msra.mxu0 0
        %2874 = vmatprep.subr.bf16.mxu0 0
        %2875 = vmatpush1.bf16.xpose.msra.mxu0 0
        %2876 = vmatprep.subr.bf16.mxu0 0
        %2877 = vmatpush1.bf16.xpose.msra.mxu0 0
        %2878 = vmatprep.subr.bf16.mxu0 0
        %2879 = vmatpush1.bf16.xpose.msra.mxu0 0
        %2880 = vmatprep.subr.bf16.mxu0 0
        %2881 = vmatpush1.bf16.xpose.msra.mxu0 0
        %2882 = vmatprep.subr.bf16.mxu0 0
        %2883 = vmatpush1.bf16.xpose.msra.mxu0 0
        %2884 = vmatprep.mubr.bf16.mxu0 0
        %2885 = vmatmul.mubr.bf16.gmra.mrb[0].mxu0 %v2847
        %v2886 = vpop.f32.mrb[0].mxu0
        %v2887 = vadd.f32 0.0, %v2886
        %v2888 = vpop.f32.mrb[0].mxu0
        %v2889 = vpop.f32.mrb[0].mxu0
        %v2890 = vpop.f32.mrb[0].mxu0
        %2891 = vdwg.mxu0
        %v2892 = vmul.f32 %v2887, 0.17677669
        %v2893 = vadd.f32 %v2892, %v744
        %v2894 = vsel %vm2669, %v2893, -inf
        %2895 = vmax.xlane.f32.xlu0 %v2894
        %v2896 = vpop.xlane.xlu0 %2895
        %v2897 = vsub.f32 %v2893, %v2896
        %v2898 = vmul.f32 %v2897, 1.442695
        %v2899 = vpow.pop %v2898
        %v2900 = vsel %vm2669, %v2899, 0.0
        %2901 = vadd.xlane.f32.xlu0 %v2900
        %v2902 = vpop.xlane.xlu0 %2901
        %v2903 = vrcp.pop %v2902
        %v2904 = vmul.f32 %v2899, %v2903
        %v2905 = vpack.c.bf16 %v2904, %v2904
        %2906 = vrot.lane.b32.xlu0 %v2616, 64
        %v2907 = vpop.permute.xlu0 %2906
        %v2909 = vsel %vm1091, %v2905, 0
        %v2912 = vsel %vm1107, %v2907, 0
        %2914 = vmatprep.subr.bf16.mxu0 0
        %2915 = vmatpush1.bf16.msra.mxu0 %v2912
        %2916 = vmatprep.subr.bf16.mxu0 0
        %2917 = vmatpush1.bf16.msra.mxu0 0
        %2918 = vmatprep.subr.bf16.mxu0 0
        %2919 = vmatpush1.bf16.msra.mxu0 0
        %2920 = vmatprep.subr.bf16.mxu0 0
        %2921 = vmatpush1.bf16.msra.mxu0 0
        %2922 = vmatprep.subr.bf16.mxu0 0
        %2923 = vmatpush1.bf16.msra.mxu0 0
        %2924 = vmatprep.subr.bf16.mxu0 0
        %2925 = vmatpush1.bf16.msra.mxu0 0
        %2926 = vmatprep.subr.bf16.mxu0 0
        %2927 = vmatpush1.bf16.msra.mxu0 0
        %2928 = vmatprep.subr.bf16.mxu0 0
        %2929 = vmatpush1.bf16.msra.mxu0 0
        %2930 = vmatprep.subr.bf16.mxu0 0
        %2931 = vmatpush1.bf16.msra.mxu0 0
        %2932 = vmatprep.subr.bf16.mxu0 0
        %2933 = vmatpush1.bf16.msra.mxu0 0
        %2934 = vmatprep.subr.bf16.mxu0 0
        %2935 = vmatpush1.bf16.msra.mxu0 0
        %2936 = vmatprep.subr.bf16.mxu0 0
        %2937 = vmatpush1.bf16.msra.mxu0 0
        %2938 = vmatprep.subr.bf16.mxu0 0
        %2939 = vmatpush1.bf16.msra.mxu0 0
        %2940 = vmatprep.subr.bf16.mxu0 0
        %2941 = vmatpush1.bf16.msra.mxu0 0
        %2942 = vmatprep.subr.bf16.mxu0 0
        %2943 = vmatpush1.bf16.msra.mxu0 0
        %2944 = vmatprep.subr.bf16.mxu0 0
        %2945 = vmatpush1.bf16.msra.mxu0 0
        %2946 = vmatprep.mubr.bf16.mxu0 0
        %2947 = vmatmul.mubr.bf16.gmra.mrb[0].mxu0 %v2909
        %v2948 = vpop.f32.mrb[0].mxu0
        %v2949 = vadd.f32 0.0, %v2948
        %v2950 = vpop.f32.mrb[0].mxu0
        %v2951 = vpop.f32.mrb[0].mxu0
        %v2952 = vpop.f32.mrb[0].mxu0
        %2953 = vdwg.mxu0
        %2954 = vrot.lane.b32.xlu0 %v2620, 32
        %v2955 = vpop.permute.xlu0 %2954
        %2956 = vrot.lane.b32.xlu0 %v2615, 32
        %v2957 = vpop.permute.xlu0 %2956
        %v2959 = vsel %vm1042, %v2955, 0
        %v2962 = vsel %vm1042, %v2957, 0
        %2964 = vmatprep.subr.bf16.mxu0 0
        %2965 = vmatpush1.bf16.xpose.msra.mxu0 %v2962
        %2966 = vmatprep.subr.bf16.mxu0 0
        %2967 = vmatpush1.bf16.xpose.msra.mxu0 0
        %2968 = vmatprep.subr.bf16.mxu0 0
        %2969 = vmatpush1.bf16.xpose.msra.mxu0 0
        %2970 = vmatprep.subr.bf16.mxu0 0
        %2971 = vmatpush1.bf16.xpose.msra.mxu0 0
        %2972 = vmatprep.subr.bf16.mxu0 0
        %2973 = vmatpush1.bf16.xpose.msra.mxu0 0
        %2974 = vmatprep.subr.bf16.mxu0 0
        %2975 = vmatpush1.bf16.xpose.msra.mxu0 0
        %2976 = vmatprep.subr.bf16.mxu0 0
        %2977 = vmatpush1.bf16.xpose.msra.mxu0 0
        %2978 = vmatprep.subr.bf16.mxu0 0
        %2979 = vmatpush1.bf16.xpose.msra.mxu0 0
        %2980 = vmatprep.subr.bf16.mxu0 0
        %2981 = vmatpush1.bf16.xpose.msra.mxu0 0
        %2982 = vmatprep.subr.bf16.mxu0 0
        %2983 = vmatpush1.bf16.xpose.msra.mxu0 0
        %2984 = vmatprep.subr.bf16.mxu0 0
        %2985 = vmatpush1.bf16.xpose.msra.mxu0 0
        %2986 = vmatprep.subr.bf16.mxu0 0
        %2987 = vmatpush1.bf16.xpose.msra.mxu0 0
        %2988 = vmatprep.subr.bf16.mxu0 0
        %2989 = vmatpush1.bf16.xpose.msra.mxu0 0
        %2990 = vmatprep.subr.bf16.mxu0 0
        %2991 = vmatpush1.bf16.xpose.msra.mxu0 0
        %2992 = vmatprep.subr.bf16.mxu0 0
        %2993 = vmatpush1.bf16.xpose.msra.mxu0 0
        %2994 = vmatprep.subr.bf16.mxu0 0
        %2995 = vmatpush1.bf16.xpose.msra.mxu0 0
        %2996 = vmatprep.mubr.bf16.mxu0 0
        %2997 = vmatmul.mubr.bf16.gmra.mrb[0].mxu0 %v2959
        %v2998 = vpop.f32.mrb[0].mxu0
        %v2999 = vadd.f32 0.0, %v2998
        %v3000 = vpop.f32.mrb[0].mxu0
        %v3001 = vpop.f32.mrb[0].mxu0
        %v3002 = vpop.f32.mrb[0].mxu0
        %3003 = vdwg.mxu0
        %v3004 = vmul.f32 %v2999, 0.17677669
        %v3005 = vadd.f32 %v3004, %v744
        %v3006 = vsel %vm2669, %v3005, -inf
        %3007 = vmax.xlane.f32.xlu0 %v3006
        %v3008 = vpop.xlane.xlu0 %3007
        %v3009 = vsub.f32 %v3005, %v3008
        %v3010 = vmul.f32 %v3009, 1.442695
        %v3011 = vpow.pop %v3010
        %v3012 = vsel %vm2669, %v3011, 0.0
        %3013 = vadd.xlane.f32.xlu0 %v3012
        %v3014 = vpop.xlane.xlu0 %3013
        %v3015 = vrcp.pop %v3014
        %v3016 = vmul.f32 %v3011, %v3015
        %v3017 = vpack.c.bf16 %v3016, %v3016
        %3018 = vrot.lane.b32.xlu0 %v2616, 32
        %v3019 = vpop.permute.xlu0 %3018
        %v3021 = vsel %vm1091, %v3017, 0
        %v3024 = vsel %vm1107, %v3019, 0
        %3026 = vmatprep.subr.bf16.mxu0 0
        %3027 = vmatpush1.bf16.msra.mxu0 %v3024
        %3028 = vmatprep.subr.bf16.mxu0 0
        %3029 = vmatpush1.bf16.msra.mxu0 0
        %3030 = vmatprep.subr.bf16.mxu0 0
        %3031 = vmatpush1.bf16.msra.mxu0 0
        %3032 = vmatprep.subr.bf16.mxu0 0
        %3033 = vmatpush1.bf16.msra.mxu0 0
        %3034 = vmatprep.subr.bf16.mxu0 0
        %3035 = vmatpush1.bf16.msra.mxu0 0
        %3036 = vmatprep.subr.bf16.mxu0 0
        %3037 = vmatpush1.bf16.msra.mxu0 0
        %3038 = vmatprep.subr.bf16.mxu0 0
        %3039 = vmatpush1.bf16.msra.mxu0 0
        %3040 = vmatprep.subr.bf16.mxu0 0
        %3041 = vmatpush1.bf16.msra.mxu0 0
        %3042 = vmatprep.subr.bf16.mxu0 0
        %3043 = vmatpush1.bf16.msra.mxu0 0
        %3044 = vmatprep.subr.bf16.mxu0 0
        %3045 = vmatpush1.bf16.msra.mxu0 0
        %3046 = vmatprep.subr.bf16.mxu0 0
        %3047 = vmatpush1.bf16.msra.mxu0 0
        %3048 = vmatprep.subr.bf16.mxu0 0
        %3049 = vmatpush1.bf16.msra.mxu0 0
        %3050 = vmatprep.subr.bf16.mxu0 0
        %3051 = vmatpush1.bf16.msra.mxu0 0
        %3052 = vmatprep.subr.bf16.mxu0 0
        %3053 = vmatpush1.bf16.msra.mxu0 0
        %3054 = vmatprep.subr.bf16.mxu0 0
        %3055 = vmatpush1.bf16.msra.mxu0 0
        %3056 = vmatprep.subr.bf16.mxu0 0
        %3057 = vmatpush1.bf16.msra.mxu0 0
        %3058 = vmatprep.mubr.bf16.mxu0 0
        %3059 = vmatmul.mubr.bf16.gmra.mrb[0].mxu0 %v3021
        %v3060 = vpop.f32.mrb[0].mxu0
        %v3061 = vadd.f32 0.0, %v3060
        %v3062 = vpop.f32.mrb[0].mxu0
        %v3063 = vpop.f32.mrb[0].mxu0
        %v3064 = vpop.f32.mrb[0].mxu0
        %3065 = vdwg.mxu0
        %3067 = vrot.lane.b32.xlu0 %v2837, 32
        %v3068 = vpop.permute.xlu0 %3067
        %3071 = vrot.lane.b32.xlu0 %v2949, 64
        %v3072 = vpop.permute.xlu0 %3071
        %3075 = vrot.lane.b32.xlu0 %v3061, 96
        %v3076 = vpop.permute.xlu0 %3075
        %v3078 = vsel %vm1042, %v2723, %v3068
        %v3079 = vsel %vm1503, %v3078, %v3072
        %v3080 = vsel %vm1505, %v3079, %v3076
        %v3081 = vpack.c.bf16 %v3080, %v3080
        %v3082 = vld [vmem:[#allocation7] sm:$0xf]
        %v3083 = vld [vmem:[#allocation7 + $0x4] sm:$0xf]
        %v3084 = vld [vmem:[#allocation7 + $0x8] sm:$0xf]
        %v3085 = vld [vmem:[#allocation7 + $0xc] sm:$0xf]
        %v3086 = vld [vmem:[#allocation7 + $0x10] sm:$0xf]
        %v3087 = vld [vmem:[#allocation7 + $0x14] sm:$0xf]
        %v3088 = vld [vmem:[#allocation7 + $0x18] sm:$0xf]
        %v3089 = vld [vmem:[#allocation7 + $0x1c] sm:$0xf]
        %v3090 = vld [vmem:[#allocation7 + $0x20] sm:$0xf]
        %v3091 = vld [vmem:[#allocation7 + $0x24] sm:$0xf]
        %v3092 = vld [vmem:[#allocation7 + $0x28] sm:$0xf]
        %v3093 = vld [vmem:[#allocation7 + $0x2c] sm:$0xf]
        %v3094 = vld [vmem:[#allocation7 + $0x30] sm:$0xf]
        %v3095 = vld [vmem:[#allocation7 + $0x34] sm:$0xf]
        %v3096 = vld [vmem:[#allocation7 + $0x38] sm:$0xf]
        %v3097 = vld [vmem:[#allocation7 + $0x3c] sm:$0xf]
        %v3098 = vld [vmem:[#allocation8] sm:$0x1]
        %v3115 = vunpack.c.l.b16 %v3082
        %v3116 = vunpack.c.l.b16 %v3083
        %v3117 = vunpack.c.l.b16 %v3084
        %v3118 = vunpack.c.l.b16 %v3085
        %v3119 = vunpack.c.l.b16 %v3086
        %v3120 = vunpack.c.l.b16 %v3087
        %v3121 = vunpack.c.l.b16 %v3088
        %v3122 = vunpack.c.l.b16 %v3089
        %v3123 = vunpack.c.l.b16 %v3090
        %v3124 = vunpack.c.l.b16 %v3091
        %v3125 = vunpack.c.l.b16 %v3092
        %v3126 = vunpack.c.l.b16 %v3093
        %v3127 = vunpack.c.l.b16 %v3094
        %v3128 = vunpack.c.l.b16 %v3095
        %v3129 = vunpack.c.l.b16 %v3096
        %v3130 = vunpack.c.l.b16 %v3097
        %v3131 = vpack.c.b16 %v3116, %v3115
        %v3132 = vpack.c.b16 %v3118, %v3117
        %v3133 = vpack.c.b16 %v3120, %v3119
        %v3134 = vpack.c.b16 %v3122, %v3121
        %v3135 = vpack.c.b16 %v3124, %v3123
        %v3136 = vpack.c.b16 %v3126, %v3125
        %v3137 = vpack.c.b16 %v3128, %v3127
        %v3138 = vpack.c.b16 %v3130, %v3129
        %3147 = vmatprep.subr.bf16.mxu0 0
        %3148 = vmatpush1.bf16.msra.mxu0 %v3131
        %3149 = vmatprep.subr.bf16.mxu0 0
        %3150 = vmatpush1.bf16.msra.mxu0 %v3132
        %3151 = vmatprep.subr.bf16.mxu0 0
        %3152 = vmatpush1.bf16.msra.mxu0 %v3133
        %3153 = vmatprep.subr.bf16.mxu0 0
        %3154 = vmatpush1.bf16.msra.mxu0 %v3134
        %3155 = vmatprep.subr.bf16.mxu0 0
        %3156 = vmatpush1.bf16.msra.mxu0 %v3135
        %3157 = vmatprep.subr.bf16.mxu0 0
        %3158 = vmatpush1.bf16.msra.mxu0 %v3136
        %3159 = vmatprep.subr.bf16.mxu0 0
        %3160 = vmatpush1.bf16.msra.mxu0 %v3137
        %3161 = vmatprep.subr.bf16.mxu0 0
        %3162 = vmatpush1.bf16.msra.mxu0 %v3138
        %3163 = vmatprep.subr.bf16.mxu0 0
        %3164 = vmatpush1.bf16.msra.mxu0 0
        %3165 = vmatprep.subr.bf16.mxu0 0
        %3166 = vmatpush1.bf16.msra.mxu0 0
        %3167 = vmatprep.subr.bf16.mxu0 0
        %3168 = vmatpush1.bf16.msra.mxu0 0
        %3169 = vmatprep.subr.bf16.mxu0 0
        %3170 = vmatpush1.bf16.msra.mxu0 0
        %3171 = vmatprep.subr.bf16.mxu0 0
        %3172 = vmatpush1.bf16.msra.mxu0 0
        %3173 = vmatprep.subr.bf16.mxu0 0
        %3174 = vmatpush1.bf16.msra.mxu0 0
        %3175 = vmatprep.subr.bf16.mxu0 0
        %3176 = vmatpush1.bf16.msra.mxu0 0
        %3177 = vmatprep.subr.bf16.mxu0 0
        %3178 = vmatpush1.bf16.msra.mxu0 0
        %3179 = vmatprep.mubr.bf16.mxu0 0
        %3180 = vmatmul.mubr.bf16.gmra.mrb[0].mxu0 %v3081
        %v3181 = vpop.f32.mrb[0].mxu0
        %v3182 = vadd.f32 %v3098, %v3181
        %v3183 = vpop.f32.mrb[0].mxu0
        %v3184 = vpop.f32.mrb[0].mxu0
        %v3185 = vpop.f32.mrb[0].mxu0
        %3186 = vdwg.mxu0
        %v3188 = vrot.slane %v3182, 1
        %v3190 = vadd.f32 %v2354, %v3188
        %v3191 = vld [vmem:[#allocation10] sm:$0x1]
        %v3192 = vld [vmem:[#allocation11] sm:$0x1]
        %vm3193 = vcmask 1047559
        %v3194 = vsel %vm3193, %v3190, 0.0
        %3195 = vadd.xlane.f32.xlu0 %v3194
        %v3196 = vpop.xlane.xlu0 %3195
        %v3197 = vmul.f32 %v3196, %v756
        %v3198 = vsub.f32 %v3190, %v3197
        %v3199 = vmul.f32 %v3198, %v3198
        %v3200 = vsel %vm3193, %v3199, 0.0
        %3201 = vadd.xlane.f32.xlu0 %v3200
        %v3202 = vpop.xlane.xlu0 %3201
        %v3203 = vmul.f32 %v3202, %v756
        %v3204 = vadd.f32 %v3203, 1e-12
        %v3205 = vrsqrt.pop %v3204
        %v3206 = vmul.f32 %v3198, %v3205
        %v3208 = vlaneseq
        %v3209 = vshrl.u32 %v3208, 7
        %v3210 = vsub.s32 0, %v3209
        %v3211 = vrot.slane %v3191, %v3210
        %v3213 = vmul.f32 %v3206, %v3211
        %v3215 = vlaneseq
        %v3216 = vshrl.u32 %v3215, 7
        %v3217 = vsub.s32 0, %v3216
        %v3218 = vrot.slane %v3192, %v3217
        %v3220 = vadd.f32 %v3213, %v3218
        %v3221 = vpack.c.bf16 %v3220, %v3220
        %v3222 = vld [vmem:[#allocation13] sm:$0xff]
        %v3223 = vld [vmem:[#allocation13 + $0x8] sm:$0xff]
        %v3224 = vld [vmem:[#allocation13 + $0x10] sm:$0xff]
        %v3225 = vld [vmem:[#allocation13 + $0x18] sm:$0xff]
        %v3226 = vld [vmem:[#allocation13 + $0x20] sm:$0xff]
        %v3227 = vld [vmem:[#allocation13 + $0x28] sm:$0xff]
        %v3228 = vld [vmem:[#allocation13 + $0x30] sm:$0xff]
        %v3229 = vld [vmem:[#allocation13 + $0x38] sm:$0xff]
        %v3230 = vld [vmem:[#allocation13 + $0x40] sm:$0xff]
        %v3231 = vld [vmem:[#allocation13 + $0x48] sm:$0xff]
        %v3232 = vld [vmem:[#allocation13 + $0x50] sm:$0xff]
        %v3233 = vld [vmem:[#allocation13 + $0x58] sm:$0xff]
        %v3234 = vld [vmem:[#allocation13 + $0x60] sm:$0xff]
        %v3235 = vld [vmem:[#allocation13 + $0x68] sm:$0xff]
        %v3236 = vld [vmem:[#allocation13 + $0x70] sm:$0xff]
        %v3237 = vld [vmem:[#allocation13 + $0x78] sm:$0xff]
        %v3238 = vld [vmem:[#allocation13 + $0x80] sm:$0xff]
        %v3239 = vld [vmem:[#allocation13 + $0x88] sm:$0xff]
        %v3240 = vld [vmem:[#allocation13 + $0x90] sm:$0xff]
        %v3241 = vld [vmem:[#allocation13 + $0x98] sm:$0xff]
        %v3242 = vld [vmem:[#allocation13 + $0xa0] sm:$0xff]
        %v3243 = vld [vmem:[#allocation13 + $0xa8] sm:$0xff]
        %v3244 = vld [vmem:[#allocation13 + $0xb0] sm:$0xff]
        %v3245 = vld [vmem:[#allocation13 + $0xb8] sm:$0xff]
        %v3246 = vld [vmem:[#allocation13 + $0xc0] sm:$0xff]
        %v3247 = vld [vmem:[#allocation13 + $0xc8] sm:$0xff]
        %v3248 = vld [vmem:[#allocation13 + $0xd0] sm:$0xff]
        %v3249 = vld [vmem:[#allocation13 + $0xd8] sm:$0xff]
        %v3250 = vld [vmem:[#allocation13 + $0xe0] sm:$0xff]
        %v3251 = vld [vmem:[#allocation13 + $0xe8] sm:$0xff]
        %v3252 = vld [vmem:[#allocation13 + $0xf0] sm:$0xff]
        %v3253 = vld [vmem:[#allocation13 + $0xf8] sm:$0xff]
        %v3254 = vld [vmem:[%s11] sm:$0xf]
        %v3256 = vshrl.u32 %v3221, 16
        %v3258 = vrot.slane %v3256, 3
        %v3292 = vunpack.c.l.b16 %v3222
        %v3293 = vunpack.c.h.b16 %v3222
        %v3294 = vunpack.c.l.b16 %v3223
        %v3295 = vunpack.c.h.b16 %v3223
        %v3296 = vunpack.c.l.b16 %v3224
        %v3297 = vunpack.c.h.b16 %v3224
        %v3298 = vunpack.c.l.b16 %v3225
        %v3299 = vunpack.c.h.b16 %v3225
        %v3300 = vunpack.c.l.b16 %v3226
        %v3301 = vunpack.c.h.b16 %v3226
        %v3302 = vunpack.c.l.b16 %v3227
        %v3303 = vunpack.c.h.b16 %v3227
        %v3304 = vunpack.c.l.b16 %v3228
        %v3305 = vunpack.c.h.b16 %v3228
        %v3306 = vunpack.c.l.b16 %v3229
        %v3307 = vunpack.c.h.b16 %v3229
        %v3308 = vunpack.c.l.b16 %v3230
        %v3309 = vunpack.c.h.b16 %v3230
        %v3310 = vunpack.c.l.b16 %v3231
        %v3311 = vunpack.c.h.b16 %v3231
        %v3312 = vunpack.c.l.b16 %v3232
        %v3313 = vunpack.c.h.b16 %v3232
        %v3314 = vunpack.c.l.b16 %v3233
        %v3315 = vunpack.c.h.b16 %v3233
        %v3316 = vunpack.c.l.b16 %v3234
        %v3317 = vunpack.c.h.b16 %v3234
        %v3318 = vunpack.c.l.b16 %v3235
        %v3319 = vunpack.c.h.b16 %v3235
        %v3320 = vunpack.c.l.b16 %v3236
        %v3321 = vunpack.c.h.b16 %v3236
        %v3322 = vunpack.c.l.b16 %v3237
        %v3323 = vunpack.c.h.b16 %v3237
        %v3324 = vunpack.c.l.b16 %v3238
        %v3325 = vunpack.c.h.b16 %v3238
        %v3326 = vunpack.c.l.b16 %v3239
        %v3327 = vunpack.c.h.b16 %v3239
        %v3328 = vunpack.c.l.b16 %v3240
        %v3329 = vunpack.c.h.b16 %v3240
        %v3330 = vunpack.c.l.b16 %v3241
        %v3331 = vunpack.c.h.b16 %v3241
        %v3332 = vunpack.c.l.b16 %v3242
        %v3333 = vunpack.c.h.b16 %v3242
        %v3334 = vunpack.c.l.b16 %v3243
        %v3335 = vunpack.c.h.b16 %v3243
        %v3336 = vunpack.c.l.b16 %v3244
        %v3337 = vunpack.c.h.b16 %v3244
        %v3338 = vunpack.c.l.b16 %v3245
        %v3339 = vunpack.c.h.b16 %v3245
        %v3340 = vunpack.c.l.b16 %v3246
        %v3341 = vunpack.c.h.b16 %v3246
        %v3342 = vunpack.c.l.b16 %v3247
        %v3343 = vunpack.c.h.b16 %v3247
        %v3344 = vunpack.c.l.b16 %v3248
        %v3345 = vunpack.c.h.b16 %v3248
        %v3346 = vunpack.c.l.b16 %v3249
        %v3347 = vunpack.c.h.b16 %v3249
        %v3348 = vunpack.c.l.b16 %v3250
        %v3349 = vunpack.c.h.b16 %v3250
        %v3350 = vunpack.c.l.b16 %v3251
        %v3351 = vunpack.c.h.b16 %v3251
        %v3352 = vunpack.c.l.b16 %v3252
        %v3353 = vunpack.c.h.b16 %v3252
        %v3354 = vunpack.c.l.b16 %v3253
        %v3355 = vunpack.c.h.b16 %v3253
        %v3356 = vpack.c.b16 %v3296, %v3292
        %v3357 = vpack.c.b16 %v3297, %v3293
        %v3358 = vpack.c.b16 %v3298, %v3294
        %v3359 = vpack.c.b16 %v3299, %v3295
        %v3360 = vpack.c.b16 %v3304, %v3300
        %v3361 = vpack.c.b16 %v3305, %v3301
        %v3362 = vpack.c.b16 %v3306, %v3302
        %v3363 = vpack.c.b16 %v3307, %v3303
        %v3364 = vpack.c.b16 %v3312, %v3308
        %v3365 = vpack.c.b16 %v3313, %v3309
        %v3366 = vpack.c.b16 %v3314, %v3310
        %v3367 = vpack.c.b16 %v3315, %v3311
        %v3368 = vpack.c.b16 %v3320, %v3316
        %v3369 = vpack.c.b16 %v3321, %v3317
        %v3370 = vpack.c.b16 %v3322, %v3318
        %v3371 = vpack.c.b16 %v3323, %v3319
        %v3372 = vpack.c.b16 %v3328, %v3324
        %v3373 = vpack.c.b16 %v3329, %v3325
        %v3374 = vpack.c.b16 %v3330, %v3326
        %v3375 = vpack.c.b16 %v3331, %v3327
        %v3376 = vpack.c.b16 %v3336, %v3332
        %v3377 = vpack.c.b16 %v3337, %v3333
        %v3378 = vpack.c.b16 %v3338, %v3334
        %v3379 = vpack.c.b16 %v3339, %v3335
        %v3380 = vpack.c.b16 %v3344, %v3340
        %v3381 = vpack.c.b16 %v3345, %v3341
        %v3382 = vpack.c.b16 %v3346, %v3342
        %v3383 = vpack.c.b16 %v3347, %v3343
        %v3384 = vpack.c.b16 %v3352, %v3348
        %v3385 = vpack.c.b16 %v3353, %v3349
        %v3386 = vpack.c.b16 %v3354, %v3350
        %v3387 = vpack.c.b16 %v3355, %v3351
        %v3421 = vlaneseq
        %v3422 = vshrl.u32 %v3421, 7
        %v3423 = vsub.s32 0, %v3422
        %v3424 = vrot.slane %v3254, %v3423
        %v3425 = vlaneseq
        %v3426 = vshrl.u32 %v3425, 7
        %v3427 = vsub.s32 1, %v3426
        %v3428 = vrot.slane %v3254, %v3427
        %v3429 = vlaneseq
        %v3430 = vshrl.u32 %v3429, 7
        %v3431 = vsub.s32 2, %v3430
        %v3432 = vrot.slane %v3254, %v3431
        %v3433 = vlaneseq
        %v3434 = vshrl.u32 %v3433, 7
        %v3435 = vsub.s32 3, %v3434
        %v3436 = vrot.slane %v3254, %v3435
        %3441 = vmatprep.subr.bf16.mxu0 %v3357
        %3442 = vmatpush1.bf16.msra.mxu0 %v3356
        %3443 = vmatprep.subr.bf16.mxu0 %v3361
        %3444 = vmatpush1.bf16.msra.mxu0 %v3360
        %3445 = vmatprep.subr.bf16.mxu0 %v3365
        %3446 = vmatpush1.bf16.msra.mxu0 %v3364
        %3447 = vmatprep.subr.bf16.mxu0 %v3369
        %3448 = vmatpush1.bf16.msra.mxu0 %v3368
        %3449 = vmatprep.subr.bf16.mxu0 %v3373
        %3450 = vmatpush1.bf16.msra.mxu0 %v3372
        %3451 = vmatprep.subr.bf16.mxu0 %v3377
        %3452 = vmatpush1.bf16.msra.mxu0 %v3376
        %3453 = vmatprep.subr.bf16.mxu0 %v3381
        %3454 = vmatpush1.bf16.msra.mxu0 %v3380
        %3455 = vmatprep.subr.bf16.mxu0 %v3385
        %3456 = vmatpush1.bf16.msra.mxu0 %v3384
        %3457 = vmatprep.subr.bf16.mxu0 0
        %3458 = vmatpush1.bf16.msra.mxu0 0
        %3459 = vmatprep.subr.bf16.mxu0 0
        %3460 = vmatpush1.bf16.msra.mxu0 0
        %3461 = vmatprep.subr.bf16.mxu0 0
        %3462 = vmatpush1.bf16.msra.mxu0 0
        %3463 = vmatprep.subr.bf16.mxu0 0
        %3464 = vmatpush1.bf16.msra.mxu0 0
        %3465 = vmatprep.subr.bf16.mxu0 0
        %3466 = vmatpush1.bf16.msra.mxu0 0
        %3467 = vmatprep.subr.bf16.mxu0 0
        %3468 = vmatpush1.bf16.msra.mxu0 0
        %3469 = vmatprep.subr.bf16.mxu0 0
        %3470 = vmatpush1.bf16.msra.mxu0 0
        %3471 = vmatprep.subr.bf16.mxu0 0
        %3472 = vmatpush1.bf16.msra.mxu0 0
        %3473 = vmatprep.mubr.bf16.mxu0 0
        %3474 = vmatmul.mubr.bf16.gmra.mrb[0].mxu0 %v3258
        %v3475 = vpop.f32.mrb[0].mxu0
        %v3476 = vadd.f32 %v3424, %v3475
        %v3477 = vpop.f32.mrb[0].mxu0
        %v3478 = vadd.f32 %v3428, %v3477
        %v3479 = vpop.f32.mrb[0].mxu0
        %v3480 = vpop.f32.mrb[0].mxu0
        %3481 = vdwg.mxu0
        %3482 = vmatprep.subr.bf16.mxu0 %v3359
        %3483 = vmatpush1.bf16.msra.mxu0 %v3358
        %3484 = vmatprep.subr.bf16.mxu0 %v3363
        %3485 = vmatpush1.bf16.msra.mxu0 %v3362
        %3486 = vmatprep.subr.bf16.mxu0 %v3367
        %3487 = vmatpush1.bf16.msra.mxu0 %v3366
        %3488 = vmatprep.subr.bf16.mxu0 %v3371
        %3489 = vmatpush1.bf16.msra.mxu0 %v3370
        %3490 = vmatprep.subr.bf16.mxu0 %v3375
        %3491 = vmatpush1.bf16.msra.mxu0 %v3374
        %3492 = vmatprep.subr.bf16.mxu0 %v3379
        %3493 = vmatpush1.bf16.msra.mxu0 %v3378
        %3494 = vmatprep.subr.bf16.mxu0 %v3383
        %3495 = vmatpush1.bf16.msra.mxu0 %v3382
        %3496 = vmatprep.subr.bf16.mxu0 %v3387
        %3497 = vmatpush1.bf16.msra.mxu0 %v3386
        %3498 = vmatprep.subr.bf16.mxu0 0
        %3499 = vmatpush1.bf16.msra.mxu0 0
        %3500 = vmatprep.subr.bf16.mxu0 0
        %3501 = vmatpush1.bf16.msra.mxu0 0
        %3502 = vmatprep.subr.bf16.mxu0 0
        %3503 = vmatpush1.bf16.msra.mxu0 0
        %3504 = vmatprep.subr.bf16.mxu0 0
        %3505 = vmatpush1.bf16.msra.mxu0 0
        %3506 = vmatprep.subr.bf16.mxu0 0
        %3507 = vmatpush1.bf16.msra.mxu0 0
        %3508 = vmatprep.subr.bf16.mxu0 0
        %3509 = vmatpush1.bf16.msra.mxu0 0
        %3510 = vmatprep.subr.bf16.mxu0 0
        %3511 = vmatpush1.bf16.msra.mxu0 0
        %3512 = vmatprep.subr.bf16.mxu0 0
        %3513 = vmatpush1.bf16.msra.mxu0 0
        %3514 = vmatprep.mubr.bf16.mxu0 0
        %3515 = vmatmul.mubr.bf16.gmra.mrb[0].mxu0 %v3258
        %v3516 = vpop.f32.mrb[0].mxu0
        %v3517 = vadd.f32 %v3432, %v3516
        %v3518 = vpop.f32.mrb[0].mxu0
        %v3519 = vadd.f32 %v3436, %v3518
        %v3520 = vpop.f32.mrb[0].mxu0
        %v3521 = vpop.f32.mrb[0].mxu0
        %3522 = vdwg.mxu0
        %v3523 = vmul.f32 %v3476, %v3476
        %v3524 = vmul.f32 %v3478, %v3478
        %v3525 = vmul.f32 %v3517, %v3517
        %v3526 = vmul.f32 %v3519, %v3519
        %v3527 = vmul.f32 %v3476, %v3523
        %v3528 = vmul.f32 %v3478, %v3524
        %v3529 = vmul.f32 %v3517, %v3525
        %v3530 = vmul.f32 %v3519, %v3526
        %v3531 = vmul.f32 %v3527, 0.044715
        %v3532 = vmul.f32 %v3528, 0.044715
        %v3533 = vmul.f32 %v3529, 0.044715
        %v3534 = vmul.f32 %v3530, 0.044715
        %v3535 = vadd.f32 %v3476, %v3531
        %v3536 = vadd.f32 %v3478, %v3532
        %v3537 = vadd.f32 %v3517, %v3533
        %v3538 = vadd.f32 %v3519, %v3534
        %v3539 = vmul.f32 %v3535, 0.7978846
        %v3540 = vmul.f32 %v3536, 0.7978846
        %v3541 = vmul.f32 %v3537, 0.7978846
        %v3542 = vmul.f32 %v3538, 0.7978846
        %v3543 = vtanh.pop %v3539
        %v3544 = vtanh.pop %v3540
        %v3545 = vtanh.pop %v3541
        %v3546 = vtanh.pop %v3542
        %v3547 = vadd.f32 %v3543, 1.0
        %v3548 = vadd.f32 %v3544, 1.0
        %v3549 = vadd.f32 %v3545, 1.0
        %v3550 = vadd.f32 %v3546, 1.0
        %v3551 = vmul.f32 %v3547, 0.5
        %v3552 = vmul.f32 %v3548, 0.5
        %v3553 = vmul.f32 %v3549, 0.5
        %v3554 = vmul.f32 %v3550, 0.5
        %v3555 = vmul.f32 %v3476, %v3551
        %v3556 = vmul.f32 %v3478, %v3552
        %v3557 = vmul.f32 %v3517, %v3553
        %v3558 = vmul.f32 %v3519, %v3554
        %v3559 = vpack.c.bf16 %v3555, %v3555
        %v3560 = vpack.c.bf16 %v3556, %v3556
        %v3561 = vpack.c.bf16 %v3557, %v3557
        %v3562 = vpack.c.bf16 %v3558, %v3558
        %v3563 = vld [vmem:[#allocation14] sm:$0xf]
        %v3564 = vld [vmem:[#allocation14 + $0x4] sm:$0xf]
        %v3565 = vld [vmem:[#allocation14 + $0x8] sm:$0xf]
        %v3566 = vld [vmem:[#allocation14 + $0xc] sm:$0xf]
        %v3567 = vld [vmem:[#allocation14 + $0x10] sm:$0xf]
        %v3568 = vld [vmem:[#allocation14 + $0x14] sm:$0xf]
        %v3569 = vld [vmem:[#allocation14 + $0x18] sm:$0xf]
        %v3570 = vld [vmem:[#allocation14 + $0x1c] sm:$0xf]
        %v3571 = vld [vmem:[#allocation14 + $0x20] sm:$0xf]
        %v3572 = vld [vmem:[#allocation14 + $0x24] sm:$0xf]
        %v3573 = vld [vmem:[#allocation14 + $0x28] sm:$0xf]
        %v3574 = vld [vmem:[#allocation14 + $0x2c] sm:$0xf]
        %v3575 = vld [vmem:[#allocation14 + $0x30] sm:$0xf]
        %v3576 = vld [vmem:[#allocation14 + $0x34] sm:$0xf]
        %v3577 = vld [vmem:[#allocation14 + $0x38] sm:$0xf]
        %v3578 = vld [vmem:[#allocation14 + $0x3c] sm:$0xf]
        %v3579 = vld [vmem:[#allocation14 + $0x40] sm:$0xf]
        %v3580 = vld [vmem:[#allocation14 + $0x44] sm:$0xf]
        %v3581 = vld [vmem:[#allocation14 + $0x48] sm:$0xf]
        %v3582 = vld [vmem:[#allocation14 + $0x4c] sm:$0xf]
        %v3583 = vld [vmem:[#allocation14 + $0x50] sm:$0xf]
        %v3584 = vld [vmem:[#allocation14 + $0x54] sm:$0xf]
        %v3585 = vld [vmem:[#allocation14 + $0x58] sm:$0xf]
        %v3586 = vld [vmem:[#allocation14 + $0x5c] sm:$0xf]
        %v3587 = vld [vmem:[#allocation14 + $0x60] sm:$0xf]
        %v3588 = vld [vmem:[#allocation14 + $0x64] sm:$0xf]
        %v3589 = vld [vmem:[#allocation14 + $0x68] sm:$0xf]
        %v3590 = vld [vmem:[#allocation14 + $0x6c] sm:$0xf]
        %v3591 = vld [vmem:[#allocation14 + $0x70] sm:$0xf]
        %v3592 = vld [vmem:[#allocation14 + $0x74] sm:$0xf]
        %v3593 = vld [vmem:[#allocation14 + $0x78] sm:$0xf]
        %v3594 = vld [vmem:[#allocation14 + $0x7c] sm:$0xf]
        %v3595 = vld [vmem:[#allocation14 + $0x80] sm:$0xf]
        %v3596 = vld [vmem:[#allocation14 + $0x84] sm:$0xf]
        %v3597 = vld [vmem:[#allocation14 + $0x88] sm:$0xf]
        %v3598 = vld [vmem:[#allocation14 + $0x8c] sm:$0xf]
        %v3599 = vld [vmem:[#allocation14 + $0x90] sm:$0xf]
        %v3600 = vld [vmem:[#allocation14 + $0x94] sm:$0xf]
        %v3601 = vld [vmem:[#allocation14 + $0x98] sm:$0xf]
        %v3602 = vld [vmem:[#allocation14 + $0x9c] sm:$0xf]
        %v3603 = vld [vmem:[#allocation14 + $0xa0] sm:$0xf]
        %v3604 = vld [vmem:[#allocation14 + $0xa4] sm:$0xf]
        %v3605 = vld [vmem:[#allocation14 + $0xa8] sm:$0xf]
        %v3606 = vld [vmem:[#allocation14 + $0xac] sm:$0xf]
        %v3607 = vld [vmem:[#allocation14 + $0xb0] sm:$0xf]
        %v3608 = vld [vmem:[#allocation14 + $0xb4] sm:$0xf]
        %v3609 = vld [vmem:[#allocation14 + $0xb8] sm:$0xf]
        %v3610 = vld [vmem:[#allocation14 + $0xbc] sm:$0xf]
        %v3611 = vld [vmem:[#allocation14 + $0xc0] sm:$0xf]
        %v3612 = vld [vmem:[#allocation14 + $0xc4] sm:$0xf]
        %v3613 = vld [vmem:[#allocation14 + $0xc8] sm:$0xf]
        %v3614 = vld [vmem:[#allocation14 + $0xcc] sm:$0xf]
        %v3615 = vld [vmem:[#allocation14 + $0xd0] sm:$0xf]
        %v3616 = vld [vmem:[#allocation14 + $0xd4] sm:$0xf]
        %v3617 = vld [vmem:[#allocation14 + $0xd8] sm:$0xf]
        %v3618 = vld [vmem:[#allocation14 + $0xdc] sm:$0xf]
        %v3619 = vld [vmem:[#allocation14 + $0xe0] sm:$0xf]
        %v3620 = vld [vmem:[#allocation14 + $0xe4] sm:$0xf]
        %v3621 = vld [vmem:[#allocation14 + $0xe8] sm:$0xf]
        %v3622 = vld [vmem:[#allocation14 + $0xec] sm:$0xf]
        %v3623 = vld [vmem:[#allocation14 + $0xf0] sm:$0xf]
        %v3624 = vld [vmem:[#allocation14 + $0xf4] sm:$0xf]
        %v3625 = vld [vmem:[#allocation14 + $0xf8] sm:$0xf]
        %v3626 = vld [vmem:[#allocation14 + $0xfc] sm:$0xf]
        %v3627 = vld [vmem:[#allocation16] sm:$0x1]
        %v3692 = vunpack.c.l.b16 %v3563
        %v3693 = vunpack.c.l.b16 %v3564
        %v3694 = vunpack.c.l.b16 %v3565
        %v3695 = vunpack.c.l.b16 %v3566
        %v3696 = vunpack.c.l.b16 %v3567
        %v3697 = vunpack.c.l.b16 %v3568
        %v3698 = vunpack.c.l.b16 %v3569
        %v3699 = vunpack.c.l.b16 %v3570
        %v3700 = vunpack.c.l.b16 %v3571
        %v3701 = vunpack.c.l.b16 %v3572
        %v3702 = vunpack.c.l.b16 %v3573
        %v3703 = vunpack.c.l.b16 %v3574
        %v3704 = vunpack.c.l.b16 %v3575
        %v3705 = vunpack.c.l.b16 %v3576
        %v3706 = vunpack.c.l.b16 %v3577
        %v3707 = vunpack.c.l.b16 %v3578
        %v3708 = vunpack.c.l.b16 %v3579
        %v3709 = vunpack.c.l.b16 %v3580
        %v3710 = vunpack.c.l.b16 %v3581
        %v3711 = vunpack.c.l.b16 %v3582
        %v3712 = vunpack.c.l.b16 %v3583
        %v3713 = vunpack.c.l.b16 %v3584
        %v3714 = vunpack.c.l.b16 %v3585
        %v3715 = vunpack.c.l.b16 %v3586
        %v3716 = vunpack.c.l.b16 %v3587
        %v3717 = vunpack.c.l.b16 %v3588
        %v3718 = vunpack.c.l.b16 %v3589
        %v3719 = vunpack.c.l.b16 %v3590
        %v3720 = vunpack.c.l.b16 %v3591
        %v3721 = vunpack.c.l.b16 %v3592
        %v3722 = vunpack.c.l.b16 %v3593
        %v3723 = vunpack.c.l.b16 %v3594
        %v3724 = vunpack.c.l.b16 %v3595
        %v3725 = vunpack.c.l.b16 %v3596
        %v3726 = vunpack.c.l.b16 %v3597
        %v3727 = vunpack.c.l.b16 %v3598
        %v3728 = vunpack.c.l.b16 %v3599
        %v3729 = vunpack.c.l.b16 %v3600
        %v3730 = vunpack.c.l.b16 %v3601
        %v3731 = vunpack.c.l.b16 %v3602
        %v3732 = vunpack.c.l.b16 %v3603
        %v3733 = vunpack.c.l.b16 %v3604
        %v3734 = vunpack.c.l.b16 %v3605
        %v3735 = vunpack.c.l.b16 %v3606
        %v3736 = vunpack.c.l.b16 %v3607
        %v3737 = vunpack.c.l.b16 %v3608
        %v3738 = vunpack.c.l.b16 %v3609
        %v3739 = vunpack.c.l.b16 %v3610
        %v3740 = vunpack.c.l.b16 %v3611
        %v3741 = vunpack.c.l.b16 %v3612
        %v3742 = vunpack.c.l.b16 %v3613
        %v3743 = vunpack.c.l.b16 %v3614
        %v3744 = vunpack.c.l.b16 %v3615
        %v3745 = vunpack.c.l.b16 %v3616
        %v3746 = vunpack.c.l.b16 %v3617
        %v3747 = vunpack.c.l.b16 %v3618
        %v3748 = vunpack.c.l.b16 %v3619
        %v3749 = vunpack.c.l.b16 %v3620
        %v3750 = vunpack.c.l.b16 %v3621
        %v3751 = vunpack.c.l.b16 %v3622
        %v3752 = vunpack.c.l.b16 %v3623
        %v3753 = vunpack.c.l.b16 %v3624
        %v3754 = vunpack.c.l.b16 %v3625
        %v3755 = vunpack.c.l.b16 %v3626
        %v3756 = vpack.c.b16 %v3693, %v3692
        %v3757 = vpack.c.b16 %v3695, %v3694
        %v3758 = vpack.c.b16 %v3697, %v3696
        %v3759 = vpack.c.b16 %v3699, %v3698
        %v3760 = vpack.c.b16 %v3701, %v3700
        %v3761 = vpack.c.b16 %v3703, %v3702
        %v3762 = vpack.c.b16 %v3705, %v3704
        %v3763 = vpack.c.b16 %v3707, %v3706
        %v3764 = vpack.c.b16 %v3709, %v3708
        %v3765 = vpack.c.b16 %v3711, %v3710
        %v3766 = vpack.c.b16 %v3713, %v3712
        %v3767 = vpack.c.b16 %v3715, %v3714
        %v3768 = vpack.c.b16 %v3717, %v3716
        %v3769 = vpack.c.b16 %v3719, %v3718
        %v3770 = vpack.c.b16 %v3721, %v3720
        %v3771 = vpack.c.b16 %v3723, %v3722
        %v3772 = vpack.c.b16 %v3725, %v3724
        %v3773 = vpack.c.b16 %v3727, %v3726
        %v3774 = vpack.c.b16 %v3729, %v3728
        %v3775 = vpack.c.b16 %v3731, %v3730
        %v3776 = vpack.c.b16 %v3733, %v3732
        %v3777 = vpack.c.b16 %v3735, %v3734
        %v3778 = vpack.c.b16 %v3737, %v3736
        %v3779 = vpack.c.b16 %v3739, %v3738
        %v3780 = vpack.c.b16 %v3741, %v3740
        %v3781 = vpack.c.b16 %v3743, %v3742
        %v3782 = vpack.c.b16 %v3745, %v3744
        %v3783 = vpack.c.b16 %v3747, %v3746
        %v3784 = vpack.c.b16 %v3749, %v3748
        %v3785 = vpack.c.b16 %v3751, %v3750
        %v3786 = vpack.c.b16 %v3753, %v3752
        %v3787 = vpack.c.b16 %v3755, %v3754
        %3820 = vmatprep.subr.bf16.mxu0 0
        %3821 = vmatpush1.bf16.msra.mxu0 %v3756
        %3822 = vmatprep.subr.bf16.mxu0 0
        %3823 = vmatpush1.bf16.msra.mxu0 %v3757
        %3824 = vmatprep.subr.bf16.mxu0 0
        %3825 = vmatpush1.bf16.msra.mxu0 %v3758
        %3826 = vmatprep.subr.bf16.mxu0 0
        %3827 = vmatpush1.bf16.msra.mxu0 %v3759
        %3828 = vmatprep.subr.bf16.mxu0 0
        %3829 = vmatpush1.bf16.msra.mxu0 %v3760
        %3830 = vmatprep.subr.bf16.mxu0 0
        %3831 = vmatpush1.bf16.msra.mxu0 %v3761
        %3832 = vmatprep.subr.bf16.mxu0 0
        %3833 = vmatpush1.bf16.msra.mxu0 %v3762
        %3834 = vmatprep.subr.bf16.mxu0 0
        %3835 = vmatpush1.bf16.msra.mxu0 %v3763
        %3836 = vmatprep.subr.bf16.mxu0 0
        %3837 = vmatpush1.bf16.msra.mxu0 %v3764
        %3838 = vmatprep.subr.bf16.mxu0 0
        %3839 = vmatpush1.bf16.msra.mxu0 %v3765
        %3840 = vmatprep.subr.bf16.mxu0 0
        %3841 = vmatpush1.bf16.msra.mxu0 %v3766
        %3842 = vmatprep.subr.bf16.mxu0 0
        %3843 = vmatpush1.bf16.msra.mxu0 %v3767
        %3844 = vmatprep.subr.bf16.mxu0 0
        %3845 = vmatpush1.bf16.msra.mxu0 %v3768
        %3846 = vmatprep.subr.bf16.mxu0 0
        %3847 = vmatpush1.bf16.msra.mxu0 %v3769
        %3848 = vmatprep.subr.bf16.mxu0 0
        %3849 = vmatpush1.bf16.msra.mxu0 %v3770
        %3850 = vmatprep.subr.bf16.mxu0 0
        %3851 = vmatpush1.bf16.msra.mxu0 %v3771
        %3852 = vmatprep.mubr.bf16.mxu0 %v3560
        %3853 = vmatmul.mubr.bf16.gmra.mrb[0].mxu0 %v3559
        %v3854 = vpop.f32.mrb[0].mxu0
        %v3855 = vadd.f32 %v3627, %v3854
        %v3856 = vpop.f32.mrb[0].mxu0
        %v3857 = vpop.f32.mrb[0].mxu0
        %v3858 = vpop.f32.mrb[0].mxu0
        %3859 = vdwg.mxu0
        %3860 = vmatprep.subr.bf16.mxu0 0
        %3861 = vmatpush1.bf16.msra.mxu0 %v3772
        %3862 = vmatprep.subr.bf16.mxu0 0
        %3863 = vmatpush1.bf16.msra.mxu0 %v3773
        %3864 = vmatprep.subr.bf16.mxu0 0
        %3865 = vmatpush1.bf16.msra.mxu0 %v3774
        %3866 = vmatprep.subr.bf16.mxu0 0
        %3867 = vmatpush1.bf16.msra.mxu0 %v3775
        %3868 = vmatprep.subr.bf16.mxu0 0
        %3869 = vmatpush1.bf16.msra.mxu0 %v3776
        %3870 = vmatprep.subr.bf16.mxu0 0
        %3871 = vmatpush1.bf16.msra.mxu0 %v3777
        %3872 = vmatprep.subr.bf16.mxu0 0
        %3873 = vmatpush1.bf16.msra.mxu0 %v3778
        %3874 = vmatprep.subr.bf16.mxu0 0
        %3875 = vmatpush1.bf16.msra.mxu0 %v3779
        %3876 = vmatprep.subr.bf16.mxu0 0
        %3877 = vmatpush1.bf16.msra.mxu0 %v3780
        %3878 = vmatprep.subr.bf16.mxu0 0
        %3879 = vmatpush1.bf16.msra.mxu0 %v3781
        %3880 = vmatprep.subr.bf16.mxu0 0
        %3881 = vmatpush1.bf16.msra.mxu0 %v3782
        %3882 = vmatprep.subr.bf16.mxu0 0
        %3883 = vmatpush1.bf16.msra.mxu0 %v3783
        %3884 = vmatprep.subr.bf16.mxu0 0
        %3885 = vmatpush1.bf16.msra.mxu0 %v3784
        %3886 = vmatprep.subr.bf16.mxu0 0
        %3887 = vmatpush1.bf16.msra.mxu0 %v3785
        %3888 = vmatprep.subr.bf16.mxu0 0
        %3889 = vmatpush1.bf16.msra.mxu0 %v3786
        %3890 = vmatprep.subr.bf16.mxu0 0
        %3891 = vmatpush1.bf16.msra.mxu0 %v3787
        %3892 = vmatprep.mubr.bf16.mxu0 %v3562
        %3893 = vmatmul.mubr.bf16.gmra.mrb[0].mxu0 %v3561
        %v3894 = vpop.f32.mrb[0].mxu0
        %v3895 = vadd.f32 %v3855, %v3894
        %v3896 = vpop.f32.mrb[0].mxu0
        %v3897 = vpop.f32.mrb[0].mxu0
        %v3898 = vpop.f32.mrb[0].mxu0
        %3899 = vdwg.mxu0
        %v3901 = vrot.slane %v3895, 1
        %v3903 = vadd.f32 %v3220, %v3901
        %v3904 = vld [vmem:[#allocation17] sm:$0x1]
        %v3905 = vld [vmem:[#allocation19] sm:$0x1]
        %v3906 = vsel %vm3193, %v3903, 0.0
        %3907 = vadd.xlane.f32.xlu0 %v3906
        %v3908 = vpop.xlane.xlu0 %3907
        %v3909 = vmul.f32 %v3908, %v756
        %v3910 = vsub.f32 %v3903, %v3909
        %v3911 = vmul.f32 %v3910, %v3910
        %v3912 = vsel %vm3193, %v3911, 0.0
        %3913 = vadd.xlane.f32.xlu0 %v3912
        %v3914 = vpop.xlane.xlu0 %3913
        %v3915 = vmul.f32 %v3914, %v756
        %v3916 = vadd.f32 %v3915, 1e-12
        %v3917 = vrsqrt.pop %v3916
        %v3918 = vmul.f32 %v3910, %v3917
        %v3920 = vlaneseq
        %v3921 = vshrl.u32 %v3920, 7
        %v3922 = vsub.s32 0, %v3921
        %v3923 = vrot.slane %v3904, %v3922
        %v3925 = vmul.f32 %v3918, %v3923
        %v3927 = vlaneseq
        %v3928 = vshrl.u32 %v3927, 7
        %v3929 = vsub.s32 0, %v3928
        %v3930 = vrot.slane %v3905, %v3929
        %v3932 = vadd.f32 %v3925, %v3930
        %v3933 = vpack.c.bf16 %v3932, %v3932
        %v3934 = vld [vmem:[%s16] sm:$0xf]
        %v3935 = vld [vmem:[%s16 + $0x4] sm:$0xf]
        %v3936 = vld [vmem:[%s16 + $0x8] sm:$0xf]
        %v3937 = vld [vmem:[%s16 + $0xc] sm:$0xf]
        %v3938 = vld [vmem:[%s16 + $0x10] sm:$0xf]
        %v3939 = vld [vmem:[%s16 + $0x14] sm:$0xf]
        %v3940 = vld [vmem:[%s16 + $0x18] sm:$0xf]
        %v3941 = vld [vmem:[%s16 + $0x1c] sm:$0xf]
        %v3942 = vld [vmem:[%s16 + $0x20] sm:$0xf]
        %v3943 = vld [vmem:[%s16 + $0x24] sm:$0xf]
        %v3944 = vld [vmem:[%s16 + $0x28] sm:$0xf]
        %v3945 = vld [vmem:[%s16 + $0x2c] sm:$0xf]
        %v3946 = vld [vmem:[%s16 + $0x30] sm:$0xf]
        %v3947 = vld [vmem:[%s16 + $0x34] sm:$0xf]
        %v3948 = vld [vmem:[%s16 + $0x38] sm:$0xf]
        %v3949 = vld [vmem:[%s16 + $0x3c] sm:$0xf]
        %v3950 = vld [vmem:[#allocation20] sm:$0x1]
        %v3952 = vshrl.u32 %v3933, 16
        %v3954 = vrot.slane %v3952, 3
        %v3972 = vunpack.c.l.b16 %v3934
        %v3973 = vunpack.c.l.b16 %v3935
        %v3974 = vunpack.c.l.b16 %v3936
        %v3975 = vunpack.c.l.b16 %v3937
        %v3976 = vunpack.c.l.b16 %v3938
        %v3977 = vunpack.c.l.b16 %v3939
        %v3978 = vunpack.c.l.b16 %v3940
        %v3979 = vunpack.c.l.b16 %v3941
        %v3980 = vunpack.c.l.b16 %v3942
        %v3981 = vunpack.c.l.b16 %v3943
        %v3982 = vunpack.c.l.b16 %v3944
        %v3983 = vunpack.c.l.b16 %v3945
        %v3984 = vunpack.c.l.b16 %v3946
        %v3985 = vunpack.c.l.b16 %v3947
        %v3986 = vunpack.c.l.b16 %v3948
        %v3987 = vunpack.c.l.b16 %v3949
        %v3988 = vpack.c.b16 %v3973, %v3972
        %v3989 = vpack.c.b16 %v3975, %v3974
        %v3990 = vpack.c.b16 %v3977, %v3976
        %v3991 = vpack.c.b16 %v3979, %v3978
        %v3992 = vpack.c.b16 %v3981, %v3980
        %v3993 = vpack.c.b16 %v3983, %v3982
        %v3994 = vpack.c.b16 %v3985, %v3984
        %v3995 = vpack.c.b16 %v3987, %v3986
        %4004 = vmatprep.subr.bf16.mxu0 0
        %4005 = vmatpush1.bf16.msra.mxu0 %v3988
        %4006 = vmatprep.subr.bf16.mxu0 0
        %4007 = vmatpush1.bf16.msra.mxu0 %v3989
        %4008 = vmatprep.subr.bf16.mxu0 0
        %4009 = vmatpush1.bf16.msra.mxu0 %v3990
        %4010 = vmatprep.subr.bf16.mxu0 0
        %4011 = vmatpush1.bf16.msra.mxu0 %v3991
        %4012 = vmatprep.subr.bf16.mxu0 0
        %4013 = vmatpush1.bf16.msra.mxu0 %v3992
        %4014 = vmatprep.subr.bf16.mxu0 0
        %4015 = vmatpush1.bf16.msra.mxu0 %v3993
        %4016 = vmatprep.subr.bf16.mxu0 0
        %4017 = vmatpush1.bf16.msra.mxu0 %v3994
        %4018 = vmatprep.subr.bf16.mxu0 0
        %4019 = vmatpush1.bf16.msra.mxu0 %v3995
        %4020 = vmatprep.subr.bf16.mxu0 0
        %4021 = vmatpush1.bf16.msra.mxu0 0
        %4022 = vmatprep.subr.bf16.mxu0 0
        %4023 = vmatpush1.bf16.msra.mxu0 0
        %4024 = vmatprep.subr.bf16.mxu0 0
        %4025 = vmatpush1.bf16.msra.mxu0 0
        %4026 = vmatprep.subr.bf16.mxu0 0
        %4027 = vmatpush1.bf16.msra.mxu0 0
        %4028 = vmatprep.subr.bf16.mxu0 0
        %4029 = vmatpush1.bf16.msra.mxu0 0
        %4030 = vmatprep.subr.bf16.mxu0 0
        %4031 = vmatpush1.bf16.msra.mxu0 0
        %4032 = vmatprep.subr.bf16.mxu0 0
        %4033 = vmatpush1.bf16.msra.mxu0 0
        %4034 = vmatprep.subr.bf16.mxu0 0
        %4035 = vmatpush1.bf16.msra.mxu0 0
        %4036 = vmatprep.mubr.bf16.mxu0 0
        %4037 = vmatmul.mubr.bf16.gmra.mrb[0].mxu0 %v3954
        %v4038 = vpop.f32.mrb[0].mxu0
        %v4039 = vadd.f32 %v3950, %v4038
        %v4040 = vpop.f32.mrb[0].mxu0
        %v4041 = vpop.f32.mrb[0].mxu0
        %v4042 = vpop.f32.mrb[0].mxu0
        %4043 = vdwg.mxu0
        %4044 = vst [vmem:[%s733] sm:$0x1] %v4039
        %s4045 = sand.u32 %s435, 1
        %s4046 = scalar_lea.sflag [#allocation4], %s4045
        %s4047 = sand.u32 %s435, 1
        %s4048 = scalar_lea.vmem [#allocation22], %s4047
        // Predicated region
        $region141: #{custom_bert_forward.1} parent=91 // pred_check
          %p4049 = pneg %p445
        $region142: #{custom_bert_forward.1} parent=91 // pred_check_branch
          %4051 = sbr.rel (%p4049) target = $region144
        $region143: #{custom_bert_forward.1} parent=91 // pred_region
          %s4053 = ssub.s32 16, 16
          %4054 = vsyncadd %s4046, %s4053
          %s4055 = smul.addr %s39, 16
          %s4056 = scalar_lea.hbm %s18, %s4055
          %s4058 = sshll.u32 %s4048, 4
          %s4059 = int_to_ptr.vmem [resolvable:$true] %s4058
          %4061 = dma.vmem_to_hbm [thread:$0]  %s4059, 16, %s4056, %s4046
        $region144: #{custom_bert_forward.1} parent=91 // pred_fallthru
          _
      $region92: #{custom_bert_forward.1} parent=5 // pred_fallthru
        _
      %p4062 = scmp.le.s32.totalorder 2, %s34
      // Predicated region
      $region145: #{custom_bert_forward.1} parent=5 // pred_check
        %p4063 = pneg %p4062
      $region146: #{custom_bert_forward.1} parent=5 // pred_check_branch
        %4065 = sbr.rel (%p4063) target = $region148
      $region147: #{custom_bert_forward.1} parent=5 // pred_region
        %s4066 = ssub.s32 %s34, 2
        // Predicated region
        $region149: #{custom_bert_forward.1} parent=147 // pred_check
          %p4067 = pneg %p451
        $region150: #{custom_bert_forward.1} parent=147 // pred_check_branch
          %4069 = sbr.rel (%p4067) target = $region152
        $region151: #{custom_bert_forward.1} parent=147 // pred_region
          %s4070 = sand.u32 %s436, 1
          %s4071 = scalar_lea.sflag [#allocation4], %s4070
          %s4072 = sand.u32 %s436, 1
          %s4073 = scalar_lea.vmem [#allocation22], %s4072
          %4074 = dma.done %s4071, 16
        $region152: #{custom_bert_forward.1} parent=147 // pred_fallthru
          _
      $region148: #{custom_bert_forward.1} parent=5 // pred_fallthru
        _
    $region6: #{custom_bert_forward.1} parent=1 // loop_footer
      %s38 = sadd.s32 1, %s34
    $region7: #{custom_bert_forward.1} parent=1 // loop_footer_branch
      %33 = sbr.rel target = $region3
    $region8: #{custom_bert_forward.1} parent=1 // loop_exit
      _
    %4075 = vsyncpa [#allocation3], 1
    %s4076 = scalar_lea.sflag [#allocation3], 1
    %4077 = vsyncpa %s4076, 1
    %4078 = vsyncpa [#allocation6], 1
    %4079 = vsyncpa [#allocation9], 1
    %4080 = vsyncpa [#allocation12], 1
    %4081 = vsyncpa [#allocation15], 1
    %4082 = vsyncpa [#allocation18], 1
    %4083 = vsyncpa [#allocation21], 1
    %4084 = vsyncpa [#allocation4], 1
    %s4085 = scalar_lea.sflag [#allocation4], 1
    %4086 = vsyncpa %s4085, 1

</llo_original>
